<compile_context>
chip_gen: v7x
topology: tpu7x:2x2x1
jax: 0.10.0
libtpu: 0.0.40
codegen_flags: <defaults>
</compile_context>

<pallas_src>
import math
import functools

import jax
import jax.numpy as jnp
from jax.experimental import pallas as pl
from jax.experimental.pallas import tpu as pltpu


# --------------------------------------------------------------------------
# exact GELU (erf via A&S 7.1.26 polynomial; only exp / mul / add / where)
# --------------------------------------------------------------------------

def _erf_poly(x):
    p = 0.3275911
    a1, a2, a3, a4, a5 = (0.254829592, -0.284496736, 1.421413741,
                          -1.453152027, 1.061405429)
    ax = jnp.abs(x)
    t = 1.0 / (1.0 + p * ax)
    poly = t * (a1 + t * (a2 + t * (a3 + t * (a4 + t * a5))))
    y = 1.0 - poly * jnp.exp(-(ax * ax))
    return jnp.where(x < 0.0, -y, y)


def _gelu_exact(x):
    # matches torch.nn.GELU() / F.gelu (erf form) to ~1.5e-7
    return 0.5 * x * (1.0 + _erf_poly(x * (1.0 / math.sqrt(2.0))))


# --------------------------------------------------------------------------
# fully fused FaceFormer kernel: embedders + PE + decoder stack + final MLP
# --------------------------------------------------------------------------

def _faceformer_kernel(xs_ref, a_ref, sh_ref, pe_ref, mask_ref,
                       wx_ref, bx_ref, wa_ref, ba_ref, ws_ref, bs_ref,
                       w_sa_ref, b_sa_ref, wo_sa_ref, bo_sa_ref,
                       w_ca_ref, b_ca_ref, wo_ca_ref, bo_ca_ref,
                       w1_ref, b1_ref, w2_ref, b2_ref,
                       lng_ref, lnb_ref,
                       wf1_ref, bf1_ref, wf2_ref, bf2_ref,
                       out_ref,
                       x_scr, mem_scr,
                       *, num_heads):
    l = pl.program_id(1)
    n_layers = pl.num_programs(1)
    T, D = x_scr.shape
    Dh = D // num_heads
    scale = 1.0 / math.sqrt(Dh)

    # ---- layer step 0: embeddings + positional encoding into VMEM scratch ---
    @pl.when(l == 0)
    def _():
        xe = jnp.dot(xs_ref[0], wx_ref[...],
                     preferred_element_type=jnp.float32) + bx_ref[...]   # (T, D)
        se = jnp.dot(sh_ref[0], ws_ref[...],
                     preferred_element_type=jnp.float32) + bs_ref[...]   # (1, D)
        row = jax.lax.broadcasted_iota(jnp.int32, (T, 1), 0)
        is0 = (row == 0).astype(jnp.float32)
        # row 0 <- shape embedding, rows 1.. <- x embeddings (x rows are
        # pre-shifted on the host); then add the single PE row (exact
        # reproduction of the reference PositionalEncoding quirk: pe[:, T, :]).
        x_scr[...] = se * is0 + xe * (1.0 - is0) + pe_ref[...]
        mem_scr[...] = (jnp.dot(a_ref[0], wa_ref[...],
                                preferred_element_type=jnp.float32)
                        + ba_ref[...])                                   # (S, D)

    x = x_scr[...]                       # (T, D) residual stream
    mem = mem_scr[...]                   # (S, D) audio memory
    mask_add = mask_ref[...]             # (T, S) additive (0 / -1e9)

    # 0/1 lane masks, one per head — keeps all tensors full-width (lane-dense,
    # no sub-128 slicing / relayouts) while computing exact per-head attention.
    lane = jax.lax.broadcasted_iota(jnp.int32, (1, D), 1)
    head_masks = [((lane >= h * Dh) & (lane < (h + 1) * Dh)).astype(jnp.float32)
                  for h in range(num_heads)]

    def layer_norm(h, j):
        mu = jnp.mean(h, axis=-1, keepdims=True)
        var = jnp.mean(jnp.square(h - mu), axis=-1, keepdims=True)
        return ((h - mu) * jax.lax.rsqrt(var + 1e-5)
                * lng_ref[0, j] + lnb_ref[0, j])

    def attend(xq, xkv, w_ref, b_ref, wo_ref, bo_ref, add_mask):
        # PyTorch nn.MultiheadAttention (dropout = identity in eval mode).
        q = jnp.dot(xq, w_ref[0, 0], preferred_element_type=jnp.float32) + b_ref[0, 0]
        k = jnp.dot(xkv, w_ref[0, 1], preferred_element_type=jnp.float32) + b_ref[0, 1]
        v = jnp.dot(xkv, w_ref[0, 2], preferred_element_type=jnp.float32) + b_ref[0, 2]
        ctx = None
        for h in range(num_heads):
            mh = head_masks[h]
            # zeroing q's off-head lanes makes the full-width contraction equal
            # the per-head dot product exactly.
            s = jax.lax.dot_general(q * mh, k, (((1,), (1,)), ((), ())),
                                    preferred_element_type=jnp.float32) * scale
            if add_mask is not None:
                s = s + add_mask
            s = s - jnp.max(s, axis=-1, keepdims=True)
            p = jnp.exp(s)
            p = p / jnp.sum(p, axis=-1, keepdims=True)
            ch = jnp.dot(p, v * mh, preferred_element_type=jnp.float32)
            ctx = ch if ctx is None else ctx + ch      # == concat of heads
        return jnp.dot(ctx, wo_ref[0],
                       preferred_element_type=jnp.float32) + bo_ref[0]

    # ---- TransformerDecoderLayer (post-norm, activation='gelu', eval) -------
    # reference is called WITHOUT tgt_mask -> unmasked self-attention
    x = layer_norm(x + attend(x, x, w_sa_ref, b_sa_ref,
                              wo_sa_ref, bo_sa_ref, None), 0)
    x = layer_norm(x + attend(x, mem, w_ca_ref, b_ca_ref,
                              wo_ca_ref, bo_ca_ref, mask_add), 1)
    h1 = _gelu_exact(jnp.dot(x, w1_ref[0],
                             preferred_element_type=jnp.float32) + b1_ref[0])
    h2 = jnp.dot(h1, w2_ref[0], preferred_element_type=jnp.float32) + b2_ref[0]
    x = layer_norm(x + h2, 2)

    x_scr[...] = x

    # ---- final_layer (Linear -> GELU -> Linear), emitted on the last layer --
    @pl.when(l == n_layers - 1)
    def _():
        hf = _gelu_exact(jnp.dot(x, wf1_ref[...],
                                 preferred_element_type=jnp.float32)
                         + bf1_ref[...])
        out_ref[0] = (jnp.dot(hf, wf2_ref[...],
                              preferred_element_type=jnp.float32)
                      + bf2_ref[...]).astype(out_ref.dtype)


def fused_forward(x_rows, a_full, shape3, pe_row, mask_add, params, num_heads):
    """x_rows: (B,T,x_dim) raw rows (row 0 is replaced in-kernel by shape emb)."""
    x_rows = x_rows.astype(jnp.float32)
    a_full = a_full.astype(jnp.float32)
    B, T, x_dim = x_rows.shape
    S, a_dim = a_full.shape[1], a_full.shape[2]
    D = params["x_emb_w"].shape[1]
    lp = params["layers"]
    L = lp["w_sa"].shape[0]
    out_dim = params["final2_w"].shape[1]

    def per_batch(shape):
        nz = (0,) * (len(shape) - 1)
        return pl.BlockSpec(shape, lambda b, l, _nz=nz: (b,) + _nz)

    def per_layer(arr):
        # one layer's slice per grid step along the layer axis (auto-pipelined)
        nz = (0,) * (arr.ndim - 1)
        return pl.BlockSpec((1,) + arr.shape[1:],
                            lambda b, l, _nz=nz: (l,) + _nz)

    def fixed(arr):
        nz = (0,) * arr.ndim
        return pl.BlockSpec(arr.shape, lambda b, l, _nz=nz: _nz)

    embed_args = [params["x_emb_w"], params["x_emb_b"],
                  params["a_emb_w"], params["a_emb_b"],
                  params["s_emb_w"], params["s_emb_b"]]
    layer_keys = ["w_sa", "b_sa", "wo_sa", "bo_sa",
                  "w_ca", "b_ca", "wo_ca", "bo_ca",
                  "w1", "b1", "w2", "b2", "ln_g", "ln_b"]
    layer_args = [lp[k] for k in layer_keys]
    final_args = [params["final1_w"], params["final1_b"],
                  params["final2_w"], params["final2_b"]]

    in_specs = ([per_batch((1, T, x_dim)),
                 per_batch((1, S, a_dim)),
                 per_batch((1, 1, 63)),
                 fixed(pe_row), fixed(mask_add)]
                + [fixed(a) for a in embed_args]
                + [per_layer(a) for a in layer_args]
                + [fixed(a) for a in final_args])

    kern = functools.partial(_faceformer_kernel, num_heads=num_heads)
    # TODO(synk): at hidden_size=512 / 6 layers, additionally tile the FFN K
    # dim if VMEM gets tight (per-layer streamed weights ~15 MB double-buffered
    # at that scale); at the sizes used here everything fits comfortably.
    return pl.pallas_call(
        kern,
        grid=(B, L),
        in_specs=in_specs,
        out_specs=pl.BlockSpec((1, T, out_dim), lambda b, l: (b, 0, 0)),
        out_shape=jax.ShapeDtypeStruct((B, T, out_dim), jnp.float32),
        scratch_shapes=[pltpu.VMEM((T, D), jnp.float32),
                        pltpu.VMEM((S, D), jnp.float32)],
        compiler_params=pltpu.CompilerParams(
            dimension_semantics=("parallel", "arbitrary")),
    )(x_rows, a_full, shape3, pe_row, mask_add,
      *embed_args, *layer_args, *final_args)


# --------------------------------------------------------------------------
# host-side helpers (positional encoding table, memory mask)
# --------------------------------------------------------------------------

def make_pe(d_model, max_len=100):
    position = jnp.arange(max_len, dtype=jnp.float32)[:, None]
    div_term = jnp.exp(jnp.arange(0, d_model, 2, dtype=jnp.float32)
                       * (-math.log(10000.0) / d_model))
    pe = jnp.zeros((max_len, d_model), jnp.float32)
    pe = pe.at[:, 0::2].set(jnp.sin(position * div_term))
    pe = pe.at[:, 1::2].set(jnp.cos(position * div_term))
    return pe
    # NOTE: the reference PositionalEncoding adds pe[:, x.shape[1], :] — a
    # SINGLE row indexed by the current sequence length, broadcast to every
    # timestep.  We reproduce that quirk exactly (see pe_row below).


def memory_mask_additive(T_tgt, S):
    # enc_dec_mask(T_tgt - 1, S, frame_width=1, expansion=0): row i allows only
    # column i; then F.pad one fully-visible row (False) at the top.
    # True (masked) -> additive -1e9.
    i = jnp.arange(max(T_tgt - 1, 0))[:, None]
    j = jnp.arange(S)[None, :]
    allowed = (j >= i) & (j < i + 1)
    masked = ~allowed
    masked = jnp.concatenate([jnp.zeros((1, S), dtype=bool), masked], axis=0)
    return jnp.where(masked, jnp.float32(-1e9), jnp.float32(0.0))


# --------------------------------------------------------------------------
# parameters
# --------------------------------------------------------------------------

def _normal(key, shape, scale=0.02):
    return scale * jax.random.normal(key, shape, jnp.float32)


def init_faceformer_params(key, x_dim, a_dim, hidden_size, num_layers):
    D = hidden_size
    L = num_layers
    keys = iter(jax.random.split(key, 32))
    nk = lambda: next(keys)
    return {
        "x_emb_w": _normal(nk(), (x_dim, D)), "x_emb_b": _normal(nk(), (1, D)),
        "a_emb_w": _normal(nk(), (a_dim, D)), "a_emb_b": _normal(nk(), (1, D)),
        "s_emb_w": _normal(nk(), (63, D)),    "s_emb_b": _normal(nk(), (1, D)),
        "final1_w": _normal(nk(), (D, D // 2)),
        "final1_b": _normal(nk(), (1, D // 2)),
        "final2_w": _normal(nk(), (D // 2, x_dim)),
        "final2_b": _normal(nk(), (1, x_dim)),
        "pe": make_pe(D, max_len=100),
        "layers": {
            # self-attention: stacked [Wq, Wk, Wv] along axis 1
            "w_sa": _normal(nk(), (L, 3, D, D)),
            "b_sa": _normal(nk(), (L, 3, 1, D)),
            "wo_sa": _normal(nk(), (L, D, D)),
            "bo_sa": _normal(nk(), (L, 1, D)),
            # cross-attention
            "w_ca": _normal(nk(), (L, 3, D, D)),
            "b_ca": _normal(nk(), (L, 3, 1, D)),
            "wo_ca": _normal(nk(), (L, D, D)),
            "bo_ca": _normal(nk(), (L, 1, D)),
            # feed-forward
            "w1": _normal(nk(), (L, D, 4 * D)), "b1": _normal(nk(), (L, 1, 4 * D)),
            "w2": _normal(nk(), (L, 4 * D, D)), "b2": _normal(nk(), (L, 1, D)),
            # norm1 / norm2 / norm3 stacked along axis 1
            "ln_g": jnp.ones((L, 3, 1, D), jnp.float32),
            "ln_b": jnp.zeros((L, 3, 1, D), jnp.float32),
        },
    }


# --------------------------------------------------------------------------
# forward
# --------------------------------------------------------------------------

def faceformer_forward(params, x_train, x_prev, a_train, a_prev, shape_feat,
                       num_heads, teacher_forcing=False):
    x_full = jnp.concatenate([x_prev, x_train], axis=1)
    a_full = jnp.concatenate([a_prev, a_train], axis=1)
    B, T, x_dim = x_full.shape
    S = a_full.shape[1]
    D = params["x_emb_w"].shape[1]
    shape3 = shape_feat.reshape(B, 1, 63).astype(jnp.float32)

    if teacher_forcing:
        T_tgt = T  # 1 shape token + (T-1) x tokens
        # shift x right by one; row 0 is replaced in-kernel by the shape
        # embedding (target = [shape_emb, x_emb(x_full[:, :-1])]).
        x_rows = jnp.concatenate(
            [jnp.zeros_like(x_full[:, :1, :]), x_full[:, :-1, :]], axis=1)
        pe_row = params["pe"][T_tgt].reshape(1, D)
        mask_add = memory_mask_additive(T_tgt, S)
        x_out = fused_forward(x_rows, a_full, shape3, pe_row, mask_add,
                              params, num_heads)
    else:
        # autoregressive path: the decoder input at step i is
        # [shape_emb, x_emb(out_0), ..., x_emb(out_{i-1})], which is exactly the
        # same fused kernel applied to the raw previous outputs.
        # TODO(synk): pad to a fixed max length + KV cache
        # (input_output_aliases) for one compiled shape and O(T) total work.
        x_hist = jnp.zeros((B, 0, x_dim), jnp.float32)
        x_out = None
        for i in range(T):
            Lc = i + 1
            x_rows = jnp.concatenate(
                [jnp.zeros((B, 1, x_dim), jnp.float32), x_hist], axis=1)
            pe_row = params["pe"][Lc].reshape(1, D)
            mask_add = memory_mask_additive(Lc, S)
            x_out = fused_forward(x_rows, a_full, shape3, pe_row, mask_add,
                                  params, num_heads)
            x_hist = jnp.concatenate([x_hist, x_out[:, -1:, :]], axis=1)
    return x_out


# --------------------------------------------------------------------------
# main
# --------------------------------------------------------------------------

if __name__ == "__main__":
    B = 2
    x_dim, a_dim = 12, 20
    hidden_size, num_layers, num_heads = 64, 2, 4
    T_prev, T_train = 2, 4  # full sequence length T = S = 6

    key = jax.random.PRNGKey(0)
    kx, kxp, ka, kap, ks, kp = jax.random.split(key, 6)
    x_train = jax.random.normal(kx, (B, T_train, x_dim), jnp.float32)
    x_prev = jax.random.normal(kxp, (B, T_prev, x_dim), jnp.float32)
    a_train = jax.random.normal(ka, (B, T_train, a_dim), jnp.float32)
    a_prev = jax.random.normal(kap, (B, T_prev, a_dim), jnp.float32)
    shape_feat = jax.random.normal(ks, (B, 63), jnp.float32)

    params = init_faceformer_params(kp, x_dim, a_dim, hidden_size, num_layers)

    # teacher-forcing path: the whole forward is ONE pallas_call.  The
    # autoregressive (default) path reuses the same fused kernel per step.
    fwd = jax.jit(functools.partial(faceformer_forward,
                                    num_heads=num_heads, teacher_forcing=True))
    out = fwd(params, x_train, x_prev, a_train, a_prev, shape_feat)
    jax.block_until_ready(out)
    assert out.shape == (B, T_prev + T_train, x_dim)
    assert bool(jnp.all(jnp.isfinite(out)))
    print("KERNEL_OK")
</pallas_src>

<mosaic_0001>
module attributes {stable_mosaic.version = 11 : i64} {
  func.func @_faceformer_kernel(%arg0: i32, %arg1: i32, %arg2: memref<1x6x12xf32, #tpu.memory_space<vmem>>, %arg3: memref<1x6x20xf32, #tpu.memory_space<vmem>>, %arg4: memref<1x1x63xf32, #tpu.memory_space<vmem>>, %arg5: memref<1x64xf32, #tpu.memory_space<vmem>>, %arg6: memref<6x6xf32, #tpu.memory_space<vmem>>, %arg7: memref<12x64xf32, #tpu.memory_space<vmem>>, %arg8: memref<1x64xf32, #tpu.memory_space<vmem>>, %arg9: memref<20x64xf32, #tpu.memory_space<vmem>>, %arg10: memref<1x64xf32, #tpu.memory_space<vmem>>, %arg11: memref<63x64xf32, #tpu.memory_space<vmem>>, %arg12: memref<1x64xf32, #tpu.memory_space<vmem>>, %arg13: memref<1x3x64x64xf32, #tpu.memory_space<vmem>>, %arg14: memref<1x3x1x64xf32, #tpu.memory_space<vmem>>, %arg15: memref<1x64x64xf32, #tpu.memory_space<vmem>>, %arg16: memref<1x1x64xf32, #tpu.memory_space<vmem>>, %arg17: memref<1x3x64x64xf32, #tpu.memory_space<vmem>>, %arg18: memref<1x3x1x64xf32, #tpu.memory_space<vmem>>, %arg19: memref<1x64x64xf32, #tpu.memory_space<vmem>>, %arg20: memref<1x1x64xf32, #tpu.memory_space<vmem>>, %arg21: memref<1x64x256xf32, #tpu.memory_space<vmem>>, %arg22: memref<1x1x256xf32, #tpu.memory_space<vmem>>, %arg23: memref<1x256x64xf32, #tpu.memory_space<vmem>>, %arg24: memref<1x1x64xf32, #tpu.memory_space<vmem>>, %arg25: memref<1x3x1x64xf32, #tpu.memory_space<vmem>>, %arg26: memref<1x3x1x64xf32, #tpu.memory_space<vmem>>, %arg27: memref<64x32xf32, #tpu.memory_space<vmem>>, %arg28: memref<1x32xf32, #tpu.memory_space<vmem>>, %arg29: memref<32x12xf32, #tpu.memory_space<vmem>>, %arg30: memref<1x12xf32, #tpu.memory_space<vmem>>, %arg31: memref<1x6x12xf32, #tpu.memory_space<vmem>>, %arg32: memref<6x64xf32, #tpu.memory_space<vmem>>, %arg33: memref<6x64xf32, #tpu.memory_space<vmem>>) attributes {dimension_semantics = [#tpu.dimension_semantics<parallel>, #tpu.dimension_semantics<arbitrary>], iteration_bounds = array<i64: 2, 2>, scalar_prefetch = 0 : i64, scratch_operands = 2 : i64, tpu.core_type = #tpu.core_type<tc>, window_params = [{transform_indices = @transform_0, window_bounds = array<i64: 1, 6, 12>}, {transform_indices = @transform_1, window_bounds = array<i64: 1, 6, 20>}, {transform_indices = @transform_2, window_bounds = array<i64: 1, 1, 63>}, {pipeline_mode = #tpu.pipeline_mode<synchronous>, transform_indices = @transform_3, window_bounds = array<i64: 1, 64>}, {pipeline_mode = #tpu.pipeline_mode<synchronous>, transform_indices = @transform_4, window_bounds = array<i64: 6, 6>}, {pipeline_mode = #tpu.pipeline_mode<synchronous>, transform_indices = @transform_5, window_bounds = array<i64: 12, 64>}, {pipeline_mode = #tpu.pipeline_mode<synchronous>, transform_indices = @transform_6, window_bounds = array<i64: 1, 64>}, {pipeline_mode = #tpu.pipeline_mode<synchronous>, transform_indices = @transform_7, window_bounds = array<i64: 20, 64>}, {pipeline_mode = #tpu.pipeline_mode<synchronous>, transform_indices = @transform_8, window_bounds = array<i64: 1, 64>}, {pipeline_mode = #tpu.pipeline_mode<synchronous>, transform_indices = @transform_9, window_bounds = array<i64: 63, 64>}, {pipeline_mode = #tpu.pipeline_mode<synchronous>, transform_indices = @transform_10, window_bounds = array<i64: 1, 64>}, {transform_indices = @transform_11, window_bounds = array<i64: 1, 3, 64, 64>}, {transform_indices = @transform_12, window_bounds = array<i64: 1, 3, 1, 64>}, {transform_indices = @transform_13, window_bounds = array<i64: 1, 64, 64>}, {transform_indices = @transform_14, window_bounds = array<i64: 1, 1, 64>}, {transform_indices = @transform_15, window_bounds = array<i64: 1, 3, 64, 64>}, {transform_indices = @transform_16, window_bounds = array<i64: 1, 3, 1, 64>}, {transform_indices = @transform_17, window_bounds = array<i64: 1, 64, 64>}, {transform_indices = @transform_18, window_bounds = array<i64: 1, 1, 64>}, {transform_indices = @transform_19, window_bounds = array<i64: 1, 64, 256>}, {transform_indices = @transform_20, window_bounds = array<i64: 1, 1, 256>}, {transform_indices = @transform_21, window_bounds = array<i64: 1, 256, 64>}, {transform_indices = @transform_22, window_bounds = array<i64: 1, 1, 64>}, {transform_indices = @transform_23, window_bounds = array<i64: 1, 3, 1, 64>}, {transform_indices = @transform_24, window_bounds = array<i64: 1, 3, 1, 64>}, {pipeline_mode = #tpu.pipeline_mode<synchronous>, transform_indices = @transform_25, window_bounds = array<i64: 64, 32>}, {pipeline_mode = #tpu.pipeline_mode<synchronous>, transform_indices = @transform_26, window_bounds = array<i64: 1, 32>}, {pipeline_mode = #tpu.pipeline_mode<synchronous>, transform_indices = @transform_27, window_bounds = array<i64: 32, 12>}, {pipeline_mode = #tpu.pipeline_mode<synchronous>, transform_indices = @transform_28, window_bounds = array<i64: 1, 12>}, {transform_indices = @transform_29, window_bounds = array<i64: 1, 6, 12>}]} {
    %c0_i32 = arith.constant 0 : i32
    %0 = arith.cmpi eq, %arg1, %c0_i32 : i32
    %1 = arith.extui %0 : i1 to i32
    %c0_i32_0 = arith.constant 0 : i32
    %2 = arith.cmpi ne, %1, %c0_i32_0 : i32
    scf.if %2 {
      %c0_186 = arith.constant 0 : index
      %c0_187 = arith.constant 0 : index
      %c0_188 = arith.constant 0 : index
      %376 = vector.load %arg2[%c0_186, %c0_187, %c0_188] : memref<1x6x12xf32, #tpu.memory_space<vmem>>, vector<1x6x12xf32>
      %377 = vector.shape_cast %376 : vector<1x6x12xf32> to vector<6x12xf32>
      %c0_189 = arith.constant 0 : index
      %c0_190 = arith.constant 0 : index
      %378 = vector.load %arg7[%c0_189, %c0_190] : memref<12x64xf32, #tpu.memory_space<vmem>>, vector<12x64xf32>
      %cst_191 = arith.constant dense<0.000000e+00> : vector<6x64xf32>
      %379 = tpu.matmul %377, %378, %cst_191 {dimension_numbers = #tpu.dot_dimension_numbers<[1], [0], [0], [1], [0, 0, 1, 1], [], []>} : vector<6x12xf32>, vector<12x64xf32>, vector<6x64xf32> -> vector<6x64xf32>
      %c0_192 = arith.constant 0 : index
      %c0_193 = arith.constant 0 : index
      %380 = vector.load %arg8[%c0_192, %c0_193] : memref<1x64xf32, #tpu.memory_space<vmem>>, vector<1x64xf32>
      %381 = vector.broadcast %380 : vector<1x64xf32> to vector<6x64xf32>
      %382 = arith.addf %379, %381 : vector<6x64xf32>
      %c0_194 = arith.constant 0 : index
      %c0_195 = arith.constant 0 : index
      %c0_196 = arith.constant 0 : index
      %383 = vector.load %arg4[%c0_194, %c0_195, %c0_196] : memref<1x1x63xf32, #tpu.memory_space<vmem>>, vector<1x1x63xf32>
      %384 = vector.shape_cast %383 : vector<1x1x63xf32> to vector<1x63xf32>
      %c0_197 = arith.constant 0 : index
      %c0_198 = arith.constant 0 : index
      %385 = vector.load %arg11[%c0_197, %c0_198] : memref<63x64xf32, #tpu.memory_space<vmem>>, vector<63x64xf32>
      %cst_199 = arith.constant dense<0.000000e+00> : vector<1x64xf32>
      %386 = tpu.matmul %384, %385, %cst_199 {dimension_numbers = #tpu.dot_dimension_numbers<[1], [0], [0], [1], [0, 0, 1, 1], [], []>} : vector<1x63xf32>, vector<63x64xf32>, vector<1x64xf32> -> vector<1x64xf32>
      %c0_200 = arith.constant 0 : index
      %c0_201 = arith.constant 0 : index
      %387 = vector.load %arg12[%c0_200, %c0_201] : memref<1x64xf32, #tpu.memory_space<vmem>>, vector<1x64xf32>
      %388 = arith.addf %386, %387 : vector<1x64xf32>
      %389 = tpu.iota {dimensions = array<i32: 0>} : vector<6x1xi32>
      %c0_i32_202 = arith.constant 0 : i32
      %390 = vector.broadcast %c0_i32_202 : i32 to vector<6x1xi32>
      %391 = arith.cmpi eq, %389, %390 : vector<6x1xi32>
      %392 = arith.extui %391 : vector<6x1xi1> to vector<6x1xi32>
      %393 = arith.sitofp %392 : vector<6x1xi32> to vector<6x1xf32>
      %394 = vector.broadcast %388 : vector<1x64xf32> to vector<6x64xf32>
      %395 = vector.broadcast %393 : vector<6x1xf32> to vector<6x64xf32>
      %396 = arith.mulf %394, %395 : vector<6x64xf32>
      %cst_203 = arith.constant 1.000000e+00 : f32
      %397 = vector.broadcast %cst_203 : f32 to vector<6x1xf32>
      %398 = arith.subf %397, %393 : vector<6x1xf32>
      %399 = vector.broadcast %398 : vector<6x1xf32> to vector<6x64xf32>
      %400 = arith.mulf %382, %399 : vector<6x64xf32>
      %401 = arith.addf %396, %400 : vector<6x64xf32>
      %c0_204 = arith.constant 0 : index
      %c0_205 = arith.constant 0 : index
      %402 = vector.load %arg5[%c0_204, %c0_205] : memref<1x64xf32, #tpu.memory_space<vmem>>, vector<1x64xf32>
      %403 = vector.broadcast %402 : vector<1x64xf32> to vector<6x64xf32>
      %404 = arith.addf %401, %403 : vector<6x64xf32>
      %c0_206 = arith.constant 0 : index
      %c0_207 = arith.constant 0 : index
      %405 = vector.load %arg32[%c0_206, %c0_207] : memref<6x64xf32, #tpu.memory_space<vmem>>, vector<6x64xf32>
      tpu.vector_store %arg32[%c0_206, %c0_207], %404 {strides = array<i32>} : memref<6x64xf32, #tpu.memory_space<vmem>>, vector<6x64xf32>,
      %c0_208 = arith.constant 0 : index
      %c0_209 = arith.constant 0 : index
      %c0_210 = arith.constant 0 : index
      %406 = vector.load %arg3[%c0_208, %c0_209, %c0_210] : memref<1x6x20xf32, #tpu.memory_space<vmem>>, vector<1x6x20xf32>
      %407 = vector.shape_cast %406 : vector<1x6x20xf32> to vector<6x20xf32>
      %c0_211 = arith.constant 0 : index
      %c0_212 = arith.constant 0 : index
      %408 = vector.load %arg9[%c0_211, %c0_212] : memref<20x64xf32, #tpu.memory_space<vmem>>, vector<20x64xf32>
      %cst_213 = arith.constant dense<0.000000e+00> : vector<6x64xf32>
      %409 = tpu.matmul %407, %408, %cst_213 {dimension_numbers = #tpu.dot_dimension_numbers<[1], [0], [0], [1], [0, 0, 1, 1], [], []>} : vector<6x20xf32>, vector<20x64xf32>, vector<6x64xf32> -> vector<6x64xf32>
      %c0_214 = arith.constant 0 : index
      %c0_215 = arith.constant 0 : index
      %410 = vector.load %arg10[%c0_214, %c0_215] : memref<1x64xf32, #tpu.memory_space<vmem>>, vector<1x64xf32>
      %411 = vector.broadcast %410 : vector<1x64xf32> to vector<6x64xf32>
      %412 = arith.addf %409, %411 : vector<6x64xf32>
      %c0_216 = arith.constant 0 : index
      %c0_217 = arith.constant 0 : index
      %413 = vector.load %arg33[%c0_216, %c0_217] : memref<6x64xf32, #tpu.memory_space<vmem>>, vector<6x64xf32>
      tpu.vector_store %arg33[%c0_216, %c0_217], %412 {strides = array<i32>} : memref<6x64xf32, #tpu.memory_space<vmem>>, vector<6x64xf32>,
    } else {
    }
    %c0 = arith.constant 0 : index
    %c0_1 = arith.constant 0 : index
    %3 = vector.load %arg32[%c0, %c0_1] : memref<6x64xf32, #tpu.memory_space<vmem>>, vector<6x64xf32>
    %c0_2 = arith.constant 0 : index
    %c0_3 = arith.constant 0 : index
    %4 = vector.load %arg33[%c0_2, %c0_3] : memref<6x64xf32, #tpu.memory_space<vmem>>, vector<6x64xf32>
    %c0_4 = arith.constant 0 : index
    %c0_5 = arith.constant 0 : index
    %5 = vector.load %arg6[%c0_4, %c0_5] : memref<6x6xf32, #tpu.memory_space<vmem>>, vector<6x6xf32>
    %6 = tpu.iota {dimensions = array<i32: 1>} : vector<1x64xi32>
    %c0_i32_6 = arith.constant 0 : i32
    %7 = vector.broadcast %c0_i32_6 : i32 to vector<1x64xi32>
    %8 = arith.cmpi sge, %6, %7 : vector<1x64xi32>
    %c16_i32 = arith.constant 16 : i32
    %9 = vector.broadcast %c16_i32 : i32 to vector<1x64xi32>
    %10 = arith.cmpi slt, %6, %9 : vector<1x64xi32>
    %11 = arith.andi %8, %10 : vector<1x64xi1>
    %12 = arith.extui %11 : vector<1x64xi1> to vector<1x64xi32>
    %13 = arith.sitofp %12 : vector<1x64xi32> to vector<1x64xf32>
    %c16_i32_7 = arith.constant 16 : i32
    %14 = vector.broadcast %c16_i32_7 : i32 to vector<1x64xi32>
    %15 = arith.cmpi sge, %6, %14 : vector<1x64xi32>
    %c32_i32 = arith.constant 32 : i32
    %16 = vector.broadcast %c32_i32 : i32 to vector<1x64xi32>
    %17 = arith.cmpi slt, %6, %16 : vector<1x64xi32>
    %18 = arith.andi %15, %17 : vector<1x64xi1>
    %19 = arith.extui %18 : vector<1x64xi1> to vector<1x64xi32>
    %20 = arith.sitofp %19 : vector<1x64xi32> to vector<1x64xf32>
    %c32_i32_8 = arith.constant 32 : i32
    %21 = vector.broadcast %c32_i32_8 : i32 to vector<1x64xi32>
    %22 = arith.cmpi sge, %6, %21 : vector<1x64xi32>
    %c48_i32 = arith.constant 48 : i32
    %23 = vector.broadcast %c48_i32 : i32 to vector<1x64xi32>
    %24 = arith.cmpi slt, %6, %23 : vector<1x64xi32>
    %25 = arith.andi %22, %24 : vector<1x64xi1>
    %26 = arith.extui %25 : vector<1x64xi1> to vector<1x64xi32>
    %27 = arith.sitofp %26 : vector<1x64xi32> to vector<1x64xf32>
    %c48_i32_9 = arith.constant 48 : i32
    %28 = vector.broadcast %c48_i32_9 : i32 to vector<1x64xi32>
    %29 = arith.cmpi sge, %6, %28 : vector<1x64xi32>
    %c64_i32 = arith.constant 64 : i32
    %30 = vector.broadcast %c64_i32 : i32 to vector<1x64xi32>
    %31 = arith.cmpi slt, %6, %30 : vector<1x64xi32>
    %32 = arith.andi %29, %31 : vector<1x64xi1>
    %33 = arith.extui %32 : vector<1x64xi1> to vector<1x64xi32>
    %34 = arith.sitofp %33 : vector<1x64xi32> to vector<1x64xf32>
    %c0_10 = arith.constant 0 : index
    %c0_11 = arith.constant 0 : index
    %c0_12 = arith.constant 0 : index
    %c0_13 = arith.constant 0 : index
    %35 = vector.load %arg13[%c0_10, %c0_11, %c0_12, %c0_13] : memref<1x3x64x64xf32, #tpu.memory_space<vmem>>, vector<1x1x64x64xf32>
    %36 = vector.shape_cast %35 : vector<1x1x64x64xf32> to vector<64x64xf32>
    %cst = arith.constant dense<0.000000e+00> : vector<6x64xf32>
    %37 = tpu.matmul %3, %36, %cst {dimension_numbers = #tpu.dot_dimension_numbers<[1], [0], [0], [1], [0, 0, 1, 1], [], []>} : vector<6x64xf32>, vector<64x64xf32>, vector<6x64xf32> -> vector<6x64xf32>
    %c0_14 = arith.constant 0 : index
    %c0_15 = arith.constant 0 : index
    %c0_16 = arith.constant 0 : index
    %c0_17 = arith.constant 0 : index
    %38 = vector.load %arg14[%c0_14, %c0_15, %c0_16, %c0_17] : memref<1x3x1x64xf32, #tpu.memory_space<vmem>>, vector<1x1x1x64xf32>
    %39 = vector.shape_cast %38 : vector<1x1x1x64xf32> to vector<1x64xf32>
    %40 = vector.broadcast %39 : vector<1x64xf32> to vector<6x64xf32>
    %41 = arith.addf %37, %40 : vector<6x64xf32>
    %c0_18 = arith.constant 0 : index
    %c1 = arith.constant 1 : index
    %c0_19 = arith.constant 0 : index
    %c0_20 = arith.constant 0 : index
    %42 = vector.load %arg13[%c0_18, %c1, %c0_19, %c0_20] : memref<1x3x64x64xf32, #tpu.memory_space<vmem>>, vector<1x1x64x64xf32>
    %43 = vector.shape_cast %42 : vector<1x1x64x64xf32> to vector<64x64xf32>
    %cst_21 = arith.constant dense<0.000000e+00> : vector<6x64xf32>
    %44 = tpu.matmul %3, %43, %cst_21 {dimension_numbers = #tpu.dot_dimension_numbers<[1], [0], [0], [1], [0, 0, 1, 1], [], []>} : vector<6x64xf32>, vector<64x64xf32>, vector<6x64xf32> -> vector<6x64xf32>
    %c0_22 = arith.constant 0 : index
    %c1_23 = arith.constant 1 : index
    %c0_24 = arith.constant 0 : index
    %c0_25 = arith.constant 0 : index
    %45 = vector.load %arg14[%c0_22, %c1_23, %c0_24, %c0_25] : memref<1x3x1x64xf32, #tpu.memory_space<vmem>>, vector<1x1x1x64xf32>
    %46 = vector.shape_cast %45 : vector<1x1x1x64xf32> to vector<1x64xf32>
    %47 = vector.broadcast %46 : vector<1x64xf32> to vector<6x64xf32>
    %48 = arith.addf %44, %47 : vector<6x64xf32>
    %c0_26 = arith.constant 0 : index
    %c2 = arith.constant 2 : index
    %c0_27 = arith.constant 0 : index
    %c0_28 = arith.constant 0 : index
    %49 = vector.load %arg13[%c0_26, %c2, %c0_27, %c0_28] : memref<1x3x64x64xf32, #tpu.memory_space<vmem>>, vector<1x1x64x64xf32>
    %50 = vector.shape_cast %49 : vector<1x1x64x64xf32> to vector<64x64xf32>
    %cst_29 = arith.constant dense<0.000000e+00> : vector<6x64xf32>
    %51 = tpu.matmul %3, %50, %cst_29 {dimension_numbers = #tpu.dot_dimension_numbers<[1], [0], [0], [1], [0, 0, 1, 1], [], []>} : vector<6x64xf32>, vector<64x64xf32>, vector<6x64xf32> -> vector<6x64xf32>
    %c0_30 = arith.constant 0 : index
    %c2_31 = arith.constant 2 : index
    %c0_32 = arith.constant 0 : index
    %c0_33 = arith.constant 0 : index
    %52 = vector.load %arg14[%c0_30, %c2_31, %c0_32, %c0_33] : memref<1x3x1x64xf32, #tpu.memory_space<vmem>>, vector<1x1x1x64xf32>
    %53 = vector.shape_cast %52 : vector<1x1x1x64xf32> to vector<1x64xf32>
    %54 = vector.broadcast %53 : vector<1x64xf32> to vector<6x64xf32>
    %55 = arith.addf %51, %54 : vector<6x64xf32>
    %56 = vector.broadcast %13 : vector<1x64xf32> to vector<6x64xf32>
    %57 = arith.mulf %41, %56 : vector<6x64xf32>
    %cst_34 = arith.constant dense<0.000000e+00> : vector<6x6xf32>
    %58 = tpu.matmul %57, %48, %cst_34 {dimension_numbers = #tpu.dot_dimension_numbers<[1], [1], [0], [0], [0, 0, 1, 0], [], []>} : vector<6x64xf32>, vector<6x64xf32>, vector<6x6xf32> -> vector<6x6xf32>
    %cst_35 = arith.constant 2.500000e-01 : f32
    %59 = vector.broadcast %cst_35 : f32 to vector<6x6xf32>
    %60 = arith.mulf %58, %59 : vector<6x6xf32>
    %cst_36 = arith.constant dense<0xFF800000> : vector<6xf32>
    %61 = vector.multi_reduction <maximumf>, %60, %cst_36 [1] : vector<6x6xf32> to vector<6xf32>
    %62 = vector.shape_cast %61 : vector<6xf32> to vector<6x1xf32>
    %63 = vector.broadcast %62 : vector<6x1xf32> to vector<6x6xf32>
    %64 = arith.subf %60, %63 : vector<6x6xf32>
    %65 = math.exp %64 : vector<6x6xf32>
    %cst_37 = arith.constant dense<0.000000e+00> : vector<6xf32>
    %66 = vector.multi_reduction <add>, %65, %cst_37 [1] : vector<6x6xf32> to vector<6xf32>
    %67 = vector.shape_cast %66 : vector<6xf32> to vector<6x1xf32>
    %68 = vector.broadcast %67 : vector<6x1xf32> to vector<6x6xf32>
    %69 = arith.divf %65, %68 : vector<6x6xf32>
    %70 = vector.broadcast %13 : vector<1x64xf32> to vector<6x64xf32>
    %71 = arith.mulf %55, %70 : vector<6x64xf32>
    %cst_38 = arith.constant dense<0.000000e+00> : vector<6x64xf32>
    %72 = tpu.matmul %69, %71, %cst_38 {dimension_numbers = #tpu.dot_dimension_numbers<[1], [0], [0], [1], [0, 0, 1, 1], [], []>} : vector<6x6xf32>, vector<6x64xf32>, vector<6x64xf32> -> vector<6x64xf32>
    %73 = vector.broadcast %20 : vector<1x64xf32> to vector<6x64xf32>
    %74 = arith.mulf %41, %73 : vector<6x64xf32>
    %cst_39 = arith.constant dense<0.000000e+00> : vector<6x6xf32>
    %75 = tpu.matmul %74, %48, %cst_39 {dimension_numbers = #tpu.dot_dimension_numbers<[1], [1], [0], [0], [0, 0, 1, 0], [], []>} : vector<6x64xf32>, vector<6x64xf32>, vector<6x6xf32> -> vector<6x6xf32>
    %cst_40 = arith.constant 2.500000e-01 : f32
    %76 = vector.broadcast %cst_40 : f32 to vector<6x6xf32>
    %77 = arith.mulf %75, %76 : vector<6x6xf32>
    %cst_41 = arith.constant dense<0xFF800000> : vector<6xf32>
    %78 = vector.multi_reduction <maximumf>, %77, %cst_41 [1] : vector<6x6xf32> to vector<6xf32>
    %79 = vector.shape_cast %78 : vector<6xf32> to vector<6x1xf32>
    %80 = vector.broadcast %79 : vector<6x1xf32> to vector<6x6xf32>
    %81 = arith.subf %77, %80 : vector<6x6xf32>
    %82 = math.exp %81 : vector<6x6xf32>
    %cst_42 = arith.constant dense<0.000000e+00> : vector<6xf32>
    %83 = vector.multi_reduction <add>, %82, %cst_42 [1] : vector<6x6xf32> to vector<6xf32>
    %84 = vector.shape_cast %83 : vector<6xf32> to vector<6x1xf32>
    %85 = vector.broadcast %84 : vector<6x1xf32> to vector<6x6xf32>
    %86 = arith.divf %82, %85 : vector<6x6xf32>
    %87 = vector.broadcast %20 : vector<1x64xf32> to vector<6x64xf32>
    %88 = arith.mulf %55, %87 : vector<6x64xf32>
    %cst_43 = arith.constant dense<0.000000e+00> : vector<6x64xf32>
    %89 = tpu.matmul %86, %88, %cst_43 {dimension_numbers = #tpu.dot_dimension_numbers<[1], [0], [0], [1], [0, 0, 1, 1], [], []>} : vector<6x6xf32>, vector<6x64xf32>, vector<6x64xf32> -> vector<6x64xf32>
    %90 = arith.addf %72, %89 : vector<6x64xf32>
    %91 = vector.broadcast %27 : vector<1x64xf32> to vector<6x64xf32>
    %92 = arith.mulf %41, %91 : vector<6x64xf32>
    %cst_44 = arith.constant dense<0.000000e+00> : vector<6x6xf32>
    %93 = tpu.matmul %92, %48, %cst_44 {dimension_numbers = #tpu.dot_dimension_numbers<[1], [1], [0], [0], [0, 0, 1, 0], [], []>} : vector<6x64xf32>, vector<6x64xf32>, vector<6x6xf32> -> vector<6x6xf32>
    %cst_45 = arith.constant 2.500000e-01 : f32
    %94 = vector.broadcast %cst_45 : f32 to vector<6x6xf32>
    %95 = arith.mulf %93, %94 : vector<6x6xf32>
    %cst_46 = arith.constant dense<0xFF800000> : vector<6xf32>
    %96 = vector.multi_reduction <maximumf>, %95, %cst_46 [1] : vector<6x6xf32> to vector<6xf32>
    %97 = vector.shape_cast %96 : vector<6xf32> to vector<6x1xf32>
    %98 = vector.broadcast %97 : vector<6x1xf32> to vector<6x6xf32>
    %99 = arith.subf %95, %98 : vector<6x6xf32>
    %100 = math.exp %99 : vector<6x6xf32>
    %cst_47 = arith.constant dense<0.000000e+00> : vector<6xf32>
    %101 = vector.multi_reduction <add>, %100, %cst_47 [1] : vector<6x6xf32> to vector<6xf32>
    %102 = vector.shape_cast %101 : vector<6xf32> to vector<6x1xf32>
    %103 = vector.broadcast %102 : vector<6x1xf32> to vector<6x6xf32>
    %104 = arith.divf %100, %103 : vector<6x6xf32>
    %105 = vector.broadcast %27 : vector<1x64xf32> to vector<6x64xf32>
    %106 = arith.mulf %55, %105 : vector<6x64xf32>
    %cst_48 = arith.constant dense<0.000000e+00> : vector<6x64xf32>
    %107 = tpu.matmul %104, %106, %cst_48 {dimension_numbers = #tpu.dot_dimension_numbers<[1], [0], [0], [1], [0, 0, 1, 1], [], []>} : vector<6x6xf32>, vector<6x64xf32>, vector<6x64xf32> -> vector<6x64xf32>
    %108 = arith.addf %90, %107 : vector<6x64xf32>
    %109 = vector.broadcast %34 : vector<1x64xf32> to vector<6x64xf32>
    %110 = arith.mulf %41, %109 : vector<6x64xf32>
    %cst_49 = arith.constant dense<0.000000e+00> : vector<6x6xf32>
    %111 = tpu.matmul %110, %48, %cst_49 {dimension_numbers = #tpu.dot_dimension_numbers<[1], [1], [0], [0], [0, 0, 1, 0], [], []>} : vector<6x64xf32>, vector<6x64xf32>, vector<6x6xf32> -> vector<6x6xf32>
    %cst_50 = arith.constant 2.500000e-01 : f32
    %112 = vector.broadcast %cst_50 : f32 to vector<6x6xf32>
    %113 = arith.mulf %111, %112 : vector<6x6xf32>
    %cst_51 = arith.constant dense<0xFF800000> : vector<6xf32>
    %114 = vector.multi_reduction <maximumf>, %113, %cst_51 [1] : vector<6x6xf32> to vector<6xf32>
    %115 = vector.shape_cast %114 : vector<6xf32> to vector<6x1xf32>
    %116 = vector.broadcast %115 : vector<6x1xf32> to vector<6x6xf32>
    %117 = arith.subf %113, %116 : vector<6x6xf32>
    %118 = math.exp %117 : vector<6x6xf32>
    %cst_52 = arith.constant dense<0.000000e+00> : vector<6xf32>
    %119 = vector.multi_reduction <add>, %118, %cst_52 [1] : vector<6x6xf32> to vector<6xf32>
    %120 = vector.shape_cast %119 : vector<6xf32> to vector<6x1xf32>
    %121 = vector.broadcast %120 : vector<6x1xf32> to vector<6x6xf32>
    %122 = arith.divf %118, %121 : vector<6x6xf32>
    %123 = vector.broadcast %34 : vector<1x64xf32> to vector<6x64xf32>
    %124 = arith.mulf %55, %123 : vector<6x64xf32>
    %cst_53 = arith.constant dense<0.000000e+00> : vector<6x64xf32>
    %125 = tpu.matmul %122, %124, %cst_53 {dimension_numbers = #tpu.dot_dimension_numbers<[1], [0], [0], [1], [0, 0, 1, 1], [], []>} : vector<6x6xf32>, vector<6x64xf32>, vector<6x64xf32> -> vector<6x64xf32>
    %126 = arith.addf %108, %125 : vector<6x64xf32>
    %c0_54 = arith.constant 0 : index
    %c0_55 = arith.constant 0 : index
    %c0_56 = arith.constant 0 : index
    %127 = vector.load %arg15[%c0_54, %c0_55, %c0_56] : memref<1x64x64xf32, #tpu.memory_space<vmem>>, vector<1x64x64xf32>
    %128 = vector.shape_cast %127 : vector<1x64x64xf32> to vector<64x64xf32>
    %cst_57 = arith.constant dense<0.000000e+00> : vector<6x64xf32>
    %129 = tpu.matmul %126, %128, %cst_57 {dimension_numbers = #tpu.dot_dimension_numbers<[1], [0], [0], [1], [0, 0, 1, 1], [], []>} : vector<6x64xf32>, vector<64x64xf32>, vector<6x64xf32> -> vector<6x64xf32>
    %c0_58 = arith.constant 0 : index
    %c0_59 = arith.constant 0 : index
    %c0_60 = arith.constant 0 : index
    %130 = vector.load %arg16[%c0_58, %c0_59, %c0_60] : memref<1x1x64xf32, #tpu.memory_space<vmem>>, vector<1x1x64xf32>
    %131 = vector.shape_cast %130 : vector<1x1x64xf32> to vector<1x64xf32>
    %132 = vector.broadcast %131 : vector<1x64xf32> to vector<6x64xf32>
    %133 = arith.addf %129, %132 : vector<6x64xf32>
    %134 = arith.addf %3, %133 : vector<6x64xf32>
    %cst_61 = arith.constant dense<0.000000e+00> : vector<6xf32>
    %135 = vector.multi_reduction <add>, %134, %cst_61 [1] : vector<6x64xf32> to vector<6xf32>
    %136 = vector.shape_cast %135 : vector<6xf32> to vector<6x1xf32>
    %cst_62 = arith.constant 6.400000e+01 : f32
    %137 = vector.broadcast %cst_62 : f32 to vector<6x1xf32>
    %138 = arith.divf %136, %137 : vector<6x1xf32>
    %139 = vector.broadcast %138 : vector<6x1xf32> to vector<6x64xf32>
    %140 = arith.subf %134, %139 : vector<6x64xf32>
    %141 = arith.mulf %140, %140 : vector<6x64xf32>
    %cst_63 = arith.constant dense<0.000000e+00> : vector<6xf32>
    %142 = vector.multi_reduction <add>, %141, %cst_63 [1] : vector<6x64xf32> to vector<6xf32>
    %143 = vector.shape_cast %142 : vector<6xf32> to vector<6x1xf32>
    %cst_64 = arith.constant 6.400000e+01 : f32
    %144 = vector.broadcast %cst_64 : f32 to vector<6x1xf32>
    %145 = arith.divf %143, %144 : vector<6x1xf32>
    %146 = vector.broadcast %138 : vector<6x1xf32> to vector<6x64xf32>
    %147 = arith.subf %134, %146 : vector<6x64xf32>
    %cst_65 = arith.constant 9.99999974E-6 : f32
    %148 = vector.broadcast %cst_65 : f32 to vector<6x1xf32>
    %149 = arith.addf %145, %148 : vector<6x1xf32>
    %150 = math.rsqrt %149 : vector<6x1xf32>
    %151 = vector.broadcast %150 : vector<6x1xf32> to vector<6x64xf32>
    %152 = arith.mulf %147, %151 : vector<6x64xf32>
    %c0_66 = arith.constant 0 : index
    %c0_67 = arith.constant 0 : index
    %c0_68 = arith.constant 0 : index
    %c0_69 = arith.constant 0 : index
    %153 = vector.load %arg25[%c0_66, %c0_67, %c0_68, %c0_69] : memref<1x3x1x64xf32, #tpu.memory_space<vmem>>, vector<1x1x1x64xf32>
    %154 = vector.shape_cast %153 : vector<1x1x1x64xf32> to vector<1x64xf32>
    %155 = vector.broadcast %154 : vector<1x64xf32> to vector<6x64xf32>
    %156 = arith.mulf %152, %155 : vector<6x64xf32>
    %c0_70 = arith.constant 0 : index
    %c0_71 = arith.constant 0 : index
    %c0_72 = arith.constant 0 : index
    %c0_73 = arith.constant 0 : index
    %157 = vector.load %arg26[%c0_70, %c0_71, %c0_72, %c0_73] : memref<1x3x1x64xf32, #tpu.memory_space<vmem>>, vector<1x1x1x64xf32>
    %158 = vector.shape_cast %157 : vector<1x1x1x64xf32> to vector<1x64xf32>
    %159 = vector.broadcast %158 : vector<1x64xf32> to vector<6x64xf32>
    %160 = arith.addf %156, %159 : vector<6x64xf32>
    %c0_74 = arith.constant 0 : index
    %c0_75 = arith.constant 0 : index
    %c0_76 = arith.constant 0 : index
    %c0_77 = arith.constant 0 : index
    %161 = vector.load %arg17[%c0_74, %c0_75, %c0_76, %c0_77] : memref<1x3x64x64xf32, #tpu.memory_space<vmem>>, vector<1x1x64x64xf32>
    %162 = vector.shape_cast %161 : vector<1x1x64x64xf32> to vector<64x64xf32>
    %cst_78 = arith.constant dense<0.000000e+00> : vector<6x64xf32>
    %163 = tpu.matmul %160, %162, %cst_78 {dimension_numbers = #tpu.dot_dimension_numbers<[1], [0], [0], [1], [0, 0, 1, 1], [], []>} : vector<6x64xf32>, vector<64x64xf32>, vector<6x64xf32> -> vector<6x64xf32>
    %c0_79 = arith.constant 0 : index
    %c0_80 = arith.constant 0 : index
    %c0_81 = arith.constant 0 : index
    %c0_82 = arith.constant 0 : index
    %164 = vector.load %arg18[%c0_79, %c0_80, %c0_81, %c0_82] : memref<1x3x1x64xf32, #tpu.memory_space<vmem>>, vector<1x1x1x64xf32>
    %165 = vector.shape_cast %164 : vector<1x1x1x64xf32> to vector<1x64xf32>
    %166 = vector.broadcast %165 : vector<1x64xf32> to vector<6x64xf32>
    %167 = arith.addf %163, %166 : vector<6x64xf32>
    %c0_83 = arith.constant 0 : index
    %c1_84 = arith.constant 1 : index
    %c0_85 = arith.constant 0 : index
    %c0_86 = arith.constant 0 : index
    %168 = vector.load %arg17[%c0_83, %c1_84, %c0_85, %c0_86] : memref<1x3x64x64xf32, #tpu.memory_space<vmem>>, vector<1x1x64x64xf32>
    %169 = vector.shape_cast %168 : vector<1x1x64x64xf32> to vector<64x64xf32>
    %cst_87 = arith.constant dense<0.000000e+00> : vector<6x64xf32>
    %170 = tpu.matmul %4, %169, %cst_87 {dimension_numbers = #tpu.dot_dimension_numbers<[1], [0], [0], [1], [0, 0, 1, 1], [], []>} : vector<6x64xf32>, vector<64x64xf32>, vector<6x64xf32> -> vector<6x64xf32>
    %c0_88 = arith.constant 0 : index
    %c1_89 = arith.constant 1 : index
    %c0_90 = arith.constant 0 : index
    %c0_91 = arith.constant 0 : index
    %171 = vector.load %arg18[%c0_88, %c1_89, %c0_90, %c0_91] : memref<1x3x1x64xf32, #tpu.memory_space<vmem>>, vector<1x1x1x64xf32>
    %172 = vector.shape_cast %171 : vector<1x1x1x64xf32> to vector<1x64xf32>
    %173 = vector.broadcast %172 : vector<1x64xf32> to vector<6x64xf32>
    %174 = arith.addf %170, %173 : vector<6x64xf32>
    %c0_92 = arith.constant 0 : index
    %c2_93 = arith.constant 2 : index
    %c0_94 = arith.constant 0 : index
    %c0_95 = arith.constant 0 : index
    %175 = vector.load %arg17[%c0_92, %c2_93, %c0_94, %c0_95] : memref<1x3x64x64xf32, #tpu.memory_space<vmem>>, vector<1x1x64x64xf32>
    %176 = vector.shape_cast %175 : vector<1x1x64x64xf32> to vector<64x64xf32>
    %cst_96 = arith.constant dense<0.000000e+00> : vector<6x64xf32>
    %177 = tpu.matmul %4, %176, %cst_96 {dimension_numbers = #tpu.dot_dimension_numbers<[1], [0], [0], [1], [0, 0, 1, 1], [], []>} : vector<6x64xf32>, vector<64x64xf32>, vector<6x64xf32> -> vector<6x64xf32>
    %c0_97 = arith.constant 0 : index
    %c2_98 = arith.constant 2 : index
    %c0_99 = arith.constant 0 : index
    %c0_100 = arith.constant 0 : index
    %178 = vector.load %arg18[%c0_97, %c2_98, %c0_99, %c0_100] : memref<1x3x1x64xf32, #tpu.memory_space<vmem>>, vector<1x1x1x64xf32>
    %179 = vector.shape_cast %178 : vector<1x1x1x64xf32> to vector<1x64xf32>
    %180 = vector.broadcast %179 : vector<1x64xf32> to vector<6x64xf32>
    %181 = arith.addf %177, %180 : vector<6x64xf32>
    %182 = vector.broadcast %13 : vector<1x64xf32> to vector<6x64xf32>
    %183 = arith.mulf %167, %182 : vector<6x64xf32>
    %cst_101 = arith.constant dense<0.000000e+00> : vector<6x6xf32>
    %184 = tpu.matmul %183, %174, %cst_101 {dimension_numbers = #tpu.dot_dimension_numbers<[1], [1], [0], [0], [0, 0, 1, 0], [], []>} : vector<6x64xf32>, vector<6x64xf32>, vector<6x6xf32> -> vector<6x6xf32>
    %cst_102 = arith.constant 2.500000e-01 : f32
    %185 = vector.broadcast %cst_102 : f32 to vector<6x6xf32>
    %186 = arith.mulf %184, %185 : vector<6x6xf32>
    %187 = arith.addf %186, %5 : vector<6x6xf32>
    %cst_103 = arith.constant dense<0xFF800000> : vector<6xf32>
    %188 = vector.multi_reduction <maximumf>, %187, %cst_103 [1] : vector<6x6xf32> to vector<6xf32>
    %189 = vector.shape_cast %188 : vector<6xf32> to vector<6x1xf32>
    %190 = vector.broadcast %189 : vector<6x1xf32> to vector<6x6xf32>
    %191 = arith.subf %187, %190 : vector<6x6xf32>
    %192 = math.exp %191 : vector<6x6xf32>
    %cst_104 = arith.constant dense<0.000000e+00> : vector<6xf32>
    %193 = vector.multi_reduction <add>, %192, %cst_104 [1] : vector<6x6xf32> to vector<6xf32>
    %194 = vector.shape_cast %193 : vector<6xf32> to vector<6x1xf32>
    %195 = vector.broadcast %194 : vector<6x1xf32> to vector<6x6xf32>
    %196 = arith.divf %192, %195 : vector<6x6xf32>
    %197 = vector.broadcast %13 : vector<1x64xf32> to vector<6x64xf32>
    %198 = arith.mulf %181, %197 : vector<6x64xf32>
    %cst_105 = arith.constant dense<0.000000e+00> : vector<6x64xf32>
    %199 = tpu.matmul %196, %198, %cst_105 {dimension_numbers = #tpu.dot_dimension_numbers<[1], [0], [0], [1], [0, 0, 1, 1], [], []>} : vector<6x6xf32>, vector<6x64xf32>, vector<6x64xf32> -> vector<6x64xf32>
    %200 = vector.broadcast %20 : vector<1x64xf32> to vector<6x64xf32>
    %201 = arith.mulf %167, %200 : vector<6x64xf32>
    %cst_106 = arith.constant dense<0.000000e+00> : vector<6x6xf32>
    %202 = tpu.matmul %201, %174, %cst_106 {dimension_numbers = #tpu.dot_dimension_numbers<[1], [1], [0], [0], [0, 0, 1, 0], [], []>} : vector<6x64xf32>, vector<6x64xf32>, vector<6x6xf32> -> vector<6x6xf32>
    %cst_107 = arith.constant 2.500000e-01 : f32
    %203 = vector.broadcast %cst_107 : f32 to vector<6x6xf32>
    %204 = arith.mulf %202, %203 : vector<6x6xf32>
    %205 = arith.addf %204, %5 : vector<6x6xf32>
    %cst_108 = arith.constant dense<0xFF800000> : vector<6xf32>
    %206 = vector.multi_reduction <maximumf>, %205, %cst_108 [1] : vector<6x6xf32> to vector<6xf32>
    %207 = vector.shape_cast %206 : vector<6xf32> to vector<6x1xf32>
    %208 = vector.broadcast %207 : vector<6x1xf32> to vector<6x6xf32>
    %209 = arith.subf %205, %208 : vector<6x6xf32>
    %210 = math.exp %209 : vector<6x6xf32>
    %cst_109 = arith.constant dense<0.000000e+00> : vector<6xf32>
    %211 = vector.multi_reduction <add>, %210, %cst_109 [1] : vector<6x6xf32> to vector<6xf32>
    %212 = vector.shape_cast %211 : vector<6xf32> to vector<6x1xf32>
    %213 = vector.broadcast %212 : vector<6x1xf32> to vector<6x6xf32>
    %214 = arith.divf %210, %213 : vector<6x6xf32>
    %215 = vector.broadcast %20 : vector<1x64xf32> to vector<6x64xf32>
    %216 = arith.mulf %181, %215 : vector<6x64xf32>
    %cst_110 = arith.constant dense<0.000000e+00> : vector<6x64xf32>
    %217 = tpu.matmul %214, %216, %cst_110 {dimension_numbers = #tpu.dot_dimension_numbers<[1], [0], [0], [1], [0, 0, 1, 1], [], []>} : vector<6x6xf32>, vector<6x64xf32>, vector<6x64xf32> -> vector<6x64xf32>
    %218 = arith.addf %199, %217 : vector<6x64xf32>
    %219 = vector.broadcast %27 : vector<1x64xf32> to vector<6x64xf32>
    %220 = arith.mulf %167, %219 : vector<6x64xf32>
    %cst_111 = arith.constant dense<0.000000e+00> : vector<6x6xf32>
    %221 = tpu.matmul %220, %174, %cst_111 {dimension_numbers = #tpu.dot_dimension_numbers<[1], [1], [0], [0], [0, 0, 1, 0], [], []>} : vector<6x64xf32>, vector<6x64xf32>, vector<6x6xf32> -> vector<6x6xf32>
    %cst_112 = arith.constant 2.500000e-01 : f32
    %222 = vector.broadcast %cst_112 : f32 to vector<6x6xf32>
    %223 = arith.mulf %221, %222 : vector<6x6xf32>
    %224 = arith.addf %223, %5 : vector<6x6xf32>
    %cst_113 = arith.constant dense<0xFF800000> : vector<6xf32>
    %225 = vector.multi_reduction <maximumf>, %224, %cst_113 [1] : vector<6x6xf32> to vector<6xf32>
    %226 = vector.shape_cast %225 : vector<6xf32> to vector<6x1xf32>
    %227 = vector.broadcast %226 : vector<6x1xf32> to vector<6x6xf32>
    %228 = arith.subf %224, %227 : vector<6x6xf32>
    %229 = math.exp %228 : vector<6x6xf32>
    %cst_114 = arith.constant dense<0.000000e+00> : vector<6xf32>
    %230 = vector.multi_reduction <add>, %229, %cst_114 [1] : vector<6x6xf32> to vector<6xf32>
    %231 = vector.shape_cast %230 : vector<6xf32> to vector<6x1xf32>
    %232 = vector.broadcast %231 : vector<6x1xf32> to vector<6x6xf32>
    %233 = arith.divf %229, %232 : vector<6x6xf32>
    %234 = vector.broadcast %27 : vector<1x64xf32> to vector<6x64xf32>
    %235 = arith.mulf %181, %234 : vector<6x64xf32>
    %cst_115 = arith.constant dense<0.000000e+00> : vector<6x64xf32>
    %236 = tpu.matmul %233, %235, %cst_115 {dimension_numbers = #tpu.dot_dimension_numbers<[1], [0], [0], [1], [0, 0, 1, 1], [], []>} : vector<6x6xf32>, vector<6x64xf32>, vector<6x64xf32> -> vector<6x64xf32>
    %237 = arith.addf %218, %236 : vector<6x64xf32>
    %238 = vector.broadcast %34 : vector<1x64xf32> to vector<6x64xf32>
    %239 = arith.mulf %167, %238 : vector<6x64xf32>
    %cst_116 = arith.constant dense<0.000000e+00> : vector<6x6xf32>
    %240 = tpu.matmul %239, %174, %cst_116 {dimension_numbers = #tpu.dot_dimension_numbers<[1], [1], [0], [0], [0, 0, 1, 0], [], []>} : vector<6x64xf32>, vector<6x64xf32>, vector<6x6xf32> -> vector<6x6xf32>
    %cst_117 = arith.constant 2.500000e-01 : f32
    %241 = vector.broadcast %cst_117 : f32 to vector<6x6xf32>
    %242 = arith.mulf %240, %241 : vector<6x6xf32>
    %243 = arith.addf %242, %5 : vector<6x6xf32>
    %cst_118 = arith.constant dense<0xFF800000> : vector<6xf32>
    %244 = vector.multi_reduction <maximumf>, %243, %cst_118 [1] : vector<6x6xf32> to vector<6xf32>
    %245 = vector.shape_cast %244 : vector<6xf32> to vector<6x1xf32>
    %246 = vector.broadcast %245 : vector<6x1xf32> to vector<6x6xf32>
    %247 = arith.subf %243, %246 : vector<6x6xf32>
    %248 = math.exp %247 : vector<6x6xf32>
    %cst_119 = arith.constant dense<0.000000e+00> : vector<6xf32>
    %249 = vector.multi_reduction <add>, %248, %cst_119 [1] : vector<6x6xf32> to vector<6xf32>
    %250 = vector.shape_cast %249 : vector<6xf32> to vector<6x1xf32>
    %251 = vector.broadcast %250 : vector<6x1xf32> to vector<6x6xf32>
    %252 = arith.divf %248, %251 : vector<6x6xf32>
    %253 = vector.broadcast %34 : vector<1x64xf32> to vector<6x64xf32>
    %254 = arith.mulf %181, %253 : vector<6x64xf32>
    %cst_120 = arith.constant dense<0.000000e+00> : vector<6x64xf32>
    %255 = tpu.matmul %252, %254, %cst_120 {dimension_numbers = #tpu.dot_dimension_numbers<[1], [0], [0], [1], [0, 0, 1, 1], [], []>} : vector<6x6xf32>, vector<6x64xf32>, vector<6x64xf32> -> vector<6x64xf32>
    %256 = arith.addf %237, %255 : vector<6x64xf32>
    %c0_121 = arith.constant 0 : index
    %c0_122 = arith.constant 0 : index
    %c0_123 = arith.constant 0 : index
    %257 = vector.load %arg19[%c0_121, %c0_122, %c0_123] : memref<1x64x64xf32, #tpu.memory_space<vmem>>, vector<1x64x64xf32>
    %258 = vector.shape_cast %257 : vector<1x64x64xf32> to vector<64x64xf32>
    %cst_124 = arith.constant dense<0.000000e+00> : vector<6x64xf32>
    %259 = tpu.matmul %256, %258, %cst_124 {dimension_numbers = #tpu.dot_dimension_numbers<[1], [0], [0], [1], [0, 0, 1, 1], [], []>} : vector<6x64xf32>, vector<64x64xf32>, vector<6x64xf32> -> vector<6x64xf32>
    %c0_125 = arith.constant 0 : index
    %c0_126 = arith.constant 0 : index
    %c0_127 = arith.constant 0 : index
    %260 = vector.load %arg20[%c0_125, %c0_126, %c0_127] : memref<1x1x64xf32, #tpu.memory_space<vmem>>, vector<1x1x64xf32>
    %261 = vector.shape_cast %260 : vector<1x1x64xf32> to vector<1x64xf32>
    %262 = vector.broadcast %261 : vector<1x64xf32> to vector<6x64xf32>
    %263 = arith.addf %259, %262 : vector<6x64xf32>
    %264 = arith.addf %160, %263 : vector<6x64xf32>
    %cst_128 = arith.constant dense<0.000000e+00> : vector<6xf32>
    %265 = vector.multi_reduction <add>, %264, %cst_128 [1] : vector<6x64xf32> to vector<6xf32>
    %266 = vector.shape_cast %265 : vector<6xf32> to vector<6x1xf32>
    %cst_129 = arith.constant 6.400000e+01 : f32
    %267 = vector.broadcast %cst_129 : f32 to vector<6x1xf32>
    %268 = arith.divf %266, %267 : vector<6x1xf32>
    %269 = vector.broadcast %268 : vector<6x1xf32> to vector<6x64xf32>
    %270 = arith.subf %264, %269 : vector<6x64xf32>
    %271 = arith.mulf %270, %270 : vector<6x64xf32>
    %cst_130 = arith.constant dense<0.000000e+00> : vector<6xf32>
    %272 = vector.multi_reduction <add>, %271, %cst_130 [1] : vector<6x64xf32> to vector<6xf32>
    %273 = vector.shape_cast %272 : vector<6xf32> to vector<6x1xf32>
    %cst_131 = arith.constant 6.400000e+01 : f32
    %274 = vector.broadcast %cst_131 : f32 to vector<6x1xf32>
    %275 = arith.divf %273, %274 : vector<6x1xf32>
    %276 = vector.broadcast %268 : vector<6x1xf32> to vector<6x64xf32>
    %277 = arith.subf %264, %276 : vector<6x64xf32>
    %cst_132 = arith.constant 9.99999974E-6 : f32
    %278 = vector.broadcast %cst_132 : f32 to vector<6x1xf32>
    %279 = arith.addf %275, %278 : vector<6x1xf32>
    %280 = math.rsqrt %279 : vector<6x1xf32>
    %281 = vector.broadcast %280 : vector<6x1xf32> to vector<6x64xf32>
    %282 = arith.mulf %277, %281 : vector<6x64xf32>
    %c0_133 = arith.constant 0 : index
    %c1_134 = arith.constant 1 : index
    %c0_135 = arith.constant 0 : index
    %c0_136 = arith.constant 0 : index
    %283 = vector.load %arg25[%c0_133, %c1_134, %c0_135, %c0_136] : memref<1x3x1x64xf32, #tpu.memory_space<vmem>>, vector<1x1x1x64xf32>
    %284 = vector.shape_cast %283 : vector<1x1x1x64xf32> to vector<1x64xf32>
    %285 = vector.broadcast %284 : vector<1x64xf32> to vector<6x64xf32>
    %286 = arith.mulf %282, %285 : vector<6x64xf32>
    %c0_137 = arith.constant 0 : index
    %c1_138 = arith.constant 1 : index
    %c0_139 = arith.constant 0 : index
    %c0_140 = arith.constant 0 : index
    %287 = vector.load %arg26[%c0_137, %c1_138, %c0_139, %c0_140] : memref<1x3x1x64xf32, #tpu.memory_space<vmem>>, vector<1x1x1x64xf32>
    %288 = vector.shape_cast %287 : vector<1x1x1x64xf32> to vector<1x64xf32>
    %289 = vector.broadcast %288 : vector<1x64xf32> to vector<6x64xf32>
    %290 = arith.addf %286, %289 : vector<6x64xf32>
    %c0_141 = arith.constant 0 : index
    %c0_142 = arith.constant 0 : index
    %c0_143 = arith.constant 0 : index
    %291 = vector.load %arg21[%c0_141, %c0_142, %c0_143] : memref<1x64x256xf32, #tpu.memory_space<vmem>>, vector<1x64x256xf32>
    %292 = vector.shape_cast %291 : vector<1x64x256xf32> to vector<64x256xf32>
    %cst_144 = arith.constant dense<0.000000e+00> : vector<6x256xf32>
    %293 = tpu.matmul %290, %292, %cst_144 {dimension_numbers = #tpu.dot_dimension_numbers<[1], [0], [0], [1], [0, 0, 1, 1], [], []>} : vector<6x64xf32>, vector<64x256xf32>, vector<6x256xf32> -> vector<6x256xf32>
    %c0_145 = arith.constant 0 : index
    %c0_146 = arith.constant 0 : index
    %c0_147 = arith.constant 0 : index
    %294 = vector.load %arg22[%c0_145, %c0_146, %c0_147] : memref<1x1x256xf32, #tpu.memory_space<vmem>>, vector<1x1x256xf32>
    %295 = vector.shape_cast %294 : vector<1x1x256xf32> to vector<1x256xf32>
    %296 = vector.broadcast %295 : vector<1x256xf32> to vector<6x256xf32>
    %297 = arith.addf %293, %296 : vector<6x256xf32>
    %cst_148 = arith.constant 5.000000e-01 : f32
    %298 = vector.broadcast %cst_148 : f32 to vector<6x256xf32>
    %299 = arith.mulf %298, %297 : vector<6x256xf32>
    %cst_149 = arith.constant 0.707106769 : f32
    %300 = vector.broadcast %cst_149 : f32 to vector<6x256xf32>
    %301 = arith.mulf %297, %300 : vector<6x256xf32>
    %302 = math.absf %301 : vector<6x256xf32>
    %cst_150 = arith.constant 0.327591091 : f32
    %303 = vector.broadcast %cst_150 : f32 to vector<6x256xf32>
    %304 = arith.mulf %303, %302 : vector<6x256xf32>
    %cst_151 = arith.constant 1.000000e+00 : f32
    %305 = vector.broadcast %cst_151 : f32 to vector<6x256xf32>
    %306 = arith.addf %305, %304 : vector<6x256xf32>
    %cst_152 = arith.constant 1.000000e+00 : f32
    %307 = vector.broadcast %cst_152 : f32 to vector<6x256xf32>
    %308 = arith.divf %307, %306 : vector<6x256xf32>
    %cst_153 = arith.constant 1.06140542 : f32
    %309 = vector.broadcast %cst_153 : f32 to vector<6x256xf32>
    %310 = arith.mulf %308, %309 : vector<6x256xf32>
    %cst_154 = arith.constant -1.45315206 : f32
    %311 = vector.broadcast %cst_154 : f32 to vector<6x256xf32>
    %312 = arith.addf %311, %310 : vector<6x256xf32>
    %313 = arith.mulf %308, %312 : vector<6x256xf32>
    %cst_155 = arith.constant 1.42141378 : f32
    %314 = vector.broadcast %cst_155 : f32 to vector<6x256xf32>
    %315 = arith.addf %314, %313 : vector<6x256xf32>
    %316 = arith.mulf %308, %315 : vector<6x256xf32>
    %cst_156 = arith.constant -0.284496725 : f32
    %317 = vector.broadcast %cst_156 : f32 to vector<6x256xf32>
    %318 = arith.addf %317, %316 : vector<6x256xf32>
    %319 = arith.mulf %308, %318 : vector<6x256xf32>
    %cst_157 = arith.constant 0.254829586 : f32
    %320 = vector.broadcast %cst_157 : f32 to vector<6x256xf32>
    %321 = arith.addf %320, %319 : vector<6x256xf32>
    %322 = arith.mulf %308, %321 : vector<6x256xf32>
    %323 = arith.mulf %302, %302 : vector<6x256xf32>
    %cst_158 = arith.constant 0.000000e+00 : f32
    %324 = vector.broadcast %cst_158 : f32 to vector<6x256xf32>
    %325 = arith.subf %324, %323 : vector<6x256xf32>
    %326 = math.exp %325 : vector<6x256xf32>
    %327 = arith.mulf %322, %326 : vector<6x256xf32>
    %cst_159 = arith.constant 1.000000e+00 : f32
    %328 = vector.broadcast %cst_159 : f32 to vector<6x256xf32>
    %329 = arith.subf %328, %327 : vector<6x256xf32>
    %cst_160 = arith.constant 0.000000e+00 : f32
    %330 = vector.broadcast %cst_160 : f32 to vector<6x256xf32>
    %331 = arith.cmpf olt, %301, %330 : vector<6x256xf32>
    %cst_161 = arith.constant 0.000000e+00 : f32
    %332 = vector.broadcast %cst_161 : f32 to vector<6x256xf32>
    %333 = arith.subf %332, %329 : vector<6x256xf32>
    %334 = arith.select %331, %333, %329 : vector<6x256xi1>, vector<6x256xf32>
    %cst_162 = arith.constant 1.000000e+00 : f32
    %335 = vector.broadcast %cst_162 : f32 to vector<6x256xf32>
    %336 = arith.addf %335, %334 : vector<6x256xf32>
    %337 = arith.mulf %299, %336 : vector<6x256xf32>
    %c0_163 = arith.constant 0 : index
    %c0_164 = arith.constant 0 : index
    %c0_165 = arith.constant 0 : index
    %338 = vector.load %arg23[%c0_163, %c0_164, %c0_165] : memref<1x256x64xf32, #tpu.memory_space<vmem>>, vector<1x256x64xf32>
    %339 = vector.shape_cast %338 : vector<1x256x64xf32> to vector<256x64xf32>
    %cst_166 = arith.constant dense<0.000000e+00> : vector<6x64xf32>
    %340 = tpu.matmul %337, %339, %cst_166 {dimension_numbers = #tpu.dot_dimension_numbers<[1], [0], [0], [1], [0, 0, 1, 1], [], []>} : vector<6x256xf32>, vector<256x64xf32>, vector<6x64xf32> -> vector<6x64xf32>
    %c0_167 = arith.constant 0 : index
    %c0_168 = arith.constant 0 : index
    %c0_169 = arith.constant 0 : index
    %341 = vector.load %arg24[%c0_167, %c0_168, %c0_169] : memref<1x1x64xf32, #tpu.memory_space<vmem>>, vector<1x1x64xf32>
    %342 = vector.shape_cast %341 : vector<1x1x64xf32> to vector<1x64xf32>
    %343 = vector.broadcast %342 : vector<1x64xf32> to vector<6x64xf32>
    %344 = arith.addf %340, %343 : vector<6x64xf32>
    %345 = arith.addf %290, %344 : vector<6x64xf32>
    %cst_170 = arith.constant dense<0.000000e+00> : vector<6xf32>
    %346 = vector.multi_reduction <add>, %345, %cst_170 [1] : vector<6x64xf32> to vector<6xf32>
    %347 = vector.shape_cast %346 : vector<6xf32> to vector<6x1xf32>
    %cst_171 = arith.constant 6.400000e+01 : f32
    %348 = vector.broadcast %cst_171 : f32 to vector<6x1xf32>
    %349 = arith.divf %347, %348 : vector<6x1xf32>
    %350 = vector.broadcast %349 : vector<6x1xf32> to vector<6x64xf32>
    %351 = arith.subf %345, %350 : vector<6x64xf32>
    %352 = arith.mulf %351, %351 : vector<6x64xf32>
    %cst_172 = arith.constant dense<0.000000e+00> : vector<6xf32>
    %353 = vector.multi_reduction <add>, %352, %cst_172 [1] : vector<6x64xf32> to vector<6xf32>
    %354 = vector.shape_cast %353 : vector<6xf32> to vector<6x1xf32>
    %cst_173 = arith.constant 6.400000e+01 : f32
    %355 = vector.broadcast %cst_173 : f32 to vector<6x1xf32>
    %356 = arith.divf %354, %355 : vector<6x1xf32>
    %357 = vector.broadcast %349 : vector<6x1xf32> to vector<6x64xf32>
    %358 = arith.subf %345, %357 : vector<6x64xf32>
    %cst_174 = arith.constant 9.99999974E-6 : f32
    %359 = vector.broadcast %cst_174 : f32 to vector<6x1xf32>
    %360 = arith.addf %356, %359 : vector<6x1xf32>
    %361 = math.rsqrt %360 : vector<6x1xf32>
    %362 = vector.broadcast %361 : vector<6x1xf32> to vector<6x64xf32>
    %363 = arith.mulf %358, %362 : vector<6x64xf32>
    %c0_175 = arith.constant 0 : index
    %c2_176 = arith.constant 2 : index
    %c0_177 = arith.constant 0 : index
    %c0_178 = arith.constant 0 : index
    %364 = vector.load %arg25[%c0_175, %c2_176, %c0_177, %c0_178] : memref<1x3x1x64xf32, #tpu.memory_space<vmem>>, vector<1x1x1x64xf32>
    %365 = vector.shape_cast %364 : vector<1x1x1x64xf32> to vector<1x64xf32>
    %366 = vector.broadcast %365 : vector<1x64xf32> to vector<6x64xf32>
    %367 = arith.mulf %363, %366 : vector<6x64xf32>
    %c0_179 = arith.constant 0 : index
    %c2_180 = arith.constant 2 : index
    %c0_181 = arith.constant 0 : index
    %c0_182 = arith.constant 0 : index
    %368 = vector.load %arg26[%c0_179, %c2_180, %c0_181, %c0_182] : memref<1x3x1x64xf32, #tpu.memory_space<vmem>>, vector<1x1x1x64xf32>
    %369 = vector.shape_cast %368 : vector<1x1x1x64xf32> to vector<1x64xf32>
    %370 = vector.broadcast %369 : vector<1x64xf32> to vector<6x64xf32>
    %371 = arith.addf %367, %370 : vector<6x64xf32>
    %c0_183 = arith.constant 0 : index
    %c0_184 = arith.constant 0 : index
    %372 = vector.load %arg32[%c0_183, %c0_184] : memref<6x64xf32, #tpu.memory_space<vmem>>, vector<6x64xf32>
    tpu.vector_store %arg32[%c0_183, %c0_184], %371 {strides = array<i32>} : memref<6x64xf32, #tpu.memory_space<vmem>>, vector<6x64xf32>,
    %c1_i32 = arith.constant 1 : i32
    %373 = arith.cmpi eq, %arg1, %c1_i32 : i32
    %374 = arith.extui %373 : i1 to i32
    %c0_i32_185 = arith.constant 0 : i32
    %375 = arith.cmpi ne, %374, %c0_i32_185 : i32
    scf.if %375 {
      %c0_186 = arith.constant 0 : index
      %c0_187 = arith.constant 0 : index
      %376 = vector.load %arg27[%c0_186, %c0_187] : memref<64x32xf32, #tpu.memory_space<vmem>>, vector<64x32xf32>
      %cst_188 = arith.constant dense<0.000000e+00> : vector<6x32xf32>
      %377 = tpu.matmul %371, %376, %cst_188 {dimension_numbers = #tpu.dot_dimension_numbers<[1], [0], [0], [1], [0, 0, 1, 1], [], []>} : vector<6x64xf32>, vector<64x32xf32>, vector<6x32xf32> -> vector<6x32xf32>
      %c0_189 = arith.constant 0 : index
      %c0_190 = arith.constant 0 : index
      %378 = vector.load %arg28[%c0_189, %c0_190] : memref<1x32xf32, #tpu.memory_space<vmem>>, vector<1x32xf32>
      %379 = vector.broadcast %378 : vector<1x32xf32> to vector<6x32xf32>
      %380 = arith.addf %377, %379 : vector<6x32xf32>
      %cst_191 = arith.constant 5.000000e-01 : f32
      %381 = vector.broadcast %cst_191 : f32 to vector<6x32xf32>
      %382 = arith.mulf %381, %380 : vector<6x32xf32>
      %cst_192 = arith.constant 0.707106769 : f32
      %383 = vector.broadcast %cst_192 : f32 to vector<6x32xf32>
      %384 = arith.mulf %380, %383 : vector<6x32xf32>
      %385 = math.absf %384 : vector<6x32xf32>
      %cst_193 = arith.constant 0.327591091 : f32
      %386 = vector.broadcast %cst_193 : f32 to vector<6x32xf32>
      %387 = arith.mulf %386, %385 : vector<6x32xf32>
      %cst_194 = arith.constant 1.000000e+00 : f32
      %388 = vector.broadcast %cst_194 : f32 to vector<6x32xf32>
      %389 = arith.addf %388, %387 : vector<6x32xf32>
      %cst_195 = arith.constant 1.000000e+00 : f32
      %390 = vector.broadcast %cst_195 : f32 to vector<6x32xf32>
      %391 = arith.divf %390, %389 : vector<6x32xf32>
      %cst_196 = arith.constant 1.06140542 : f32
      %392 = vector.broadcast %cst_196 : f32 to vector<6x32xf32>
      %393 = arith.mulf %391, %392 : vector<6x32xf32>
      %cst_197 = arith.constant -1.45315206 : f32
      %394 = vector.broadcast %cst_197 : f32 to vector<6x32xf32>
      %395 = arith.addf %394, %393 : vector<6x32xf32>
      %396 = arith.mulf %391, %395 : vector<6x32xf32>
      %cst_198 = arith.constant 1.42141378 : f32
      %397 = vector.broadcast %cst_198 : f32 to vector<6x32xf32>
      %398 = arith.addf %397, %396 : vector<6x32xf32>
      %399 = arith.mulf %391, %398 : vector<6x32xf32>
      %cst_199 = arith.constant -0.284496725 : f32
      %400 = vector.broadcast %cst_199 : f32 to vector<6x32xf32>
      %401 = arith.addf %400, %399 : vector<6x32xf32>
      %402 = arith.mulf %391, %401 : vector<6x32xf32>
      %cst_200 = arith.constant 0.254829586 : f32
      %403 = vector.broadcast %cst_200 : f32 to vector<6x32xf32>
      %404 = arith.addf %403, %402 : vector<6x32xf32>
      %405 = arith.mulf %391, %404 : vector<6x32xf32>
      %406 = arith.mulf %385, %385 : vector<6x32xf32>
      %cst_201 = arith.constant 0.000000e+00 : f32
      %407 = vector.broadcast %cst_201 : f32 to vector<6x32xf32>
      %408 = arith.subf %407, %406 : vector<6x32xf32>
      %409 = math.exp %408 : vector<6x32xf32>
      %410 = arith.mulf %405, %409 : vector<6x32xf32>
      %cst_202 = arith.constant 1.000000e+00 : f32
      %411 = vector.broadcast %cst_202 : f32 to vector<6x32xf32>
      %412 = arith.subf %411, %410 : vector<6x32xf32>
      %cst_203 = arith.constant 0.000000e+00 : f32
      %413 = vector.broadcast %cst_203 : f32 to vector<6x32xf32>
      %414 = arith.cmpf olt, %384, %413 : vector<6x32xf32>
      %cst_204 = arith.constant 0.000000e+00 : f32
      %415 = vector.broadcast %cst_204 : f32 to vector<6x32xf32>
      %416 = arith.subf %415, %412 : vector<6x32xf32>
      %417 = arith.select %414, %416, %412 : vector<6x32xi1>, vector<6x32xf32>
      %cst_205 = arith.constant 1.000000e+00 : f32
      %418 = vector.broadcast %cst_205 : f32 to vector<6x32xf32>
      %419 = arith.addf %418, %417 : vector<6x32xf32>
      %420 = arith.mulf %382, %419 : vector<6x32xf32>
      %c0_206 = arith.constant 0 : index
      %c0_207 = arith.constant 0 : index
      %421 = vector.load %arg29[%c0_206, %c0_207] : memref<32x12xf32, #tpu.memory_space<vmem>>, vector<32x12xf32>
      %cst_208 = arith.constant dense<0.000000e+00> : vector<6x12xf32>
      %422 = tpu.matmul %420, %421, %cst_208 {dimension_numbers = #tpu.dot_dimension_numbers<[1], [0], [0], [1], [0, 0, 1, 1], [], []>} : vector<6x32xf32>, vector<32x12xf32>, vector<6x12xf32> -> vector<6x12xf32>
      %c0_209 = arith.constant 0 : index
      %c0_210 = arith.constant 0 : index
      %423 = vector.load %arg30[%c0_209, %c0_210] : memref<1x12xf32, #tpu.memory_space<vmem>>, vector<1x12xf32>
      %424 = vector.broadcast %423 : vector<1x12xf32> to vector<6x12xf32>
      %425 = arith.addf %422, %424 : vector<6x12xf32>
      %c0_211 = arith.constant 0 : index
      %c0_212 = arith.constant 0 : index
      %c0_213 = arith.constant 0 : index
      %426 = vector.load %arg31[%c0_211, %c0_212, %c0_213] : memref<1x6x12xf32, #tpu.memory_space<vmem>>, vector<1x6x12xf32>
      %427 = vector.shape_cast %426 : vector<1x6x12xf32> to vector<6x12xf32>
      %428 = vector.shape_cast %425 : vector<6x12xf32> to vector<1x6x12xf32>
      tpu.vector_store %arg31[%c0_211, %c0_212, %c0_213], %428 {strides = array<i32>} : memref<1x6x12xf32, #tpu.memory_space<vmem>>, vector<1x6x12xf32>,
    } else {
    }
    return
  }
  func.func @transform_0(%arg0: i32, %arg1: i32) -> (i32, i32, i32) {
    %c0_i32 = arith.constant 0 : i32
    %c0_i32_0 = arith.constant 0 : i32
    %c0_i32_1 = arith.constant 0 : i32
    return %arg0, %c0_i32, %c0_i32_0 : i32, i32, i32
  }
  func.func @transform_1(%arg0: i32, %arg1: i32) -> (i32, i32, i32) {
    %c0_i32 = arith.constant 0 : i32
    %c0_i32_0 = arith.constant 0 : i32
    %c0_i32_1 = arith.constant 0 : i32
    return %arg0, %c0_i32, %c0_i32_0 : i32, i32, i32
  }
  func.func @transform_2(%arg0: i32, %arg1: i32) -> (i32, i32, i32) {
    %c0_i32 = arith.constant 0 : i32
    %c0_i32_0 = arith.constant 0 : i32
    %c0_i32_1 = arith.constant 0 : i32
    return %arg0, %c0_i32, %c0_i32_0 : i32, i32, i32
  }
  func.func @transform_3(%arg0: i32, %arg1: i32) -> (i32, i32) {
    %c0_i32 = arith.constant 0 : i32
    %c0_i32_0 = arith.constant 0 : i32
    %c0_i32_1 = arith.constant 0 : i32
    return %c0_i32, %c0_i32_0 : i32, i32
  }
  func.func @transform_4(%arg0: i32, %arg1: i32) -> (i32, i32) {
    %c0_i32 = arith.constant 0 : i32
    %c0_i32_0 = arith.constant 0 : i32
    %c0_i32_1 = arith.constant 0 : i32
    return %c0_i32, %c0_i32_0 : i32, i32
  }
  func.func @transform_5(%arg0: i32, %arg1: i32) -> (i32, i32) {
    %c0_i32 = arith.constant 0 : i32
    %c0_i32_0 = arith.constant 0 : i32
    %c0_i32_1 = arith.constant 0 : i32
    return %c0_i32, %c0_i32_0 : i32, i32
  }
  func.func @transform_6(%arg0: i32, %arg1: i32) -> (i32, i32) {
    %c0_i32 = arith.constant 0 : i32
    %c0_i32_0 = arith.constant 0 : i32
    %c0_i32_1 = arith.constant 0 : i32
    return %c0_i32, %c0_i32_0 : i32, i32
  }
  func.func @transform_7(%arg0: i32, %arg1: i32) -> (i32, i32) {
    %c0_i32 = arith.constant 0 : i32
    %c0_i32_0 = arith.constant 0 : i32
    %c0_i32_1 = arith.constant 0 : i32
    return %c0_i32, %c0_i32_0 : i32, i32
  }
  func.func @transform_8(%arg0: i32, %arg1: i32) -> (i32, i32) {
    %c0_i32 = arith.constant 0 : i32
    %c0_i32_0 = arith.constant 0 : i32
    %c0_i32_1 = arith.constant 0 : i32
    return %c0_i32, %c0_i32_0 : i32, i32
  }
  func.func @transform_9(%arg0: i32, %arg1: i32) -> (i32, i32) {
    %c0_i32 = arith.constant 0 : i32
    %c0_i32_0 = arith.constant 0 : i32
    %c0_i32_1 = arith.constant 0 : i32
    return %c0_i32, %c0_i32_0 : i32, i32
  }
  func.func @transform_10(%arg0: i32, %arg1: i32) -> (i32, i32) {
    %c0_i32 = arith.constant 0 : i32
    %c0_i32_0 = arith.constant 0 : i32
    %c0_i32_1 = arith.constant 0 : i32
    return %c0_i32, %c0_i32_0 : i32, i32
  }
  func.func @transform_11(%arg0: i32, %arg1: i32) -> (i32, i32, i32, i32) {
    %c0_i32 = arith.constant 0 : i32
    %c0_i32_0 = arith.constant 0 : i32
    %c0_i32_1 = arith.constant 0 : i32
    %c0_i32_2 = arith.constant 0 : i32
    return %arg1, %c0_i32, %c0_i32_0, %c0_i32_1 : i32, i32, i32, i32
  }
  func.func @transform_12(%arg0: i32, %arg1: i32) -> (i32, i32, i32, i32) {
    %c0_i32 = arith.constant 0 : i32
    %c0_i32_0 = arith.constant 0 : i32
    %c0_i32_1 = arith.constant 0 : i32
    %c0_i32_2 = arith.constant 0 : i32
    return %arg1, %c0_i32, %c0_i32_0, %c0_i32_1 : i32, i32, i32, i32
  }
  func.func @transform_13(%arg0: i32, %arg1: i32) -> (i32, i32, i32) {
    %c0_i32 = arith.constant 0 : i32
    %c0_i32_0 = arith.constant 0 : i32
    %c0_i32_1 = arith.constant 0 : i32
    return %arg1, %c0_i32, %c0_i32_0 : i32, i32, i32
  }
  func.func @transform_14(%arg0: i32, %arg1: i32) -> (i32, i32, i32) {
    %c0_i32 = arith.constant 0 : i32
    %c0_i32_0 = arith.constant 0 : i32
    %c0_i32_1 = arith.constant 0 : i32
    return %arg1, %c0_i32, %c0_i32_0 : i32, i32, i32
  }
  func.func @transform_15(%arg0: i32, %arg1: i32) -> (i32, i32, i32, i32) {
    %c0_i32 = arith.constant 0 : i32
    %c0_i32_0 = arith.constant 0 : i32
    %c0_i32_1 = arith.constant 0 : i32
    %c0_i32_2 = arith.constant 0 : i32
    return %arg1, %c0_i32, %c0_i32_0, %c0_i32_1 : i32, i32, i32, i32
  }
  func.func @transform_16(%arg0: i32, %arg1: i32) -> (i32, i32, i32, i32) {
    %c0_i32 = arith.constant 0 : i32
    %c0_i32_0 = arith.constant 0 : i32
    %c0_i32_1 = arith.constant 0 : i32
    %c0_i32_2 = arith.constant 0 : i32
    return %arg1, %c0_i32, %c0_i32_0, %c0_i32_1 : i32, i32, i32, i32
  }
  func.func @transform_17(%arg0: i32, %arg1: i32) -> (i32, i32, i32) {
    %c0_i32 = arith.constant 0 : i32
    %c0_i32_0 = arith.constant 0 : i32
    %c0_i32_1 = arith.constant 0 : i32
    return %arg1, %c0_i32, %c0_i32_0 : i32, i32, i32
  }
  func.func @transform_18(%arg0: i32, %arg1: i32) -> (i32, i32, i32) {
    %c0_i32 = arith.constant 0 : i32
    %c0_i32_0 = arith.constant 0 : i32
    %c0_i32_1 = arith.constant 0 : i32
    return %arg1, %c0_i32, %c0_i32_0 : i32, i32, i32
  }
  func.func @transform_19(%arg0: i32, %arg1: i32) -> (i32, i32, i32) {
    %c0_i32 = arith.constant 0 : i32
    %c0_i32_0 = arith.constant 0 : i32
    %c0_i32_1 = arith.constant 0 : i32
    return %arg1, %c0_i32, %c0_i32_0 : i32, i32, i32
  }
  func.func @transform_20(%arg0: i32, %arg1: i32) -> (i32, i32, i32) {
    %c0_i32 = arith.constant 0 : i32
    %c0_i32_0 = arith.constant 0 : i32
    %c0_i32_1 = arith.constant 0 : i32
    return %arg1, %c0_i32, %c0_i32_0 : i32, i32, i32
  }
  func.func @transform_21(%arg0: i32, %arg1: i32) -> (i32, i32, i32) {
    %c0_i32 = arith.constant 0 : i32
    %c0_i32_0 = arith.constant 0 : i32
    %c0_i32_1 = arith.constant 0 : i32
    return %arg1, %c0_i32, %c0_i32_0 : i32, i32, i32
  }
  func.func @transform_22(%arg0: i32, %arg1: i32) -> (i32, i32, i32) {
    %c0_i32 = arith.constant 0 : i32
    %c0_i32_0 = arith.constant 0 : i32
    %c0_i32_1 = arith.constant 0 : i32
    return %arg1, %c0_i32, %c0_i32_0 : i32, i32, i32
  }
  func.func @transform_23(%arg0: i32, %arg1: i32) -> (i32, i32, i32, i32) {
    %c0_i32 = arith.constant 0 : i32
    %c0_i32_0 = arith.constant 0 : i32
    %c0_i32_1 = arith.constant 0 : i32
    %c0_i32_2 = arith.constant 0 : i32
    return %arg1, %c0_i32, %c0_i32_0, %c0_i32_1 : i32, i32, i32, i32
  }
  func.func @transform_24(%arg0: i32, %arg1: i32) -> (i32, i32, i32, i32) {
    %c0_i32 = arith.constant 0 : i32
    %c0_i32_0 = arith.constant 0 : i32
    %c0_i32_1 = arith.constant 0 : i32
    %c0_i32_2 = arith.constant 0 : i32
    return %arg1, %c0_i32, %c0_i32_0, %c0_i32_1 : i32, i32, i32, i32
  }
  func.func @transform_25(%arg0: i32, %arg1: i32) -> (i32, i32) {
    %c0_i32 = arith.constant 0 : i32
    %c0_i32_0 = arith.constant 0 : i32
    %c0_i32_1 = arith.constant 0 : i32
    return %c0_i32, %c0_i32_0 : i32, i32
  }
  func.func @transform_26(%arg0: i32, %arg1: i32) -> (i32, i32) {
    %c0_i32 = arith.constant 0 : i32
    %c0_i32_0 = arith.constant 0 : i32
    %c0_i32_1 = arith.constant 0 : i32
    return %c0_i32, %c0_i32_0 : i32, i32
  }
  func.func @transform_27(%arg0: i32, %arg1: i32) -> (i32, i32) {
    %c0_i32 = arith.constant 0 : i32
    %c0_i32_0 = arith.constant 0 : i32
    %c0_i32_1 = arith.constant 0 : i32
    return %c0_i32, %c0_i32_0 : i32, i32
  }
  func.func @transform_28(%arg0: i32, %arg1: i32) -> (i32, i32) {
    %c0_i32 = arith.constant 0 : i32
    %c0_i32_0 = arith.constant 0 : i32
    %c0_i32_1 = arith.constant 0 : i32
    return %c0_i32, %c0_i32_0 : i32, i32
  }
  func.func @transform_29(%arg0: i32, %arg1: i32) -> (i32, i32, i32) {
    %c0_i32 = arith.constant 0 : i32
    %c0_i32_0 = arith.constant 0 : i32
    %c0_i32_1 = arith.constant 0 : i32
    return %arg0, %c0_i32, %c0_i32_0 : i32, i32, i32
  }
}

</mosaic_0001>

<llo_original>
// kernel: faceformer_forward.1
$region0: #{faceformer_forward.1}
  #allocation0 [shape = 'u32[]', space=smem, size = 0x4, offset = 0x4, fixed_abs, tag = 'smem constant byte address 0x4 - core index']
  #allocation1 [shape = 'u32[144,128]{1,0:T(1,128)}', space=vmem, size = 0x12000, scoped, tag = 'internal scratch']
  #allocation2 [shape = 'f32[6,64]{1,0:T(8,128)}', space=vmem, size = 0x1000, scoped, tag = 'scratch operand']
  #allocation3 [shape = 'f32[6,64]{1,0:T(8,128)}', space=vmem, size = 0x1000, scoped, tag = 'scratch operand']
  %s0 = inlined_call_operand.smem [shape: u32[30], index: -1, kind: input, shape index: {}]
  %s1 = sld [smem:[%s0]]
  %s2 = scalar_lea.smem %s0, 1
  %s3 = sld [smem:[%s2]]
  %s4 = scalar_lea.smem %s0, 2
  %s5 = sld [smem:[%s4]]
  %s6 = scalar_lea.smem %s0, 3
  %s7 = sld [smem:[%s6]]
  %s8 = scalar_lea.smem %s0, 4
  %s9 = sld [smem:[%s8]]
  %s10 = scalar_lea.smem %s0, 5
  %s11 = sld [smem:[%s10]]
  %s12 = scalar_lea.smem %s0, 6
  %s13 = sld [smem:[%s12]]
  %s14 = scalar_lea.smem %s0, 7
  %s15 = sld [smem:[%s14]]
  %s16 = scalar_lea.smem %s0, 8
  %s17 = sld [smem:[%s16]]
  %s18 = scalar_lea.smem %s0, 9
  %s19 = sld [smem:[%s18]]
  %s20 = scalar_lea.smem %s0, 10
  %s21 = sld [smem:[%s20]]
  %s22 = scalar_lea.smem %s0, 11
  %s23 = sld [smem:[%s22]]
  %s24 = scalar_lea.smem %s0, 12
  %s25 = sld [smem:[%s24]]
  %s26 = scalar_lea.smem %s0, 13
  %s27 = sld [smem:[%s26]]
  %s28 = scalar_lea.smem %s0, 14
  %s29 = sld [smem:[%s28]]
  %s30 = scalar_lea.smem %s0, 15
  %s31 = sld [smem:[%s30]]
  %s32 = scalar_lea.smem %s0, 16
  %s33 = sld [smem:[%s32]]
  %s34 = scalar_lea.smem %s0, 17
  %s35 = sld [smem:[%s34]]
  %s36 = scalar_lea.smem %s0, 18
  %s37 = sld [smem:[%s36]]
  %s38 = scalar_lea.smem %s0, 19
  %s39 = sld [smem:[%s38]]
  %s40 = scalar_lea.smem %s0, 20
  %s41 = sld [smem:[%s40]]
  %s42 = scalar_lea.smem %s0, 21
  %s43 = sld [smem:[%s42]]
  %s44 = scalar_lea.smem %s0, 22
  %s45 = sld [smem:[%s44]]
  %s46 = scalar_lea.smem %s0, 23
  %s47 = sld [smem:[%s46]]
  %s48 = scalar_lea.smem %s0, 24
  %s49 = sld [smem:[%s48]]
  %s50 = scalar_lea.smem %s0, 25
  %s51 = sld [smem:[%s50]]
  %s52 = scalar_lea.smem %s0, 26
  %s53 = sld [smem:[%s52]]
  %s54 = scalar_lea.smem %s0, 27
  %s55 = sld [smem:[%s54]]
  %s56 = scalar_lea.smem %s0, 28
  %s57 = sld [smem:[%s56]]
  %s58 = scalar_lea.smem %s0, 29
  %s59 = sld [smem:[%s58]]
  %s60 = sld [smem:[#allocation0]]
  $region217: #{faceformer_forward.1} parent=0
    _
  %s62 = ssub.s32 1, %s60
  %s63 = scalar_select 0, %s62, %s60
  $region1: #{faceformer_forward.1} parent=0
    #allocation4 [shape = 'u8[12288]{0}', space=vmem, size = 0x3000, scoped, tag = 'input window, operand 7, single buffered']
    #allocation5 [shape = 's32[2]{0}', space=sflag, size = 0x8, scoped, tag = 'scoped memory for faceformer_forward.1']
    #allocation6 [shape = 'u8[512]{0}', space=vmem, size = 0x400, scoped, tag = 'input window, operand 8, single buffered']
    #allocation7 [shape = 's32[1]{0}', space=sflag, size = 0x4, scoped, tag = 'scoped memory for faceformer_forward.1']
    #allocation8 [shape = 'u8[512]{0}', space=vmem, size = 0x400, scoped, tag = 'input window, operand 10, single buffered']
    #allocation9 [shape = 'u8[3072]{0}', space=vmem, size = 0xc00, scoped, tag = 'input window, operand 12']
    #allocation10 [shape = 's32[2]{0}', space=sflag, size = 0x8, scoped, tag = 'scoped memory for faceformer_forward.1']
    #allocation11 [shape = 'u8[1024]{0}', space=vmem, size = 0x400, scoped, tag = 'input window, operand 14']
    #allocation12 [shape = 'u8[3072]{0}', space=vmem, size = 0xc00, scoped, tag = 'input window, operand 16']
    #allocation13 [shape = 's32[2]{0}', space=sflag, size = 0x8, scoped, tag = 'scoped memory for faceformer_forward.1']
    #allocation14 [shape = 'u8[65536]{0}', space=vmem, size = 0x10000, scoped, tag = 'input window, operand 17']
    #allocation15 [shape = 'u8[1024]{0}', space=vmem, size = 0x400, scoped, tag = 'input window, operand 18']
    #allocation16 [shape = 's32[2]{0}', space=sflag, size = 0x8, scoped, tag = 'scoped memory for faceformer_forward.1']
    #allocation17 [shape = 'u8[131072]{0}', space=vmem, size = 0x20000, scoped, tag = 'input window, operand 19']
    #allocation18 [shape = 'u8[2048]{0}', space=vmem, size = 0x800, scoped, tag = 'input window, operand 20']
    #allocation19 [shape = 's32[2]{0}', space=sflag, size = 0x8, scoped, tag = 'scoped memory for faceformer_forward.1']
    #allocation20 [shape = 'u8[1024]{0}', space=vmem, size = 0x400, scoped, tag = 'input window, operand 22']
    #allocation21 [shape = 'u8[3072]{0}', space=vmem, size = 0xc00, scoped, tag = 'input window, operand 23']
    #allocation22 [shape = 's32[2]{0}', space=sflag, size = 0x8, scoped, tag = 'scoped memory for faceformer_forward.1']
    #allocation23 [shape = 'u8[3072]{0}', space=vmem, size = 0xc00, scoped, tag = 'input window, operand 24']
    #allocation24 [shape = 'u8[512]{0}', space=vmem, size = 0x400, scoped, tag = 'input window, operand 26, single buffered']
    #allocation25 [shape = 's32[1]{0}', space=sflag, size = 0x4, scoped, tag = 'scoped memory for faceformer_forward.1']
    #allocation26 [shape = 'u8[512]{0}', space=vmem, size = 0x400, scoped, tag = 'input window, operand 28, single buffered']
    %64 = vsyncpa [#allocation5], 0
    %65 = vsyncpa [#allocation7], 0
    %66 = vsyncpa [#allocation10], 0
    %s67 = scalar_lea.sflag [#allocation10], 1
    %68 = vsyncpa %s67, 0
    %69 = vsyncpa [#allocation13], 0
    %s70 = scalar_lea.sflag [#allocation13], 1
    %71 = vsyncpa %s70, 0
    %72 = vsyncpa [#allocation16], 0
    %s73 = scalar_lea.sflag [#allocation16], 1
    %74 = vsyncpa %s73, 0
    %75 = vsyncpa [#allocation19], 0
    %s76 = scalar_lea.sflag [#allocation19], 1
    %77 = vsyncpa %s76, 0
    %78 = vsyncpa [#allocation22], 0
    %s79 = scalar_lea.sflag [#allocation22], 1
    %80 = vsyncpa %s79, 0
    %81 = vsyncpa [#allocation25], 0
    loop: start=0, step=1, limit=6
    $region2: #{faceformer_forward.1} parent=1 // loop_pre_header
      _
    $region3: #{faceformer_forward.1} parent=1 // loop_header
      %s83 = sphi 0, %s87
      %p84 = scmp.ge.s32.totalorder %s83, 6
      %s90 = sphi 0, %s102
      %s91 = sphi 0, %s98
      %s92 = sphi 0, %s90
      %s93 = sphi 0, %s91
      %s94 = sphi 0, %s92
      %s95 = sphi 0, %s93
      %s105 = sphi 0, %s107
      %s108 = sphi 0, %s105
      %s109 = sphi 0, %s108
      %s125 = sphi 0, %s109
      %s131 = sphi 0, %s133
      %s134 = sphi 0, %s131
      %s135 = sphi 0, %s134
      %s151 = sphi 0, %s135
      %s157 = sphi 0, %s159
      %s160 = sphi 0, %s157
      %s161 = sphi 0, %s160
      %s177 = sphi 0, %s161
      %s181 = sphi 0, %s181
      %s183 = sphi 0, %s181
      %s184 = sphi 0, %s183
      %s198 = sphi 0, %s184
      %s202 = sphi 0, %s202
      %s204 = sphi 0, %s202
      %s205 = sphi 0, %s204
      %s219 = sphi 0, %s205
      %s223 = sphi 0, %s223
      %s225 = sphi 0, %s223
      %s226 = sphi 0, %s225
      %s240 = sphi 0, %s226
      %s244 = sphi 0, %s244
      %s246 = sphi 0, %s244
      %s247 = sphi 0, %s246
      %s261 = sphi 0, %s247
      %s265 = sphi 0, %s265
      %s267 = sphi 0, %s265
      %s268 = sphi 0, %s267
      %s282 = sphi 0, %s268
      %s286 = sphi 0, %s286
      %s288 = sphi 0, %s286
      %s289 = sphi 0, %s288
      %s303 = sphi 0, %s289
      %s307 = sphi 0, %s307
      %s309 = sphi 0, %s307
      %s310 = sphi 0, %s309
      %s324 = sphi 0, %s310
      %s328 = sphi 0, %s328
      %s330 = sphi 0, %s328
      %s331 = sphi 0, %s330
      %s345 = sphi 0, %s331
      %s351 = sphi 0, %s353
      %s354 = sphi 0, %s351
      %s355 = sphi 0, %s354
      %s371 = sphi 0, %s355
      %s377 = sphi 0, %s379
      %s380 = sphi 0, %s377
      %s381 = sphi 0, %s380
      %s397 = sphi 0, %s381
      %s403 = sphi 0, %s405
      %s406 = sphi 0, %s403
      %s407 = sphi 0, %s406
      %s423 = sphi 0, %s407
      %s429 = sphi 0, %s431
      %s432 = sphi 0, %s429
      %s433 = sphi 0, %s432
      %s449 = sphi 0, %s433
      %s455 = sphi 0, %s457
      %s458 = sphi 0, %s455
      %s459 = sphi 0, %s458
      %s475 = sphi 0, %s459
      %s481 = sphi 0, %s483
      %s484 = sphi 0, %s481
      %s485 = sphi 0, %s484
      %s501 = sphi 0, %s485
      %s507 = sphi 0, %s509
      %s510 = sphi 0, %s507
      %s511 = sphi 0, %s510
      %s527 = sphi 0, %s511
      %s533 = sphi 0, %s535
      %s536 = sphi 0, %s533
      %s537 = sphi 0, %s536
      %s553 = sphi 0, %s537
      %s559 = sphi 0, %s561
      %s562 = sphi 0, %s559
      %s563 = sphi 0, %s562
      %s579 = sphi 0, %s563
      %s585 = sphi 0, %s587
      %s588 = sphi 0, %s585
      %s589 = sphi 0, %s588
      %s605 = sphi 0, %s589
      %s611 = sphi 0, %s613
      %s614 = sphi 0, %s611
      %s615 = sphi 0, %s614
      %s631 = sphi 0, %s615
      %s637 = sphi 0, %s639
      %s640 = sphi 0, %s637
      %s641 = sphi 0, %s640
      %s657 = sphi 0, %s641
      %s663 = sphi 0, %s665
      %s666 = sphi 0, %s663
      %s667 = sphi 0, %s666
      %s683 = sphi 0, %s667
      %s689 = sphi 0, %s691
      %s692 = sphi 0, %s689
      %s693 = sphi 0, %s692
      %s709 = sphi 0, %s693
      %s713 = sphi 0, %s713
      %s715 = sphi 0, %s713
      %s716 = sphi 0, %s715
      %s730 = sphi 0, %s716
      %s734 = sphi 0, %s734
      %s736 = sphi 0, %s734
      %s737 = sphi 0, %s736
      %s751 = sphi 0, %s737
      %s755 = sphi 0, %s755
      %s757 = sphi 0, %s755
      %s758 = sphi 0, %s757
      %s772 = sphi 0, %s758
      %s776 = sphi 0, %s776
      %s778 = sphi 0, %s776
      %s779 = sphi 0, %s778
      %s793 = sphi 0, %s779
      %s799 = sphi 0, %s801
      %s802 = sphi 0, %s799
      %s803 = sphi 0, %s802
      %s819 = sphi 0, %s803
    $region4: #{faceformer_forward.1} parent=1 // loop_header_branch
      %86 = sbr.rel (%p84) target = $region8
    $region5: #{faceformer_forward.1} parent=1 // loop_body
      %s88 = ssub.s32 %s83, 1
      %s89 = ssub.s32 %s83, 2
      %s96 = sadd.s32 1, %s91
      %p97 = scmp.ge.s32.totalorder %s96, 2
      %s98 = scalar_select %p97, 0, %s96
      %s99 = sadd.s32 1, %s90
      %s100 = scalar_select %p97, %s99, %s90
      %p101 = scmp.ge.s32.totalorder %s100, 2
      %s102 = scalar_select %p101, 0, %s100
      %s103 = ssub.s32 %s90, %s102
      %p104 = scmp.eq.s32.totalorder %s103, 0
      %s106 = sadd.s32 %s105, 1
      %s107 = scalar_select %p104, %s105, %s106
      %p110 = pneg %p104
      %p111 = scmp.eq.s32.totalorder %s83, 3
      %p112 = por %p110, %p111
      %p113 = scmp.ne.s32.totalorder %s105, %s108
      %p114 = scmp.eq.s32.totalorder %s83, 0
      %p115 = por %p113, %p114
      %p116 = scmp.ne.s32.totalorder %s105, %s108
      %p117 = scmp.eq.s32.totalorder %s88, 3
      %p118 = por %p116, %p117
      %p119 = scmp.ne.s32.totalorder %s108, %s109
      %p120 = scmp.eq.s32.totalorder %s88, 0
      %p121 = por %p119, %p120
      %p122 = scmp.ne.s32.totalorder %s108, %s109
      %p123 = scmp.eq.s32.totalorder %s89, 3
      %p124 = por %p122, %p123
      %p126 = scmp.ne.s32.totalorder %s109, %s125
      %p127 = scmp.eq.s32.totalorder %s89, 0
      %p128 = por %p126, %p127
      %s129 = ssub.s32 %s90, %s102
      %p130 = scmp.eq.s32.totalorder %s129, 0
      %s132 = sadd.s32 %s131, 1
      %s133 = scalar_select %p130, %s131, %s132
      %p136 = pneg %p130
      %p137 = scmp.eq.s32.totalorder %s83, 3
      %p138 = por %p136, %p137
      %p139 = scmp.ne.s32.totalorder %s131, %s134
      %p140 = scmp.eq.s32.totalorder %s83, 0
      %p141 = por %p139, %p140
      %p142 = scmp.ne.s32.totalorder %s131, %s134
      %p143 = scmp.eq.s32.totalorder %s88, 3
      %p144 = por %p142, %p143
      %p145 = scmp.ne.s32.totalorder %s134, %s135
      %p146 = scmp.eq.s32.totalorder %s88, 0
      %p147 = por %p145, %p146
      %p148 = scmp.ne.s32.totalorder %s134, %s135
      %p149 = scmp.eq.s32.totalorder %s89, 3
      %p150 = por %p148, %p149
      %p152 = scmp.ne.s32.totalorder %s135, %s151
      %p153 = scmp.eq.s32.totalorder %s89, 0
      %p154 = por %p152, %p153
      %s155 = ssub.s32 %s90, %s102
      %p156 = scmp.eq.s32.totalorder %s155, 0
      %s158 = sadd.s32 %s157, 1
      %s159 = scalar_select %p156, %s157, %s158
      %p162 = pneg %p156
      %p163 = scmp.eq.s32.totalorder %s83, 3
      %p164 = por %p162, %p163
      %p165 = scmp.ne.s32.totalorder %s157, %s160
      %p166 = scmp.eq.s32.totalorder %s83, 0
      %p167 = por %p165, %p166
      %p168 = scmp.ne.s32.totalorder %s157, %s160
      %p169 = scmp.eq.s32.totalorder %s88, 3
      %p170 = por %p168, %p169
      %p171 = scmp.ne.s32.totalorder %s160, %s161
      %p172 = scmp.eq.s32.totalorder %s88, 0
      %p173 = por %p171, %p172
      %p174 = scmp.ne.s32.totalorder %s160, %s161
      %p175 = scmp.eq.s32.totalorder %s89, 3
      %p176 = por %p174, %p175
      %p178 = scmp.ne.s32.totalorder %s161, %s177
      %p179 = scmp.eq.s32.totalorder %s89, 0
      %p180 = por %p178, %p179
      %s182 = sadd.s32 %s181, 1
      %p185 = scmp.eq.s32.totalorder %s83, 3
      %p186 = scmp.ne.s32.totalorder %s181, %s183
      %p187 = scmp.eq.s32.totalorder %s83, 0
      %p188 = por %p186, %p187
      %p189 = scmp.ne.s32.totalorder %s181, %s183
      %p190 = scmp.eq.s32.totalorder %s88, 3
      %p191 = por %p189, %p190
      %p192 = scmp.ne.s32.totalorder %s183, %s184
      %p193 = scmp.eq.s32.totalorder %s88, 0
      %p194 = por %p192, %p193
      %p195 = scmp.ne.s32.totalorder %s183, %s184
      %p196 = scmp.eq.s32.totalorder %s89, 3
      %p197 = por %p195, %p196
      %p199 = scmp.ne.s32.totalorder %s184, %s198
      %p200 = scmp.eq.s32.totalorder %s89, 0
      %p201 = por %p199, %p200
      %s203 = sadd.s32 %s202, 1
      %p206 = scmp.eq.s32.totalorder %s83, 3
      %p207 = scmp.ne.s32.totalorder %s202, %s204
      %p208 = scmp.eq.s32.totalorder %s83, 0
      %p209 = por %p207, %p208
      %p210 = scmp.ne.s32.totalorder %s202, %s204
      %p211 = scmp.eq.s32.totalorder %s88, 3
      %p212 = por %p210, %p211
      %p213 = scmp.ne.s32.totalorder %s204, %s205
      %p214 = scmp.eq.s32.totalorder %s88, 0
      %p215 = por %p213, %p214
      %p216 = scmp.ne.s32.totalorder %s204, %s205
      %p217 = scmp.eq.s32.totalorder %s89, 3
      %p218 = por %p216, %p217
      %p220 = scmp.ne.s32.totalorder %s205, %s219
      %p221 = scmp.eq.s32.totalorder %s89, 0
      %p222 = por %p220, %p221
      %s224 = sadd.s32 %s223, 1
      %p227 = scmp.eq.s32.totalorder %s83, 3
      %p228 = scmp.ne.s32.totalorder %s223, %s225
      %p229 = scmp.eq.s32.totalorder %s83, 0
      %p230 = por %p228, %p229
      %p231 = scmp.ne.s32.totalorder %s223, %s225
      %p232 = scmp.eq.s32.totalorder %s88, 3
      %p233 = por %p231, %p232
      %p234 = scmp.ne.s32.totalorder %s225, %s226
      %p235 = scmp.eq.s32.totalorder %s88, 0
      %p236 = por %p234, %p235
      %p237 = scmp.ne.s32.totalorder %s225, %s226
      %p238 = scmp.eq.s32.totalorder %s89, 3
      %p239 = por %p237, %p238
      %p241 = scmp.ne.s32.totalorder %s226, %s240
      %p242 = scmp.eq.s32.totalorder %s89, 0
      %p243 = por %p241, %p242
      %s245 = sadd.s32 %s244, 1
      %p248 = scmp.eq.s32.totalorder %s83, 3
      %p249 = scmp.ne.s32.totalorder %s244, %s246
      %p250 = scmp.eq.s32.totalorder %s83, 0
      %p251 = por %p249, %p250
      %p252 = scmp.ne.s32.totalorder %s244, %s246
      %p253 = scmp.eq.s32.totalorder %s88, 3
      %p254 = por %p252, %p253
      %p255 = scmp.ne.s32.totalorder %s246, %s247
      %p256 = scmp.eq.s32.totalorder %s88, 0
      %p257 = por %p255, %p256
      %p258 = scmp.ne.s32.totalorder %s246, %s247
      %p259 = scmp.eq.s32.totalorder %s89, 3
      %p260 = por %p258, %p259
      %p262 = scmp.ne.s32.totalorder %s247, %s261
      %p263 = scmp.eq.s32.totalorder %s89, 0
      %p264 = por %p262, %p263
      %s266 = sadd.s32 %s265, 1
      %p269 = scmp.eq.s32.totalorder %s83, 3
      %p270 = scmp.ne.s32.totalorder %s265, %s267
      %p271 = scmp.eq.s32.totalorder %s83, 0
      %p272 = por %p270, %p271
      %p273 = scmp.ne.s32.totalorder %s265, %s267
      %p274 = scmp.eq.s32.totalorder %s88, 3
      %p275 = por %p273, %p274
      %p276 = scmp.ne.s32.totalorder %s267, %s268
      %p277 = scmp.eq.s32.totalorder %s88, 0
      %p278 = por %p276, %p277
      %p279 = scmp.ne.s32.totalorder %s267, %s268
      %p280 = scmp.eq.s32.totalorder %s89, 3
      %p281 = por %p279, %p280
      %p283 = scmp.ne.s32.totalorder %s268, %s282
      %p284 = scmp.eq.s32.totalorder %s89, 0
      %p285 = por %p283, %p284
      %s287 = sadd.s32 %s286, 1
      %p290 = scmp.eq.s32.totalorder %s83, 3
      %p291 = scmp.ne.s32.totalorder %s286, %s288
      %p292 = scmp.eq.s32.totalorder %s83, 0
      %p293 = por %p291, %p292
      %p294 = scmp.ne.s32.totalorder %s286, %s288
      %p295 = scmp.eq.s32.totalorder %s88, 3
      %p296 = por %p294, %p295
      %p297 = scmp.ne.s32.totalorder %s288, %s289
      %p298 = scmp.eq.s32.totalorder %s88, 0
      %p299 = por %p297, %p298
      %p300 = scmp.ne.s32.totalorder %s288, %s289
      %p301 = scmp.eq.s32.totalorder %s89, 3
      %p302 = por %p300, %p301
      %p304 = scmp.ne.s32.totalorder %s289, %s303
      %p305 = scmp.eq.s32.totalorder %s89, 0
      %p306 = por %p304, %p305
      %s308 = sadd.s32 %s307, 1
      %p311 = scmp.eq.s32.totalorder %s83, 3
      %p312 = scmp.ne.s32.totalorder %s307, %s309
      %p313 = scmp.eq.s32.totalorder %s83, 0
      %p314 = por %p312, %p313
      %p315 = scmp.ne.s32.totalorder %s307, %s309
      %p316 = scmp.eq.s32.totalorder %s88, 3
      %p317 = por %p315, %p316
      %p318 = scmp.ne.s32.totalorder %s309, %s310
      %p319 = scmp.eq.s32.totalorder %s88, 0
      %p320 = por %p318, %p319
      %p321 = scmp.ne.s32.totalorder %s309, %s310
      %p322 = scmp.eq.s32.totalorder %s89, 3
      %p323 = por %p321, %p322
      %p325 = scmp.ne.s32.totalorder %s310, %s324
      %p326 = scmp.eq.s32.totalorder %s89, 0
      %p327 = por %p325, %p326
      %s329 = sadd.s32 %s328, 1
      %p332 = scmp.eq.s32.totalorder %s83, 3
      %p333 = scmp.ne.s32.totalorder %s328, %s330
      %p334 = scmp.eq.s32.totalorder %s83, 0
      %p335 = por %p333, %p334
      %p336 = scmp.ne.s32.totalorder %s328, %s330
      %p337 = scmp.eq.s32.totalorder %s88, 3
      %p338 = por %p336, %p337
      %p339 = scmp.ne.s32.totalorder %s330, %s331
      %p340 = scmp.eq.s32.totalorder %s88, 0
      %p341 = por %p339, %p340
      %p342 = scmp.ne.s32.totalorder %s330, %s331
      %p343 = scmp.eq.s32.totalorder %s89, 3
      %p344 = por %p342, %p343
      %p346 = scmp.ne.s32.totalorder %s331, %s345
      %p347 = scmp.eq.s32.totalorder %s89, 0
      %p348 = por %p346, %p347
      %s349 = ssub.s32 %s91, %s98
      %p350 = scmp.eq.s32.totalorder %s349, 0
      %s352 = sadd.s32 %s351, 1
      %s353 = scalar_select %p350, %s351, %s352
      %p356 = pneg %p350
      %p357 = scmp.eq.s32.totalorder %s83, 3
      %p358 = por %p356, %p357
      %p359 = scmp.ne.s32.totalorder %s351, %s354
      %p360 = scmp.eq.s32.totalorder %s83, 0
      %p361 = por %p359, %p360
      %p362 = scmp.ne.s32.totalorder %s351, %s354
      %p363 = scmp.eq.s32.totalorder %s88, 3
      %p364 = por %p362, %p363
      %p365 = scmp.ne.s32.totalorder %s354, %s355
      %p366 = scmp.eq.s32.totalorder %s88, 0
      %p367 = por %p365, %p366
      %p368 = scmp.ne.s32.totalorder %s354, %s355
      %p369 = scmp.eq.s32.totalorder %s89, 3
      %p370 = por %p368, %p369
      %p372 = scmp.ne.s32.totalorder %s355, %s371
      %p373 = scmp.eq.s32.totalorder %s89, 0
      %p374 = por %p372, %p373
      %s375 = ssub.s32 %s91, %s98
      %p376 = scmp.eq.s32.totalorder %s375, 0
      %s378 = sadd.s32 %s377, 1
      %s379 = scalar_select %p376, %s377, %s378
      %p382 = pneg %p376
      %p383 = scmp.eq.s32.totalorder %s83, 3
      %p384 = por %p382, %p383
      %p385 = scmp.ne.s32.totalorder %s377, %s380
      %p386 = scmp.eq.s32.totalorder %s83, 0
      %p387 = por %p385, %p386
      %p388 = scmp.ne.s32.totalorder %s377, %s380
      %p389 = scmp.eq.s32.totalorder %s88, 3
      %p390 = por %p388, %p389
      %p391 = scmp.ne.s32.totalorder %s380, %s381
      %p392 = scmp.eq.s32.totalorder %s88, 0
      %p393 = por %p391, %p392
      %p394 = scmp.ne.s32.totalorder %s380, %s381
      %p395 = scmp.eq.s32.totalorder %s89, 3
      %p396 = por %p394, %p395
      %p398 = scmp.ne.s32.totalorder %s381, %s397
      %p399 = scmp.eq.s32.totalorder %s89, 0
      %p400 = por %p398, %p399
      %s401 = ssub.s32 %s91, %s98
      %p402 = scmp.eq.s32.totalorder %s401, 0
      %s404 = sadd.s32 %s403, 1
      %s405 = scalar_select %p402, %s403, %s404
      %p408 = pneg %p402
      %p409 = scmp.eq.s32.totalorder %s83, 3
      %p410 = por %p408, %p409
      %p411 = scmp.ne.s32.totalorder %s403, %s406
      %p412 = scmp.eq.s32.totalorder %s83, 0
      %p413 = por %p411, %p412
      %p414 = scmp.ne.s32.totalorder %s403, %s406
      %p415 = scmp.eq.s32.totalorder %s88, 3
      %p416 = por %p414, %p415
      %p417 = scmp.ne.s32.totalorder %s406, %s407
      %p418 = scmp.eq.s32.totalorder %s88, 0
      %p419 = por %p417, %p418
      %p420 = scmp.ne.s32.totalorder %s406, %s407
      %p421 = scmp.eq.s32.totalorder %s89, 3
      %p422 = por %p420, %p421
      %p424 = scmp.ne.s32.totalorder %s407, %s423
      %p425 = scmp.eq.s32.totalorder %s89, 0
      %p426 = por %p424, %p425
      %s427 = ssub.s32 %s91, %s98
      %p428 = scmp.eq.s32.totalorder %s427, 0
      %s430 = sadd.s32 %s429, 1
      %s431 = scalar_select %p428, %s429, %s430
      %p434 = pneg %p428
      %p435 = scmp.eq.s32.totalorder %s83, 3
      %p436 = por %p434, %p435
      %p437 = scmp.ne.s32.totalorder %s429, %s432
      %p438 = scmp.eq.s32.totalorder %s83, 0
      %p439 = por %p437, %p438
      %p440 = scmp.ne.s32.totalorder %s429, %s432
      %p441 = scmp.eq.s32.totalorder %s88, 3
      %p442 = por %p440, %p441
      %p443 = scmp.ne.s32.totalorder %s432, %s433
      %p444 = scmp.eq.s32.totalorder %s88, 0
      %p445 = por %p443, %p444
      %p446 = scmp.ne.s32.totalorder %s432, %s433
      %p447 = scmp.eq.s32.totalorder %s89, 3
      %p448 = por %p446, %p447
      %p450 = scmp.ne.s32.totalorder %s433, %s449
      %p451 = scmp.eq.s32.totalorder %s89, 0
      %p452 = por %p450, %p451
      %s453 = ssub.s32 %s91, %s98
      %p454 = scmp.eq.s32.totalorder %s453, 0
      %s456 = sadd.s32 %s455, 1
      %s457 = scalar_select %p454, %s455, %s456
      %p460 = pneg %p454
      %p461 = scmp.eq.s32.totalorder %s83, 3
      %p462 = por %p460, %p461
      %p463 = scmp.ne.s32.totalorder %s455, %s458
      %p464 = scmp.eq.s32.totalorder %s83, 0
      %p465 = por %p463, %p464
      %p466 = scmp.ne.s32.totalorder %s455, %s458
      %p467 = scmp.eq.s32.totalorder %s88, 3
      %p468 = por %p466, %p467
      %p469 = scmp.ne.s32.totalorder %s458, %s459
      %p470 = scmp.eq.s32.totalorder %s88, 0
      %p471 = por %p469, %p470
      %p472 = scmp.ne.s32.totalorder %s458, %s459
      %p473 = scmp.eq.s32.totalorder %s89, 3
      %p474 = por %p472, %p473
      %p476 = scmp.ne.s32.totalorder %s459, %s475
      %p477 = scmp.eq.s32.totalorder %s89, 0
      %p478 = por %p476, %p477
      %s479 = ssub.s32 %s91, %s98
      %p480 = scmp.eq.s32.totalorder %s479, 0
      %s482 = sadd.s32 %s481, 1
      %s483 = scalar_select %p480, %s481, %s482
      %p486 = pneg %p480
      %p487 = scmp.eq.s32.totalorder %s83, 3
      %p488 = por %p486, %p487
      %p489 = scmp.ne.s32.totalorder %s481, %s484
      %p490 = scmp.eq.s32.totalorder %s83, 0
      %p491 = por %p489, %p490
      %p492 = scmp.ne.s32.totalorder %s481, %s484
      %p493 = scmp.eq.s32.totalorder %s88, 3
      %p494 = por %p492, %p493
      %p495 = scmp.ne.s32.totalorder %s484, %s485
      %p496 = scmp.eq.s32.totalorder %s88, 0
      %p497 = por %p495, %p496
      %p498 = scmp.ne.s32.totalorder %s484, %s485
      %p499 = scmp.eq.s32.totalorder %s89, 3
      %p500 = por %p498, %p499
      %p502 = scmp.ne.s32.totalorder %s485, %s501
      %p503 = scmp.eq.s32.totalorder %s89, 0
      %p504 = por %p502, %p503
      %s505 = ssub.s32 %s91, %s98
      %p506 = scmp.eq.s32.totalorder %s505, 0
      %s508 = sadd.s32 %s507, 1
      %s509 = scalar_select %p506, %s507, %s508
      %p512 = pneg %p506
      %p513 = scmp.eq.s32.totalorder %s83, 3
      %p514 = por %p512, %p513
      %p515 = scmp.ne.s32.totalorder %s507, %s510
      %p516 = scmp.eq.s32.totalorder %s83, 0
      %p517 = por %p515, %p516
      %p518 = scmp.ne.s32.totalorder %s507, %s510
      %p519 = scmp.eq.s32.totalorder %s88, 3
      %p520 = por %p518, %p519
      %p521 = scmp.ne.s32.totalorder %s510, %s511
      %p522 = scmp.eq.s32.totalorder %s88, 0
      %p523 = por %p521, %p522
      %p524 = scmp.ne.s32.totalorder %s510, %s511
      %p525 = scmp.eq.s32.totalorder %s89, 3
      %p526 = por %p524, %p525
      %p528 = scmp.ne.s32.totalorder %s511, %s527
      %p529 = scmp.eq.s32.totalorder %s89, 0
      %p530 = por %p528, %p529
      %s531 = ssub.s32 %s91, %s98
      %p532 = scmp.eq.s32.totalorder %s531, 0
      %s534 = sadd.s32 %s533, 1
      %s535 = scalar_select %p532, %s533, %s534
      %p538 = pneg %p532
      %p539 = scmp.eq.s32.totalorder %s83, 3
      %p540 = por %p538, %p539
      %p541 = scmp.ne.s32.totalorder %s533, %s536
      %p542 = scmp.eq.s32.totalorder %s83, 0
      %p543 = por %p541, %p542
      %p544 = scmp.ne.s32.totalorder %s533, %s536
      %p545 = scmp.eq.s32.totalorder %s88, 3
      %p546 = por %p544, %p545
      %p547 = scmp.ne.s32.totalorder %s536, %s537
      %p548 = scmp.eq.s32.totalorder %s88, 0
      %p549 = por %p547, %p548
      %p550 = scmp.ne.s32.totalorder %s536, %s537
      %p551 = scmp.eq.s32.totalorder %s89, 3
      %p552 = por %p550, %p551
      %p554 = scmp.ne.s32.totalorder %s537, %s553
      %p555 = scmp.eq.s32.totalorder %s89, 0
      %p556 = por %p554, %p555
      %s557 = ssub.s32 %s91, %s98
      %p558 = scmp.eq.s32.totalorder %s557, 0
      %s560 = sadd.s32 %s559, 1
      %s561 = scalar_select %p558, %s559, %s560
      %p564 = pneg %p558
      %p565 = scmp.eq.s32.totalorder %s83, 3
      %p566 = por %p564, %p565
      %p567 = scmp.ne.s32.totalorder %s559, %s562
      %p568 = scmp.eq.s32.totalorder %s83, 0
      %p569 = por %p567, %p568
      %p570 = scmp.ne.s32.totalorder %s559, %s562
      %p571 = scmp.eq.s32.totalorder %s88, 3
      %p572 = por %p570, %p571
      %p573 = scmp.ne.s32.totalorder %s562, %s563
      %p574 = scmp.eq.s32.totalorder %s88, 0
      %p575 = por %p573, %p574
      %p576 = scmp.ne.s32.totalorder %s562, %s563
      %p577 = scmp.eq.s32.totalorder %s89, 3
      %p578 = por %p576, %p577
      %p580 = scmp.ne.s32.totalorder %s563, %s579
      %p581 = scmp.eq.s32.totalorder %s89, 0
      %p582 = por %p580, %p581
      %s583 = ssub.s32 %s91, %s98
      %p584 = scmp.eq.s32.totalorder %s583, 0
      %s586 = sadd.s32 %s585, 1
      %s587 = scalar_select %p584, %s585, %s586
      %p590 = pneg %p584
      %p591 = scmp.eq.s32.totalorder %s83, 3
      %p592 = por %p590, %p591
      %p593 = scmp.ne.s32.totalorder %s585, %s588
      %p594 = scmp.eq.s32.totalorder %s83, 0
      %p595 = por %p593, %p594
      %p596 = scmp.ne.s32.totalorder %s585, %s588
      %p597 = scmp.eq.s32.totalorder %s88, 3
      %p598 = por %p596, %p597
      %p599 = scmp.ne.s32.totalorder %s588, %s589
      %p600 = scmp.eq.s32.totalorder %s88, 0
      %p601 = por %p599, %p600
      %p602 = scmp.ne.s32.totalorder %s588, %s589
      %p603 = scmp.eq.s32.totalorder %s89, 3
      %p604 = por %p602, %p603
      %p606 = scmp.ne.s32.totalorder %s589, %s605
      %p607 = scmp.eq.s32.totalorder %s89, 0
      %p608 = por %p606, %p607
      %s609 = ssub.s32 %s91, %s98
      %p610 = scmp.eq.s32.totalorder %s609, 0
      %s612 = sadd.s32 %s611, 1
      %s613 = scalar_select %p610, %s611, %s612
      %p616 = pneg %p610
      %p617 = scmp.eq.s32.totalorder %s83, 3
      %p618 = por %p616, %p617
      %p619 = scmp.ne.s32.totalorder %s611, %s614
      %p620 = scmp.eq.s32.totalorder %s83, 0
      %p621 = por %p619, %p620
      %p622 = scmp.ne.s32.totalorder %s611, %s614
      %p623 = scmp.eq.s32.totalorder %s88, 3
      %p624 = por %p622, %p623
      %p625 = scmp.ne.s32.totalorder %s614, %s615
      %p626 = scmp.eq.s32.totalorder %s88, 0
      %p627 = por %p625, %p626
      %p628 = scmp.ne.s32.totalorder %s614, %s615
      %p629 = scmp.eq.s32.totalorder %s89, 3
      %p630 = por %p628, %p629
      %p632 = scmp.ne.s32.totalorder %s615, %s631
      %p633 = scmp.eq.s32.totalorder %s89, 0
      %p634 = por %p632, %p633
      %s635 = ssub.s32 %s91, %s98
      %p636 = scmp.eq.s32.totalorder %s635, 0
      %s638 = sadd.s32 %s637, 1
      %s639 = scalar_select %p636, %s637, %s638
      %p642 = pneg %p636
      %p643 = scmp.eq.s32.totalorder %s83, 3
      %p644 = por %p642, %p643
      %p645 = scmp.ne.s32.totalorder %s637, %s640
      %p646 = scmp.eq.s32.totalorder %s83, 0
      %p647 = por %p645, %p646
      %p648 = scmp.ne.s32.totalorder %s637, %s640
      %p649 = scmp.eq.s32.totalorder %s88, 3
      %p650 = por %p648, %p649
      %p651 = scmp.ne.s32.totalorder %s640, %s641
      %p652 = scmp.eq.s32.totalorder %s88, 0
      %p653 = por %p651, %p652
      %p654 = scmp.ne.s32.totalorder %s640, %s641
      %p655 = scmp.eq.s32.totalorder %s89, 3
      %p656 = por %p654, %p655
      %p658 = scmp.ne.s32.totalorder %s641, %s657
      %p659 = scmp.eq.s32.totalorder %s89, 0
      %p660 = por %p658, %p659
      %s661 = ssub.s32 %s91, %s98
      %p662 = scmp.eq.s32.totalorder %s661, 0
      %s664 = sadd.s32 %s663, 1
      %s665 = scalar_select %p662, %s663, %s664
      %p668 = pneg %p662
      %p669 = scmp.eq.s32.totalorder %s83, 3
      %p670 = por %p668, %p669
      %p671 = scmp.ne.s32.totalorder %s663, %s666
      %p672 = scmp.eq.s32.totalorder %s83, 0
      %p673 = por %p671, %p672
      %p674 = scmp.ne.s32.totalorder %s663, %s666
      %p675 = scmp.eq.s32.totalorder %s88, 3
      %p676 = por %p674, %p675
      %p677 = scmp.ne.s32.totalorder %s666, %s667
      %p678 = scmp.eq.s32.totalorder %s88, 0
      %p679 = por %p677, %p678
      %p680 = scmp.ne.s32.totalorder %s666, %s667
      %p681 = scmp.eq.s32.totalorder %s89, 3
      %p682 = por %p680, %p681
      %p684 = scmp.ne.s32.totalorder %s667, %s683
      %p685 = scmp.eq.s32.totalorder %s89, 0
      %p686 = por %p684, %p685
      %s687 = ssub.s32 %s91, %s98
      %p688 = scmp.eq.s32.totalorder %s687, 0
      %s690 = sadd.s32 %s689, 1
      %s691 = scalar_select %p688, %s689, %s690
      %p694 = pneg %p688
      %p695 = scmp.eq.s32.totalorder %s83, 3
      %p696 = por %p694, %p695
      %p697 = scmp.ne.s32.totalorder %s689, %s692
      %p698 = scmp.eq.s32.totalorder %s83, 0
      %p699 = por %p697, %p698
      %p700 = scmp.ne.s32.totalorder %s689, %s692
      %p701 = scmp.eq.s32.totalorder %s88, 3
      %p702 = por %p700, %p701
      %p703 = scmp.ne.s32.totalorder %s692, %s693
      %p704 = scmp.eq.s32.totalorder %s88, 0
      %p705 = por %p703, %p704
      %p706 = scmp.ne.s32.totalorder %s692, %s693
      %p707 = scmp.eq.s32.totalorder %s89, 3
      %p708 = por %p706, %p707
      %p710 = scmp.ne.s32.totalorder %s693, %s709
      %p711 = scmp.eq.s32.totalorder %s89, 0
      %p712 = por %p710, %p711
      %s714 = sadd.s32 %s713, 1
      %p717 = scmp.eq.s32.totalorder %s83, 3
      %p718 = scmp.ne.s32.totalorder %s713, %s715
      %p719 = scmp.eq.s32.totalorder %s83, 0
      %p720 = por %p718, %p719
      %p721 = scmp.ne.s32.totalorder %s713, %s715
      %p722 = scmp.eq.s32.totalorder %s88, 3
      %p723 = por %p721, %p722
      %p724 = scmp.ne.s32.totalorder %s715, %s716
      %p725 = scmp.eq.s32.totalorder %s88, 0
      %p726 = por %p724, %p725
      %p727 = scmp.ne.s32.totalorder %s715, %s716
      %p728 = scmp.eq.s32.totalorder %s89, 3
      %p729 = por %p727, %p728
      %p731 = scmp.ne.s32.totalorder %s716, %s730
      %p732 = scmp.eq.s32.totalorder %s89, 0
      %p733 = por %p731, %p732
      %s735 = sadd.s32 %s734, 1
      %p738 = scmp.eq.s32.totalorder %s83, 3
      %p739 = scmp.ne.s32.totalorder %s734, %s736
      %p740 = scmp.eq.s32.totalorder %s83, 0
      %p741 = por %p739, %p740
      %p742 = scmp.ne.s32.totalorder %s734, %s736
      %p743 = scmp.eq.s32.totalorder %s88, 3
      %p744 = por %p742, %p743
      %p745 = scmp.ne.s32.totalorder %s736, %s737
      %p746 = scmp.eq.s32.totalorder %s88, 0
      %p747 = por %p745, %p746
      %p748 = scmp.ne.s32.totalorder %s736, %s737
      %p749 = scmp.eq.s32.totalorder %s89, 3
      %p750 = por %p748, %p749
      %p752 = scmp.ne.s32.totalorder %s737, %s751
      %p753 = scmp.eq.s32.totalorder %s89, 0
      %p754 = por %p752, %p753
      %s756 = sadd.s32 %s755, 1
      %p759 = scmp.eq.s32.totalorder %s83, 3
      %p760 = scmp.ne.s32.totalorder %s755, %s757
      %p761 = scmp.eq.s32.totalorder %s83, 0
      %p762 = por %p760, %p761
      %p763 = scmp.ne.s32.totalorder %s755, %s757
      %p764 = scmp.eq.s32.totalorder %s88, 3
      %p765 = por %p763, %p764
      %p766 = scmp.ne.s32.totalorder %s757, %s758
      %p767 = scmp.eq.s32.totalorder %s88, 0
      %p768 = por %p766, %p767
      %p769 = scmp.ne.s32.totalorder %s757, %s758
      %p770 = scmp.eq.s32.totalorder %s89, 3
      %p771 = por %p769, %p770
      %p773 = scmp.ne.s32.totalorder %s758, %s772
      %p774 = scmp.eq.s32.totalorder %s89, 0
      %p775 = por %p773, %p774
      %s777 = sadd.s32 %s776, 1
      %p780 = scmp.eq.s32.totalorder %s83, 3
      %p781 = scmp.ne.s32.totalorder %s776, %s778
      %p782 = scmp.eq.s32.totalorder %s83, 0
      %p783 = por %p781, %p782
      %p784 = scmp.ne.s32.totalorder %s776, %s778
      %p785 = scmp.eq.s32.totalorder %s88, 3
      %p786 = por %p784, %p785
      %p787 = scmp.ne.s32.totalorder %s778, %s779
      %p788 = scmp.eq.s32.totalorder %s88, 0
      %p789 = por %p787, %p788
      %p790 = scmp.ne.s32.totalorder %s778, %s779
      %p791 = scmp.eq.s32.totalorder %s89, 3
      %p792 = por %p790, %p791
      %p794 = scmp.ne.s32.totalorder %s779, %s793
      %p795 = scmp.eq.s32.totalorder %s89, 0
      %p796 = por %p794, %p795
      %s797 = ssub.s32 %s90, %s102
      %p798 = scmp.eq.s32.totalorder %s797, 0
      %s800 = sadd.s32 %s799, 1
      %s801 = scalar_select %p798, %s799, %s800
      %p804 = pneg %p798
      %p805 = scmp.eq.s32.totalorder %s83, 3
      %p806 = por %p804, %p805
      %p807 = scmp.ne.s32.totalorder %s799, %s802
      %p808 = scmp.eq.s32.totalorder %s83, 0
      %p809 = por %p807, %p808
      %p810 = scmp.ne.s32.totalorder %s799, %s802
      %p811 = scmp.eq.s32.totalorder %s88, 3
      %p812 = por %p810, %p811
      %p813 = scmp.ne.s32.totalorder %s802, %s803
      %p814 = scmp.eq.s32.totalorder %s88, 0
      %p815 = por %p813, %p814
      %p816 = scmp.ne.s32.totalorder %s802, %s803
      %p817 = scmp.eq.s32.totalorder %s89, 3
      %p818 = por %p816, %p817
      %p820 = scmp.ne.s32.totalorder %s803, %s819
      %p821 = scmp.eq.s32.totalorder %s89, 0
      %p822 = por %p820, %p821
      %p823 = scmp.le.s32.totalorder 1, %s83
      %p824 = scmp.lt.s32.totalorder %s83, 5
      %p825 = pnand %p823, %p824
      %p826 = pneg %p825
      // Predicated region
      $region9: #{faceformer_forward.1} parent=5 // pred_check
        _
      $region10: #{faceformer_forward.1} parent=5 // pred_check_branch
        %828 = sbr.rel (%p825) target = $region12
      $region11: #{faceformer_forward.1} parent=5 // pred_region
        %s829 = ssub.s32 %s83, 1
        // Predicated region
        $region13: #{faceformer_forward.1} parent=11 // pred_check
          %p830 = pneg %p194
        $region14: #{faceformer_forward.1} parent=11 // pred_check_branch
          %832 = sbr.rel (%p830) target = $region16
        $region15: #{faceformer_forward.1} parent=11 // pred_region
          _
        $region16: #{faceformer_forward.1} parent=11 // pred_fallthru
          _
        // Predicated region
        $region17: #{faceformer_forward.1} parent=11 // pred_check
          %p833 = pneg %p215
        $region18: #{faceformer_forward.1} parent=11 // pred_check_branch
          %835 = sbr.rel (%p833) target = $region20
        $region19: #{faceformer_forward.1} parent=11 // pred_region
          _
        $region20: #{faceformer_forward.1} parent=11 // pred_fallthru
          _
        // Predicated region
        $region21: #{faceformer_forward.1} parent=11 // pred_check
          %p836 = pneg %p236
        $region22: #{faceformer_forward.1} parent=11 // pred_check_branch
          %838 = sbr.rel (%p836) target = $region24
        $region23: #{faceformer_forward.1} parent=11 // pred_region
          _
        $region24: #{faceformer_forward.1} parent=11 // pred_fallthru
          _
        // Predicated region
        $region25: #{faceformer_forward.1} parent=11 // pred_check
          %p839 = pneg %p257
        $region26: #{faceformer_forward.1} parent=11 // pred_check_branch
          %841 = sbr.rel (%p839) target = $region28
        $region27: #{faceformer_forward.1} parent=11 // pred_region
          _
        $region28: #{faceformer_forward.1} parent=11 // pred_fallthru
          _
        // Predicated region
        $region29: #{faceformer_forward.1} parent=11 // pred_check
          %p842 = pneg %p278
        $region30: #{faceformer_forward.1} parent=11 // pred_check_branch
          %844 = sbr.rel (%p842) target = $region32
        $region31: #{faceformer_forward.1} parent=11 // pred_region
          %s846 = ssub.s32 384, 384
          %847 = vsyncadd [#allocation5], %s846
          %s848 = sshll.u32 [#allocation4], 4
          %s849 = int_to_ptr.vmem [resolvable:$true] %s848
          %854 = dma.hbm_to_vmem [thread:$0]  %s15, 384, %s849, [#allocation5], 128, 128, 8
        $region32: #{faceformer_forward.1} parent=11 // pred_fallthru
          _
        // Predicated region
        $region33: #{faceformer_forward.1} parent=11 // pred_check
          %p855 = pneg %p299
        $region34: #{faceformer_forward.1} parent=11 // pred_check_branch
          %857 = sbr.rel (%p855) target = $region36
        $region35: #{faceformer_forward.1} parent=11 // pred_region
          %s859 = ssub.s32 16, 16
          %860 = vsyncadd [#allocation7], %s859
          %s862 = sshll.u32 [#allocation6], 4
          %s863 = int_to_ptr.vmem [resolvable:$true] %s862
          %865 = dma.hbm_to_vmem [thread:$0]  %s17, 16, %s863, [#allocation7]
        $region36: #{faceformer_forward.1} parent=11 // pred_fallthru
          _
        // Predicated region
        $region37: #{faceformer_forward.1} parent=11 // pred_check
          %p866 = pneg %p320
        $region38: #{faceformer_forward.1} parent=11 // pred_check_branch
          %868 = sbr.rel (%p866) target = $region40
        $region39: #{faceformer_forward.1} parent=11 // pred_region
          _
        $region40: #{faceformer_forward.1} parent=11 // pred_fallthru
          _
        // Predicated region
        $region41: #{faceformer_forward.1} parent=11 // pred_check
          %p869 = pneg %p341
        $region42: #{faceformer_forward.1} parent=11 // pred_check_branch
          %871 = sbr.rel (%p869) target = $region44
        $region43: #{faceformer_forward.1} parent=11 // pred_region
          %s873 = ssub.s32 16, 16
          %874 = vsyncadd [#allocation7], %s873
          %s876 = sshll.u32 [#allocation8], 4
          %s877 = int_to_ptr.vmem [resolvable:$true] %s876
          %879 = dma.hbm_to_vmem [thread:$0]  %s21, 16, %s877, [#allocation7]
        $region44: #{faceformer_forward.1} parent=11 // pred_fallthru
          _
        // Predicated region
        $region45: #{faceformer_forward.1} parent=11 // pred_check
          %p880 = pneg %p726
        $region46: #{faceformer_forward.1} parent=11 // pred_check_branch
          %882 = sbr.rel (%p880) target = $region48
        $region47: #{faceformer_forward.1} parent=11 // pred_region
          _
        $region48: #{faceformer_forward.1} parent=11 // pred_fallthru
          _
        // Predicated region
        $region49: #{faceformer_forward.1} parent=11 // pred_check
          %p883 = pneg %p747
        $region50: #{faceformer_forward.1} parent=11 // pred_check_branch
          %885 = sbr.rel (%p883) target = $region52
        $region51: #{faceformer_forward.1} parent=11 // pred_region
          %s887 = ssub.s32 16, 16
          %888 = vsyncadd [#allocation25], %s887
          %s890 = sshll.u32 [#allocation24], 4
          %s891 = int_to_ptr.vmem [resolvable:$true] %s890
          %893 = dma.hbm_to_vmem [thread:$0]  %s53, 16, %s891, [#allocation25]
        $region52: #{faceformer_forward.1} parent=11 // pred_fallthru
          _
        // Predicated region
        $region53: #{faceformer_forward.1} parent=11 // pred_check
          %p894 = pneg %p768
        $region54: #{faceformer_forward.1} parent=11 // pred_check_branch
          %896 = sbr.rel (%p894) target = $region56
        $region55: #{faceformer_forward.1} parent=11 // pred_region
          _
        $region56: #{faceformer_forward.1} parent=11 // pred_fallthru
          _
        // Predicated region
        $region57: #{faceformer_forward.1} parent=11 // pred_check
          %p897 = pneg %p789
        $region58: #{faceformer_forward.1} parent=11 // pred_check_branch
          %899 = sbr.rel (%p897) target = $region60
        $region59: #{faceformer_forward.1} parent=11 // pred_region
          %s901 = ssub.s32 16, 16
          %902 = vsyncadd [#allocation25], %s901
          %s904 = sshll.u32 [#allocation26], 4
          %s905 = int_to_ptr.vmem [resolvable:$true] %s904
          %907 = dma.hbm_to_vmem [thread:$0]  %s57, 16, %s905, [#allocation25]
        $region60: #{faceformer_forward.1} parent=11 // pred_fallthru
          _
      $region12: #{faceformer_forward.1} parent=5 // pred_fallthru
        _
      %p908 = scmp.lt.s32.totalorder %s83, 4
      // Predicated region
      $region61: #{faceformer_forward.1} parent=5 // pred_check
        %p909 = pneg %p908
      $region62: #{faceformer_forward.1} parent=5 // pred_check_branch
        %911 = sbr.rel (%p909) target = $region64
      $region63: #{faceformer_forward.1} parent=5 // pred_region
        // Predicated region
        $region65: #{faceformer_forward.1} parent=63 // pred_check
          %p912 = pneg %p115
        $region66: #{faceformer_forward.1} parent=63 // pred_check_branch
          %914 = sbr.rel (%p912) target = $region68
        $region67: #{faceformer_forward.1} parent=63 // pred_region
          %p915 = scmp.lt.s32.totalorder %s90, 1
          %s916 = scalar_select %p915, %s90, 1
          %s917 = smul.addr %s916, 8
          %s918 = scalar_lea.vmem %s1, %s917
        $region68: #{faceformer_forward.1} parent=63 // pred_fallthru
          _
        // Predicated region
        $region69: #{faceformer_forward.1} parent=63 // pred_check
          %p919 = pneg %p141
        $region70: #{faceformer_forward.1} parent=63 // pred_check_branch
          %921 = sbr.rel (%p919) target = $region72
        $region71: #{faceformer_forward.1} parent=63 // pred_region
          %p922 = scmp.lt.s32.totalorder %s90, 1
          %s923 = scalar_select %p922, %s90, 1
          %s924 = smul.addr %s923, 8
          %s925 = scalar_lea.vmem %s3, %s924
        $region72: #{faceformer_forward.1} parent=63 // pred_fallthru
          _
        // Predicated region
        $region73: #{faceformer_forward.1} parent=63 // pred_check
          %p926 = pneg %p167
        $region74: #{faceformer_forward.1} parent=63 // pred_check_branch
          %928 = sbr.rel (%p926) target = $region76
        $region75: #{faceformer_forward.1} parent=63 // pred_region
          %p929 = scmp.lt.s32.totalorder %s90, 1
          %s930 = scalar_select %p929, %s90, 1
          %s931 = scalar_lea.vmem %s5, %s930
        $region76: #{faceformer_forward.1} parent=63 // pred_fallthru
          _
        // Predicated region
        $region77: #{faceformer_forward.1} parent=63 // pred_check
          %p932 = pneg %p361
        $region78: #{faceformer_forward.1} parent=63 // pred_check_branch
          %934 = sbr.rel (%p932) target = $region80
        $region79: #{faceformer_forward.1} parent=63 // pred_region
          %p935 = scmp.lt.s32.totalorder %s91, 1
          %s936 = scalar_select %p935, %s91, 1
          %s937 = smul.addr %s936, 24
          %s938 = smul.addr %s937, 8
          %s939 = scalar_lea.vmem %s23, %s938
        $region80: #{faceformer_forward.1} parent=63 // pred_fallthru
          _
        // Predicated region
        $region81: #{faceformer_forward.1} parent=63 // pred_check
          %p940 = pneg %p387
        $region82: #{faceformer_forward.1} parent=63 // pred_check_branch
          %942 = sbr.rel (%p940) target = $region84
        $region83: #{faceformer_forward.1} parent=63 // pred_region
          %s943 = sand.u32 %s83, 1
          %s944 = scalar_lea.sflag [#allocation10], %s943
          %s945 = sand.u32 %s377, 1
          %s946 = smul.addr %s945, 3
          %s947 = scalar_lea.vmem [#allocation9], %s946
          %s949 = ssub.s32 48, 48
          %950 = vsyncadd %s944, %s949
          %s951 = smul.addr %s91, 3
          %s952 = smul.addr %s951, 16
          %s953 = scalar_lea.hbm %s25, %s952
          %s954 = sshll.u32 %s947, 4
          %s955 = int_to_ptr.vmem [resolvable:$true] %s954
          %960 = dma.hbm_to_vmem [thread:$0]  %s953, 48, %s955, %s944, 16, 16, 1
        $region84: #{faceformer_forward.1} parent=63 // pred_fallthru
          _
        // Predicated region
        $region85: #{faceformer_forward.1} parent=63 // pred_check
          %p961 = pneg %p413
        $region86: #{faceformer_forward.1} parent=63 // pred_check_branch
          %963 = sbr.rel (%p961) target = $region88
        $region87: #{faceformer_forward.1} parent=63 // pred_region
          %p964 = scmp.lt.s32.totalorder %s91, 1
          %s965 = scalar_select %p964, %s91, 1
          %s966 = smul.addr %s965, 8
          %s967 = smul.addr %s966, 8
          %s968 = scalar_lea.vmem %s27, %s967
        $region88: #{faceformer_forward.1} parent=63 // pred_fallthru
          _
        // Predicated region
        $region89: #{faceformer_forward.1} parent=63 // pred_check
          %p969 = pneg %p439
        $region90: #{faceformer_forward.1} parent=63 // pred_check_branch
          %971 = sbr.rel (%p969) target = $region92
        $region91: #{faceformer_forward.1} parent=63 // pred_region
          %s972 = sand.u32 %s83, 1
          %s973 = scalar_lea.sflag [#allocation10], %s972
          %s974 = sand.u32 %s429, 1
          %s975 = scalar_lea.vmem [#allocation11], %s974
          %s977 = ssub.s32 16, 16
          %978 = vsyncadd %s973, %s977
          %s979 = smul.addr %s91, 16
          %s980 = scalar_lea.hbm %s29, %s979
          %s982 = sshll.u32 %s975, 4
          %s983 = int_to_ptr.vmem [resolvable:$true] %s982
          %985 = dma.hbm_to_vmem [thread:$0]  %s980, 16, %s983, %s973
        $region92: #{faceformer_forward.1} parent=63 // pred_fallthru
          _
        // Predicated region
        $region93: #{faceformer_forward.1} parent=63 // pred_check
          %p986 = pneg %p465
        $region94: #{faceformer_forward.1} parent=63 // pred_check_branch
          %988 = sbr.rel (%p986) target = $region96
        $region95: #{faceformer_forward.1} parent=63 // pred_region
          %p989 = scmp.lt.s32.totalorder %s91, 1
          %s990 = scalar_select %p989, %s91, 1
          %s991 = smul.addr %s990, 24
          %s992 = smul.addr %s991, 8
          %s993 = scalar_lea.vmem %s31, %s992
        $region96: #{faceformer_forward.1} parent=63 // pred_fallthru
          _
        // Predicated region
        $region97: #{faceformer_forward.1} parent=63 // pred_check
          %p994 = pneg %p491
        $region98: #{faceformer_forward.1} parent=63 // pred_check_branch
          %996 = sbr.rel (%p994) target = $region100
        $region99: #{faceformer_forward.1} parent=63 // pred_region
          %s997 = sand.u32 %s83, 1
          %s998 = scalar_lea.sflag [#allocation13], %s997
          %s999 = sand.u32 %s481, 1
          %s1000 = smul.addr %s999, 3
          %s1001 = scalar_lea.vmem [#allocation12], %s1000
          %s1003 = ssub.s32 48, 48
          %1004 = vsyncadd %s998, %s1003
          %s1005 = smul.addr %s91, 3
          %s1006 = smul.addr %s1005, 16
          %s1007 = scalar_lea.hbm %s33, %s1006
          %s1008 = sshll.u32 %s1001, 4
          %s1009 = int_to_ptr.vmem [resolvable:$true] %s1008
          %1014 = dma.hbm_to_vmem [thread:$0]  %s1007, 48, %s1009, %s998, 16, 16, 1
        $region100: #{faceformer_forward.1} parent=63 // pred_fallthru
          _
        // Predicated region
        $region101: #{faceformer_forward.1} parent=63 // pred_check
          %p1015 = pneg %p517
        $region102: #{faceformer_forward.1} parent=63 // pred_check_branch
          %1017 = sbr.rel (%p1015) target = $region104
        $region103: #{faceformer_forward.1} parent=63 // pred_region
          %s1018 = sand.u32 %s83, 1
          %s1019 = scalar_lea.sflag [#allocation13], %s1018
          %s1020 = sand.u32 %s507, 1
          %s1021 = smul.addr %s1020, 64
          %s1022 = scalar_lea.vmem [#allocation14], %s1021
          %s1024 = ssub.s32 1024, 1024
          %1025 = vsyncadd %s1019, %s1024
          %s1026 = smul.addr %s91, 8
          %s1027 = smul.addr %s1026, 128
          %s1028 = scalar_lea.hbm %s35, %s1027
          %s1029 = sshll.u32 %s1022, 4
          %s1030 = int_to_ptr.vmem [resolvable:$true] %s1029
          %1035 = dma.hbm_to_vmem [thread:$0]  %s1028, 1024, %s1030, %s1019, 128, 128, 8
        $region104: #{faceformer_forward.1} parent=63 // pred_fallthru
          _
        // Predicated region
        $region105: #{faceformer_forward.1} parent=63 // pred_check
          %p1036 = pneg %p543
        $region106: #{faceformer_forward.1} parent=63 // pred_check_branch
          %1038 = sbr.rel (%p1036) target = $region108
        $region107: #{faceformer_forward.1} parent=63 // pred_region
          %s1039 = sand.u32 %s83, 1
          %s1040 = scalar_lea.sflag [#allocation16], %s1039
          %s1041 = sand.u32 %s533, 1
          %s1042 = scalar_lea.vmem [#allocation15], %s1041
          %s1044 = ssub.s32 16, 16
          %1045 = vsyncadd %s1040, %s1044
          %s1046 = smul.addr %s91, 16
          %s1047 = scalar_lea.hbm %s37, %s1046
          %s1049 = sshll.u32 %s1042, 4
          %s1050 = int_to_ptr.vmem [resolvable:$true] %s1049
          %1052 = dma.hbm_to_vmem [thread:$0]  %s1047, 16, %s1050, %s1040
        $region108: #{faceformer_forward.1} parent=63 // pred_fallthru
          _
        // Predicated region
        $region109: #{faceformer_forward.1} parent=63 // pred_check
          %p1053 = pneg %p569
        $region110: #{faceformer_forward.1} parent=63 // pred_check_branch
          %1055 = sbr.rel (%p1053) target = $region112
        $region111: #{faceformer_forward.1} parent=63 // pred_region
          %s1056 = sand.u32 %s83, 1
          %s1057 = scalar_lea.sflag [#allocation16], %s1056
          %s1058 = sand.u32 %s559, 1
          %s1059 = smul.addr %s1058, 128
          %s1060 = scalar_lea.vmem [#allocation17], %s1059
          %s1062 = ssub.s32 2048, 2048
          %1063 = vsyncadd %s1057, %s1062
          %s1064 = smul.addr %s91, 16
          %s1065 = smul.addr %s1064, 128
          %s1066 = scalar_lea.hbm %s39, %s1065
          %s1067 = sshll.u32 %s1060, 4
          %s1068 = int_to_ptr.vmem [resolvable:$true] %s1067
          %1073 = dma.hbm_to_vmem [thread:$0]  %s1066, 2048, %s1068, %s1057, 256, 256, 16
        $region112: #{faceformer_forward.1} parent=63 // pred_fallthru
          _
        // Predicated region
        $region113: #{faceformer_forward.1} parent=63 // pred_check
          %p1074 = pneg %p595
        $region114: #{faceformer_forward.1} parent=63 // pred_check_branch
          %1076 = sbr.rel (%p1074) target = $region116
        $region115: #{faceformer_forward.1} parent=63 // pred_region
          %s1077 = sand.u32 %s83, 1
          %s1078 = scalar_lea.sflag [#allocation19], %s1077
          %s1079 = sand.u32 %s585, 1
          %s1080 = smul.addr %s1079, 2
          %s1081 = scalar_lea.vmem [#allocation18], %s1080
          %s1083 = ssub.s32 32, 32
          %1084 = vsyncadd %s1078, %s1083
          %s1085 = smul.addr %s91, 2
          %s1086 = smul.addr %s1085, 16
          %s1087 = scalar_lea.hbm %s41, %s1086
          %s1089 = sshll.u32 %s1081, 4
          %s1090 = int_to_ptr.vmem [resolvable:$true] %s1089
          %1092 = dma.hbm_to_vmem [thread:$0]  %s1087, 32, %s1090, %s1078
        $region116: #{faceformer_forward.1} parent=63 // pred_fallthru
          _
        // Predicated region
        $region117: #{faceformer_forward.1} parent=63 // pred_check
          %p1093 = pneg %p621
        $region118: #{faceformer_forward.1} parent=63 // pred_check_branch
          %1095 = sbr.rel (%p1093) target = $region120
        $region119: #{faceformer_forward.1} parent=63 // pred_region
          %p1096 = scmp.lt.s32.totalorder %s91, 1
          %s1097 = scalar_select %p1096, %s91, 1
          %s1098 = smul.addr %s1097, 32
          %s1099 = smul.addr %s1098, 8
          %s1100 = scalar_lea.vmem %s43, %s1099
        $region120: #{faceformer_forward.1} parent=63 // pred_fallthru
          _
        // Predicated region
        $region121: #{faceformer_forward.1} parent=63 // pred_check
          %p1101 = pneg %p647
        $region122: #{faceformer_forward.1} parent=63 // pred_check_branch
          %1103 = sbr.rel (%p1101) target = $region124
        $region123: #{faceformer_forward.1} parent=63 // pred_region
          %s1104 = sand.u32 %s83, 1
          %s1105 = scalar_lea.sflag [#allocation19], %s1104
          %s1106 = sand.u32 %s637, 1
          %s1107 = scalar_lea.vmem [#allocation20], %s1106
          %s1109 = ssub.s32 16, 16
          %1110 = vsyncadd %s1105, %s1109
          %s1111 = smul.addr %s91, 16
          %s1112 = scalar_lea.hbm %s45, %s1111
          %s1114 = sshll.u32 %s1107, 4
          %s1115 = int_to_ptr.vmem [resolvable:$true] %s1114
          %1117 = dma.hbm_to_vmem [thread:$0]  %s1112, 16, %s1115, %s1105
        $region124: #{faceformer_forward.1} parent=63 // pred_fallthru
          _
        // Predicated region
        $region125: #{faceformer_forward.1} parent=63 // pred_check
          %p1118 = pneg %p673
        $region126: #{faceformer_forward.1} parent=63 // pred_check_branch
          %1120 = sbr.rel (%p1118) target = $region128
        $region127: #{faceformer_forward.1} parent=63 // pred_region
          %s1121 = sand.u32 %s83, 1
          %s1122 = scalar_lea.sflag [#allocation22], %s1121
          %s1123 = sand.u32 %s663, 1
          %s1124 = smul.addr %s1123, 3
          %s1125 = scalar_lea.vmem [#allocation21], %s1124
          %s1127 = ssub.s32 48, 48
          %1128 = vsyncadd %s1122, %s1127
          %s1129 = smul.addr %s91, 3
          %s1130 = smul.addr %s1129, 16
          %s1131 = scalar_lea.hbm %s47, %s1130
          %s1132 = sshll.u32 %s1125, 4
          %s1133 = int_to_ptr.vmem [resolvable:$true] %s1132
          %1138 = dma.hbm_to_vmem [thread:$0]  %s1131, 48, %s1133, %s1122, 16, 16, 1
        $region128: #{faceformer_forward.1} parent=63 // pred_fallthru
          _
        // Predicated region
        $region129: #{faceformer_forward.1} parent=63 // pred_check
          %p1139 = pneg %p699
        $region130: #{faceformer_forward.1} parent=63 // pred_check_branch
          %1141 = sbr.rel (%p1139) target = $region132
        $region131: #{faceformer_forward.1} parent=63 // pred_region
          %s1142 = sand.u32 %s83, 1
          %s1143 = scalar_lea.sflag [#allocation22], %s1142
          %s1144 = sand.u32 %s689, 1
          %s1145 = smul.addr %s1144, 3
          %s1146 = scalar_lea.vmem [#allocation23], %s1145
          %s1148 = ssub.s32 48, 48
          %1149 = vsyncadd %s1143, %s1148
          %s1150 = smul.addr %s91, 3
          %s1151 = smul.addr %s1150, 16
          %s1152 = scalar_lea.hbm %s49, %s1151
          %s1153 = sshll.u32 %s1146, 4
          %s1154 = int_to_ptr.vmem [resolvable:$true] %s1153
          %1159 = dma.hbm_to_vmem [thread:$0]  %s1152, 48, %s1154, %s1143, 16, 16, 1
        $region132: #{faceformer_forward.1} parent=63 // pred_fallthru
          _
      $region64: #{faceformer_forward.1} parent=5 // pred_fallthru
        _
      %p1160 = scmp.le.s32.totalorder 1, %s83
      %p1161 = scmp.lt.s32.totalorder %s83, 5
      %p1162 = pnand %p1160, %p1161
      %p1163 = pneg %p1162
      // Predicated region
      $region133: #{faceformer_forward.1} parent=5 // pred_check
        _
      $region134: #{faceformer_forward.1} parent=5 // pred_check_branch
        %1165 = sbr.rel (%p1162) target = $region136
      $region135: #{faceformer_forward.1} parent=5 // pred_region
        %s1166 = ssub.s32 %s83, 1
        // Predicated region
        $region137: #{faceformer_forward.1} parent=135 // pred_check
          %p1167 = pneg %p278
        $region138: #{faceformer_forward.1} parent=135 // pred_check_branch
          %1169 = sbr.rel (%p1167) target = $region140
        $region139: #{faceformer_forward.1} parent=135 // pred_region
          %1170 = dma.done [#allocation5], 384
        $region140: #{faceformer_forward.1} parent=135 // pred_fallthru
          _
        // Predicated region
        $region141: #{faceformer_forward.1} parent=135 // pred_check
          %p1171 = pneg %p299
        $region142: #{faceformer_forward.1} parent=135 // pred_check_branch
          %1173 = sbr.rel (%p1171) target = $region144
        $region143: #{faceformer_forward.1} parent=135 // pred_region
          %1174 = dma.done [#allocation7], 16
        $region144: #{faceformer_forward.1} parent=135 // pred_fallthru
          _
        // Predicated region
        $region145: #{faceformer_forward.1} parent=135 // pred_check
          %p1175 = pneg %p341
        $region146: #{faceformer_forward.1} parent=135 // pred_check_branch
          %1177 = sbr.rel (%p1175) target = $region148
        $region147: #{faceformer_forward.1} parent=135 // pred_region
          %1178 = dma.done [#allocation7], 16
        $region148: #{faceformer_forward.1} parent=135 // pred_fallthru
          _
        %s1179 = sand.u32 %s88, 1
        %s1180 = scalar_lea.sflag [#allocation10], %s1179
        %s1181 = sand.u32 %s380, 1
        %s1182 = smul.addr %s1181, 3
        %s1183 = scalar_lea.vmem [#allocation9], %s1182
        // Predicated region
        $region149: #{faceformer_forward.1} parent=135 // pred_check
          %p1184 = pneg %p393
        $region150: #{faceformer_forward.1} parent=135 // pred_check_branch
          %1186 = sbr.rel (%p1184) target = $region152
        $region151: #{faceformer_forward.1} parent=135 // pred_region
          %1187 = dma.done %s1180, 48
        $region152: #{faceformer_forward.1} parent=135 // pred_fallthru
          _
        %s1188 = sand.u32 %s88, 1
        %s1189 = scalar_lea.sflag [#allocation10], %s1188
        %s1190 = sand.u32 %s432, 1
        %s1191 = scalar_lea.vmem [#allocation11], %s1190
        // Predicated region
        $region153: #{faceformer_forward.1} parent=135 // pred_check
          %p1192 = pneg %p445
        $region154: #{faceformer_forward.1} parent=135 // pred_check_branch
          %1194 = sbr.rel (%p1192) target = $region156
        $region155: #{faceformer_forward.1} parent=135 // pred_region
          %1195 = dma.done %s1189, 16
        $region156: #{faceformer_forward.1} parent=135 // pred_fallthru
          _
        %s1196 = sand.u32 %s88, 1
        %s1197 = scalar_lea.sflag [#allocation13], %s1196
        %s1198 = sand.u32 %s484, 1
        %s1199 = smul.addr %s1198, 3
        %s1200 = scalar_lea.vmem [#allocation12], %s1199
        // Predicated region
        $region157: #{faceformer_forward.1} parent=135 // pred_check
          %p1201 = pneg %p497
        $region158: #{faceformer_forward.1} parent=135 // pred_check_branch
          %1203 = sbr.rel (%p1201) target = $region160
        $region159: #{faceformer_forward.1} parent=135 // pred_region
          %1204 = dma.done %s1197, 48
        $region160: #{faceformer_forward.1} parent=135 // pred_fallthru
          _
        %s1205 = sand.u32 %s88, 1
        %s1206 = scalar_lea.sflag [#allocation13], %s1205
        %s1207 = sand.u32 %s510, 1
        %s1208 = smul.addr %s1207, 64
        %s1209 = scalar_lea.vmem [#allocation14], %s1208
        // Predicated region
        $region161: #{faceformer_forward.1} parent=135 // pred_check
          %p1210 = pneg %p523
        $region162: #{faceformer_forward.1} parent=135 // pred_check_branch
          %1212 = sbr.rel (%p1210) target = $region164
        $region163: #{faceformer_forward.1} parent=135 // pred_region
          %1213 = dma.done %s1206, 1024
        $region164: #{faceformer_forward.1} parent=135 // pred_fallthru
          _
        %s1214 = sand.u32 %s88, 1
        %s1215 = scalar_lea.sflag [#allocation16], %s1214
        %s1216 = sand.u32 %s536, 1
        %s1217 = scalar_lea.vmem [#allocation15], %s1216
        // Predicated region
        $region165: #{faceformer_forward.1} parent=135 // pred_check
          %p1218 = pneg %p549
        $region166: #{faceformer_forward.1} parent=135 // pred_check_branch
          %1220 = sbr.rel (%p1218) target = $region168
        $region167: #{faceformer_forward.1} parent=135 // pred_region
          %1221 = dma.done %s1215, 16
        $region168: #{faceformer_forward.1} parent=135 // pred_fallthru
          _
        %s1222 = sand.u32 %s88, 1
        %s1223 = scalar_lea.sflag [#allocation16], %s1222
        %s1224 = sand.u32 %s562, 1
        %s1225 = smul.addr %s1224, 128
        %s1226 = scalar_lea.vmem [#allocation17], %s1225
        // Predicated region
        $region169: #{faceformer_forward.1} parent=135 // pred_check
          %p1227 = pneg %p575
        $region170: #{faceformer_forward.1} parent=135 // pred_check_branch
          %1229 = sbr.rel (%p1227) target = $region172
        $region171: #{faceformer_forward.1} parent=135 // pred_region
          %1230 = dma.done %s1223, 2048
        $region172: #{faceformer_forward.1} parent=135 // pred_fallthru
          _
        %s1231 = sand.u32 %s88, 1
        %s1232 = scalar_lea.sflag [#allocation19], %s1231
        %s1233 = sand.u32 %s588, 1
        %s1234 = smul.addr %s1233, 2
        %s1235 = scalar_lea.vmem [#allocation18], %s1234
        // Predicated region
        $region173: #{faceformer_forward.1} parent=135 // pred_check
          %p1236 = pneg %p601
        $region174: #{faceformer_forward.1} parent=135 // pred_check_branch
          %1238 = sbr.rel (%p1236) target = $region176
        $region175: #{faceformer_forward.1} parent=135 // pred_region
          %1239 = dma.done %s1232, 32
        $region176: #{faceformer_forward.1} parent=135 // pred_fallthru
          _
        %s1240 = sand.u32 %s88, 1
        %s1241 = scalar_lea.sflag [#allocation19], %s1240
        %s1242 = sand.u32 %s640, 1
        %s1243 = scalar_lea.vmem [#allocation20], %s1242
        // Predicated region
        $region177: #{faceformer_forward.1} parent=135 // pred_check
          %p1244 = pneg %p653
        $region178: #{faceformer_forward.1} parent=135 // pred_check_branch
          %1246 = sbr.rel (%p1244) target = $region180
        $region179: #{faceformer_forward.1} parent=135 // pred_region
          %1247 = dma.done %s1241, 16
        $region180: #{faceformer_forward.1} parent=135 // pred_fallthru
          _
        %s1248 = sand.u32 %s88, 1
        %s1249 = scalar_lea.sflag [#allocation22], %s1248
        %s1250 = sand.u32 %s666, 1
        %s1251 = smul.addr %s1250, 3
        %s1252 = scalar_lea.vmem [#allocation21], %s1251
        // Predicated region
        $region181: #{faceformer_forward.1} parent=135 // pred_check
          %p1253 = pneg %p679
        $region182: #{faceformer_forward.1} parent=135 // pred_check_branch
          %1255 = sbr.rel (%p1253) target = $region184
        $region183: #{faceformer_forward.1} parent=135 // pred_region
          %1256 = dma.done %s1249, 48
        $region184: #{faceformer_forward.1} parent=135 // pred_fallthru
          _
        %s1257 = sand.u32 %s88, 1
        %s1258 = scalar_lea.sflag [#allocation22], %s1257
        %s1259 = sand.u32 %s692, 1
        %s1260 = smul.addr %s1259, 3
        %s1261 = scalar_lea.vmem [#allocation23], %s1260
        // Predicated region
        $region185: #{faceformer_forward.1} parent=135 // pred_check
          %p1262 = pneg %p705
        $region186: #{faceformer_forward.1} parent=135 // pred_check_branch
          %1264 = sbr.rel (%p1262) target = $region188
        $region187: #{faceformer_forward.1} parent=135 // pred_region
          %1265 = dma.done %s1258, 48
        $region188: #{faceformer_forward.1} parent=135 // pred_fallthru
          _
        // Predicated region
        $region189: #{faceformer_forward.1} parent=135 // pred_check
          %p1266 = pneg %p747
        $region190: #{faceformer_forward.1} parent=135 // pred_check_branch
          %1268 = sbr.rel (%p1266) target = $region192
        $region191: #{faceformer_forward.1} parent=135 // pred_region
          %1269 = dma.done [#allocation25], 16
        $region192: #{faceformer_forward.1} parent=135 // pred_fallthru
          _
        // Predicated region
        $region193: #{faceformer_forward.1} parent=135 // pred_check
          %p1270 = pneg %p789
        $region194: #{faceformer_forward.1} parent=135 // pred_check_branch
          %1272 = sbr.rel (%p1270) target = $region196
        $region195: #{faceformer_forward.1} parent=135 // pred_region
          %1273 = dma.done [#allocation25], 16
        $region196: #{faceformer_forward.1} parent=135 // pred_fallthru
          _
        %p1274 = scmp.lt.s32.totalorder %s92, 1
        %s1275 = scalar_select %p1274, %s92, 1
        %s1276 = smul.addr %s1275, 8
        %s1277 = scalar_lea.vmem %s1, %s1276
        %p1278 = pneg %p121
        %p1279 = pneg %p118
        %p1280 = scmp.lt.s32.totalorder %s92, 1
        %s1281 = scalar_select %p1280, %s92, 1
        %s1282 = smul.addr %s1281, 8
        %s1283 = scalar_lea.vmem %s3, %s1282
        %p1284 = pneg %p147
        %p1285 = pneg %p144
        %p1286 = scmp.lt.s32.totalorder %s92, 1
        %s1287 = scalar_select %p1286, %s92, 1
        %s1288 = scalar_lea.vmem %s5, %s1287
        %p1289 = pneg %p173
        %p1290 = pneg %p170
        %p1291 = pneg %p194
        %p1292 = pneg %p191
        %p1293 = pneg %p215
        %p1294 = pneg %p212
        %p1295 = pneg %p236
        %p1296 = pneg %p233
        %p1297 = pneg %p257
        %p1298 = pneg %p254
        %p1299 = pneg %p278
        %p1300 = pneg %p275
        %p1301 = pneg %p299
        %p1302 = pneg %p296
        %p1303 = pneg %p320
        %p1304 = pneg %p317
        %p1305 = pneg %p341
        %p1306 = pneg %p338
        %p1307 = scmp.lt.s32.totalorder %s93, 1
        %s1308 = scalar_select %p1307, %s93, 1
        %s1309 = smul.addr %s1308, 24
        %s1310 = smul.addr %s1309, 8
        %s1311 = scalar_lea.vmem %s23, %s1310
        %p1312 = pneg %p367
        %p1313 = pneg %p364
        %s1314 = sand.u32 %s88, 1
        %s1315 = scalar_lea.sflag [#allocation10], %s1314
        %s1316 = sand.u32 %s380, 1
        %s1317 = smul.addr %s1316, 3
        %s1318 = scalar_lea.vmem [#allocation9], %s1317
        %p1319 = pneg %p393
        %p1320 = pneg %p390
        %p1321 = scmp.lt.s32.totalorder %s93, 1
        %s1322 = scalar_select %p1321, %s93, 1
        %s1323 = smul.addr %s1322, 8
        %s1324 = smul.addr %s1323, 8
        %s1325 = scalar_lea.vmem %s27, %s1324
        %p1326 = pneg %p419
        %p1327 = pneg %p416
        %s1328 = sand.u32 %s88, 1
        %s1329 = scalar_lea.sflag [#allocation10], %s1328
        %s1330 = sand.u32 %s432, 1
        %s1331 = scalar_lea.vmem [#allocation11], %s1330
        %p1332 = pneg %p445
        %p1333 = pneg %p442
        %p1334 = scmp.lt.s32.totalorder %s93, 1
        %s1335 = scalar_select %p1334, %s93, 1
        %s1336 = smul.addr %s1335, 24
        %s1337 = smul.addr %s1336, 8
        %s1338 = scalar_lea.vmem %s31, %s1337
        %p1339 = pneg %p471
        %p1340 = pneg %p468
        %s1341 = sand.u32 %s88, 1
        %s1342 = scalar_lea.sflag [#allocation13], %s1341
        %s1343 = sand.u32 %s484, 1
        %s1344 = smul.addr %s1343, 3
        %s1345 = scalar_lea.vmem [#allocation12], %s1344
        %p1346 = pneg %p497
        %p1347 = pneg %p494
        %s1348 = sand.u32 %s88, 1
        %s1349 = scalar_lea.sflag [#allocation13], %s1348
        %s1350 = sand.u32 %s510, 1
        %s1351 = smul.addr %s1350, 64
        %s1352 = scalar_lea.vmem [#allocation14], %s1351
        %p1353 = pneg %p523
        %p1354 = pneg %p520
        %s1355 = sand.u32 %s88, 1
        %s1356 = scalar_lea.sflag [#allocation16], %s1355
        %s1357 = sand.u32 %s536, 1
        %s1358 = scalar_lea.vmem [#allocation15], %s1357
        %p1359 = pneg %p549
        %p1360 = pneg %p546
        %s1361 = sand.u32 %s88, 1
        %s1362 = scalar_lea.sflag [#allocation16], %s1361
        %s1363 = sand.u32 %s562, 1
        %s1364 = smul.addr %s1363, 128
        %s1365 = scalar_lea.vmem [#allocation17], %s1364
        %p1366 = pneg %p575
        %p1367 = pneg %p572
        %s1368 = sand.u32 %s88, 1
        %s1369 = scalar_lea.sflag [#allocation19], %s1368
        %s1370 = sand.u32 %s588, 1
        %s1371 = smul.addr %s1370, 2
        %s1372 = scalar_lea.vmem [#allocation18], %s1371
        %p1373 = pneg %p601
        %p1374 = pneg %p598
        %p1375 = scmp.lt.s32.totalorder %s93, 1
        %s1376 = scalar_select %p1375, %s93, 1
        %s1377 = smul.addr %s1376, 32
        %s1378 = smul.addr %s1377, 8
        %s1379 = scalar_lea.vmem %s43, %s1378
        %p1380 = pneg %p627
        %p1381 = pneg %p624
        %s1382 = sand.u32 %s88, 1
        %s1383 = scalar_lea.sflag [#allocation19], %s1382
        %s1384 = sand.u32 %s640, 1
        %s1385 = scalar_lea.vmem [#allocation20], %s1384
        %p1386 = pneg %p653
        %p1387 = pneg %p650
        %s1388 = sand.u32 %s88, 1
        %s1389 = scalar_lea.sflag [#allocation22], %s1388
        %s1390 = sand.u32 %s666, 1
        %s1391 = smul.addr %s1390, 3
        %s1392 = scalar_lea.vmem [#allocation21], %s1391
        %p1393 = pneg %p679
        %p1394 = pneg %p676
        %s1395 = sand.u32 %s88, 1
        %s1396 = scalar_lea.sflag [#allocation22], %s1395
        %s1397 = sand.u32 %s692, 1
        %s1398 = smul.addr %s1397, 3
        %s1399 = scalar_lea.vmem [#allocation23], %s1398
        %p1400 = pneg %p705
        %p1401 = pneg %p702
        %p1402 = pneg %p726
        %p1403 = pneg %p723
        %p1404 = pneg %p747
        %p1405 = pneg %p744
        %p1406 = pneg %p768
        %p1407 = pneg %p765
        %p1408 = pneg %p789
        %p1409 = pneg %p786
        %p1410 = pneg %p815
        %p1411 = pneg %p812
        %p1412 = scmp.lt.s32.totalorder %s92, 1
        %s1413 = scalar_select %p1412, %s92, 1
        %s1414 = smul.addr %s1413, 8
        %s1415 = scalar_lea.vmem %s59, %s1414
        %p1416 = scmp.lt.s32.totalorder %s92, 1
        %s1417 = scalar_select %p1416, %s92, 1
        %s1418 = smul.addr %s1417, 8
        %s1419 = scalar_lea.vmem %s1, %s1418
        %p1420 = scmp.lt.s32.totalorder %s92, 1
        %s1421 = scalar_select %p1420, %s92, 1
        %s1422 = smul.addr %s1421, 8
        %s1423 = scalar_lea.vmem %s3, %s1422
        %p1424 = scmp.lt.s32.totalorder %s92, 1
        %s1425 = scalar_select %p1424, %s92, 1
        %s1426 = scalar_lea.vmem %s5, %s1425
        %p1427 = scmp.lt.s32.totalorder %s93, 1
        %s1428 = scalar_select %p1427, %s93, 1
        %s1429 = smul.addr %s1428, 24
        %s1430 = smul.addr %s1429, 8
        %s1431 = scalar_lea.vmem %s23, %s1430
        %p1432 = scmp.lt.s32.totalorder %s93, 1
        %s1433 = scalar_select %p1432, %s93, 1
        %s1434 = smul.addr %s1433, 8
        %s1435 = smul.addr %s1434, 8
        %s1436 = scalar_lea.vmem %s27, %s1435
        %p1437 = scmp.lt.s32.totalorder %s93, 1
        %s1438 = scalar_select %p1437, %s93, 1
        %s1439 = smul.addr %s1438, 24
        %s1440 = smul.addr %s1439, 8
        %s1441 = scalar_lea.vmem %s31, %s1440
        %p1442 = scmp.lt.s32.totalorder %s93, 1
        %s1443 = scalar_select %p1442, %s93, 1
        %s1444 = smul.addr %s1443, 32
        %s1445 = smul.addr %s1444, 8
        %s1446 = scalar_lea.vmem %s43, %s1445
        %p1447 = scmp.lt.s32.totalorder %s92, 1
        %s1448 = scalar_select %p1447, %s92, 1
        %s1449 = smul.addr %s1448, 8
        %s1450 = scalar_lea.vmem %s59, %s1449
        %p1451 = scmp.eq.s32.totalorder %s93, 0
        // Predicated region
        $region197: #{faceformer_forward.1} parent=135 // pred_check
          %p1452 = pneg %p1451
        $region198: #{faceformer_forward.1} parent=135 // pred_check_branch
          %1454 = sbr.rel (%p1452) target = $region200
        $region199: #{faceformer_forward.1} parent=135 // pred_region
          %v1455 = vld [vmem:[%s1419] sm:$0x3f]
          %v1456 = vld [vmem:[%s11] sm:$0xff]
          %v1457 = vld [vmem:[%s11 + $0x8] sm:$0xf]
          %v1458 = vld [vmem:[%s13] sm:$0x1]
          %v1460 = vlaneseq
          %v1461 = vshrl.u32 %v1460, 7
          %v1462 = vsub.s32 0, %v1461
          %v1463 = vrot.slane %v1458, %v1462
          %vm1465 = vcmask 97280
          %v1467 = vsel %vm1465, %v1455, 0
          %vm1469 = vcmask 1043456
          %v1471 = vsel %vm1469, %v1457, 0
          %1473 = vmatprep.subr.mxu0 0.0
          %1474 = vmatpush1.msra.mxu0 %v1456
          %1475 = vmatprep.subr.mxu0 0.0
          %1476 = vmatpush1.msra.mxu0 %v1471
          %1477 = vmatprep.subr.mxu0 0.0
          %1478 = vmatpush1.msra.mxu0 0.0
          %1479 = vmatprep.subr.mxu0 0.0
          %1480 = vmatpush1.msra.mxu0 0.0
          %1481 = vmatprep.subr.mxu0 0.0
          %1482 = vmatpush1.msra.mxu0 0.0
          %1483 = vmatprep.subr.mxu0 0.0
          %1484 = vmatpush1.msra.mxu0 0.0
          %1485 = vmatprep.subr.mxu0 0.0
          %1486 = vmatpush1.msra.mxu0 0.0
          %1487 = vmatprep.subr.mxu0 0.0
          %1488 = vmatpush1.msra.mxu0 0.0
          %1489 = vmatprep.subr.mxu0 0.0
          %1490 = vmatpush1.msra.mxu0 0.0
          %1491 = vmatprep.subr.mxu0 0.0
          %1492 = vmatpush1.msra.mxu0 0.0
          %1493 = vmatprep.subr.mxu0 0.0
          %1494 = vmatpush1.msra.mxu0 0.0
          %1495 = vmatprep.subr.mxu0 0.0
          %1496 = vmatpush1.msra.mxu0 0.0
          %1497 = vmatprep.subr.mxu0 0.0
          %1498 = vmatpush1.msra.mxu0 0.0
          %1499 = vmatprep.subr.mxu0 0.0
          %1500 = vmatpush1.msra.mxu0 0.0
          %1501 = vmatprep.subr.mxu0 0.0
          %1502 = vmatpush1.msra.mxu0 0.0
          %1503 = vmatprep.subr.mxu0 0.0
          %1504 = vmatpush1.msra.mxu0 0.0
          %1505 = vmatprep.subr.mxu0 0.0
          %1506 = vmatpush1.msra.mxu0 0.0
          %1507 = vmatprep.subr.mxu0 0.0
          %1508 = vmatpush1.msra.mxu0 0.0
          %1509 = vmatprep.subr.mxu0 0.0
          %1510 = vmatpush1.msra.mxu0 0.0
          %1511 = vmatprep.subr.mxu0 0.0
          %1512 = vmatpush1.msra.mxu0 0.0
          %1513 = vmatprep.subr.mxu0 0.0
          %1514 = vmatpush1.msra.mxu0 0.0
          %1515 = vmatprep.subr.mxu0 0.0
          %1516 = vmatpush1.msra.mxu0 0.0
          %1517 = vmatprep.subr.mxu0 0.0
          %1518 = vmatpush1.msra.mxu0 0.0
          %1519 = vmatprep.subr.mxu0 0.0
          %1520 = vmatpush1.msra.mxu0 0.0
          %1521 = vmatprep.subr.mxu0 0.0
          %1522 = vmatpush1.msra.mxu0 0.0
          %1523 = vmatprep.subr.mxu0 0.0
          %1524 = vmatpush1.msra.mxu0 0.0
          %1525 = vmatprep.subr.mxu0 0.0
          %1526 = vmatpush1.msra.mxu0 0.0
          %1527 = vmatprep.subr.mxu0 0.0
          %1528 = vmatpush1.msra.mxu0 0.0
          %1529 = vmatprep.subr.mxu0 0.0
          %1530 = vmatpush1.msra.mxu0 0.0
          %1531 = vmatprep.subr.mxu0 0.0
          %1532 = vmatpush1.msra.mxu0 0.0
          %1533 = vmatprep.subr.mxu0 0.0
          %1534 = vmatpush1.msra.mxu0 0.0
          %1535 = vmatprep.subr.mxu0 0.0
          %1536 = vmatpush1.msra.mxu0 0.0
          %1537 = vmatprep.mubr.f32.mxu0 0.0
          %1538 = vmatmul.mubr.f32.gmra.mrb[0].mxu0 %v1467
          %v1539 = vpop.f32.mrb[0].mxu0
          %v1540 = vadd.f32 %v1463, %v1539
          %v1541 = vpop.f32.mrb[0].mxu0
          %1542 = vdwg.mxu0
          %v1543 = vld [vmem:[%s1426] sm:$0x1]
          %v1544 = vld [vmem:[%s19] sm:$0xff]
          %v1545 = vld [vmem:[%s19 + $0x8] sm:$0xff]
          %v1546 = vld [vmem:[%s19 + $0x10] sm:$0xff]
          %v1547 = vld [vmem:[%s19 + $0x18] sm:$0xff]
          %v1548 = vld [vmem:[%s19 + $0x20] sm:$0xff]
          %v1549 = vld [vmem:[%s19 + $0x28] sm:$0xff]
          %v1550 = vld [vmem:[%s19 + $0x30] sm:$0xff]
          %v1551 = vld [vmem:[%s19 + $0x38] sm:$0x7f]
          %v1552 = vld [vmem:[#allocation8] sm:$0x1]
          %vm1553 = vcmask 515072
          %v1555 = vsel %vm1553, %v1543, 0
          %vm1557 = vcmask 1046528
          %v1559 = vsel %vm1557, %v1551, 0
          %1561 = vmatprep.subr.mxu0 0.0
          %1562 = vmatpush1.msra.mxu0 %v1544
          %1563 = vmatprep.subr.mxu0 0.0
          %1564 = vmatpush1.msra.mxu0 %v1545
          %1565 = vmatprep.subr.mxu0 0.0
          %1566 = vmatpush1.msra.mxu0 %v1546
          %1567 = vmatprep.subr.mxu0 0.0
          %1568 = vmatpush1.msra.mxu0 %v1547
          %1569 = vmatprep.subr.mxu0 0.0
          %1570 = vmatpush1.msra.mxu0 %v1548
          %1571 = vmatprep.subr.mxu0 0.0
          %1572 = vmatpush1.msra.mxu0 %v1549
          %1573 = vmatprep.subr.mxu0 0.0
          %1574 = vmatpush1.msra.mxu0 %v1550
          %1575 = vmatprep.subr.mxu0 0.0
          %1576 = vmatpush1.msra.mxu0 %v1559
          %1577 = vmatprep.subr.mxu0 0.0
          %1578 = vmatpush1.msra.mxu0 0.0
          %1579 = vmatprep.subr.mxu0 0.0
          %1580 = vmatpush1.msra.mxu0 0.0
          %1581 = vmatprep.subr.mxu0 0.0
          %1582 = vmatpush1.msra.mxu0 0.0
          %1583 = vmatprep.subr.mxu0 0.0
          %1584 = vmatpush1.msra.mxu0 0.0
          %1585 = vmatprep.subr.mxu0 0.0
          %1586 = vmatpush1.msra.mxu0 0.0
          %1587 = vmatprep.subr.mxu0 0.0
          %1588 = vmatpush1.msra.mxu0 0.0
          %1589 = vmatprep.subr.mxu0 0.0
          %1590 = vmatpush1.msra.mxu0 0.0
          %1591 = vmatprep.subr.mxu0 0.0
          %1592 = vmatpush1.msra.mxu0 0.0
          %1593 = vmatprep.subr.mxu0 0.0
          %1594 = vmatpush1.msra.mxu0 0.0
          %1595 = vmatprep.subr.mxu0 0.0
          %1596 = vmatpush1.msra.mxu0 0.0
          %1597 = vmatprep.subr.mxu0 0.0
          %1598 = vmatpush1.msra.mxu0 0.0
          %1599 = vmatprep.subr.mxu0 0.0
          %1600 = vmatpush1.msra.mxu0 0.0
          %1601 = vmatprep.subr.mxu0 0.0
          %1602 = vmatpush1.msra.mxu0 0.0
          %1603 = vmatprep.subr.mxu0 0.0
          %1604 = vmatpush1.msra.mxu0 0.0
          %1605 = vmatprep.subr.mxu0 0.0
          %1606 = vmatpush1.msra.mxu0 0.0
          %1607 = vmatprep.subr.mxu0 0.0
          %1608 = vmatpush1.msra.mxu0 0.0
          %1609 = vmatprep.subr.mxu0 0.0
          %1610 = vmatpush1.msra.mxu0 0.0
          %1611 = vmatprep.subr.mxu0 0.0
          %1612 = vmatpush1.msra.mxu0 0.0
          %1613 = vmatprep.subr.mxu0 0.0
          %1614 = vmatpush1.msra.mxu0 0.0
          %1615 = vmatprep.subr.mxu0 0.0
          %1616 = vmatpush1.msra.mxu0 0.0
          %1617 = vmatprep.subr.mxu0 0.0
          %1618 = vmatpush1.msra.mxu0 0.0
          %1619 = vmatprep.subr.mxu0 0.0
          %1620 = vmatpush1.msra.mxu0 0.0
          %1621 = vmatprep.subr.mxu0 0.0
          %1622 = vmatpush1.msra.mxu0 0.0
          %1623 = vmatprep.subr.mxu0 0.0
          %1624 = vmatpush1.msra.mxu0 0.0
          %1625 = vmatprep.mubr.f32.mxu0 0.0
          %1626 = vmatmul.mubr.f32.gmra.mrb[0].mxu0 %v1555
          %v1627 = vpop.f32.mrb[0].mxu0
          %v1628 = vadd.f32 %v1552, %v1627
          %v1629 = vpop.f32.mrb[0].mxu0
          %1630 = vdwg.mxu0
          %v1631 = vlaneseq
          %v1632 = vshrl.u32 %v1631, 7
          %vm1633 = vcmp.eq.s32.totalorder %v1632, 0
          %v1634 = vsel %vm1633, 1, 0
          %v1635 = vcvt.s32.f32 %v1634
          %v1636 = vlaneseq
          %v1637 = vshrl.u32 %v1636, 7
          %v1638 = vsub.s32 0, %v1637
          %v1639 = vrot.slane %v1628, %v1638
          %v1640 = vmul.f32 %v1639, %v1635
          %v1641 = vsub.f32 1.0, %v1635
          %v1642 = vmul.f32 %v1540, %v1641
          %v1643 = vadd.f32 %v1640, %v1642
          %v1644 = vld [vmem:[%s7] sm:$0x1]
          %v1646 = vlaneseq
          %v1647 = vshrl.u32 %v1646, 7
          %v1648 = vsub.s32 0, %v1647
          %v1649 = vrot.slane %v1644, %v1648
          %v1651 = vadd.f32 %v1643, %v1649
          %vm1652 = vcmask 521216
          %1653 = vst.msk [vmem:[#allocation2] sm:$0x3f] %vm1652, %v1651
          %v1654 = vld [vmem:[%s1423] sm:$0x3f]
          %v1655 = vld [vmem:[#allocation4] sm:$0xff]
          %v1656 = vld [vmem:[#allocation4 + $0x8] sm:$0xff]
          %v1657 = vld [vmem:[#allocation4 + $0x10] sm:$0xf]
          %v1658 = vld [vmem:[#allocation6] sm:$0x1]
          %v1660 = vlaneseq
          %v1661 = vshrl.u32 %v1660, 7
          %v1662 = vsub.s32 0, %v1661
          %v1663 = vrot.slane %v1658, %v1662
          %vm1665 = vcmask 162816
          %v1667 = vsel %vm1665, %v1654, 0
          %v1670 = vsel %vm1469, %v1657, 0
          %1672 = vmatprep.subr.mxu0 0.0
          %1673 = vmatpush1.msra.mxu0 %v1655
          %1674 = vmatprep.subr.mxu0 0.0
          %1675 = vmatpush1.msra.mxu0 %v1656
          %1676 = vmatprep.subr.mxu0 0.0
          %1677 = vmatpush1.msra.mxu0 %v1670
          %1678 = vmatprep.subr.mxu0 0.0
          %1679 = vmatpush1.msra.mxu0 0.0
          %1680 = vmatprep.subr.mxu0 0.0
          %1681 = vmatpush1.msra.mxu0 0.0
          %1682 = vmatprep.subr.mxu0 0.0
          %1683 = vmatpush1.msra.mxu0 0.0
          %1684 = vmatprep.subr.mxu0 0.0
          %1685 = vmatpush1.msra.mxu0 0.0
          %1686 = vmatprep.subr.mxu0 0.0
          %1687 = vmatpush1.msra.mxu0 0.0
          %1688 = vmatprep.subr.mxu0 0.0
          %1689 = vmatpush1.msra.mxu0 0.0
          %1690 = vmatprep.subr.mxu0 0.0
          %1691 = vmatpush1.msra.mxu0 0.0
          %1692 = vmatprep.subr.mxu0 0.0
          %1693 = vmatpush1.msra.mxu0 0.0
          %1694 = vmatprep.subr.mxu0 0.0
          %1695 = vmatpush1.msra.mxu0 0.0
          %1696 = vmatprep.subr.mxu0 0.0
          %1697 = vmatpush1.msra.mxu0 0.0
          %1698 = vmatprep.subr.mxu0 0.0
          %1699 = vmatpush1.msra.mxu0 0.0
          %1700 = vmatprep.subr.mxu0 0.0
          %1701 = vmatpush1.msra.mxu0 0.0
          %1702 = vmatprep.subr.mxu0 0.0
          %1703 = vmatpush1.msra.mxu0 0.0
          %1704 = vmatprep.subr.mxu0 0.0
          %1705 = vmatpush1.msra.mxu0 0.0
          %1706 = vmatprep.subr.mxu0 0.0
          %1707 = vmatpush1.msra.mxu0 0.0
          %1708 = vmatprep.subr.mxu0 0.0
          %1709 = vmatpush1.msra.mxu0 0.0
          %1710 = vmatprep.subr.mxu0 0.0
          %1711 = vmatpush1.msra.mxu0 0.0
          %1712 = vmatprep.subr.mxu0 0.0
          %1713 = vmatpush1.msra.mxu0 0.0
          %1714 = vmatprep.subr.mxu0 0.0
          %1715 = vmatpush1.msra.mxu0 0.0
          %1716 = vmatprep.subr.mxu0 0.0
          %1717 = vmatpush1.msra.mxu0 0.0
          %1718 = vmatprep.subr.mxu0 0.0
          %1719 = vmatpush1.msra.mxu0 0.0
          %1720 = vmatprep.subr.mxu0 0.0
          %1721 = vmatpush1.msra.mxu0 0.0
          %1722 = vmatprep.subr.mxu0 0.0
          %1723 = vmatpush1.msra.mxu0 0.0
          %1724 = vmatprep.subr.mxu0 0.0
          %1725 = vmatpush1.msra.mxu0 0.0
          %1726 = vmatprep.subr.mxu0 0.0
          %1727 = vmatpush1.msra.mxu0 0.0
          %1728 = vmatprep.subr.mxu0 0.0
          %1729 = vmatpush1.msra.mxu0 0.0
          %1730 = vmatprep.subr.mxu0 0.0
          %1731 = vmatpush1.msra.mxu0 0.0
          %1732 = vmatprep.subr.mxu0 0.0
          %1733 = vmatpush1.msra.mxu0 0.0
          %1734 = vmatprep.subr.mxu0 0.0
          %1735 = vmatpush1.msra.mxu0 0.0
          %1736 = vmatprep.mubr.f32.mxu0 0.0
          %1737 = vmatmul.mubr.f32.gmra.mrb[0].mxu0 %v1667
          %v1738 = vpop.f32.mrb[0].mxu0
          %v1739 = vadd.f32 %v1663, %v1738
          %v1740 = vpop.f32.mrb[0].mxu0
          %1741 = vdwg.mxu0
          %1742 = vst.msk [vmem:[#allocation3] sm:$0x3f] %vm1652, %v1739
        $region200: #{faceformer_forward.1} parent=135 // pred_fallthru
          _
        %v1743 = vld [vmem:[#allocation2] sm:$0x3f]
        %v1744 = vld [vmem:[#allocation3] sm:$0x3f]
        %v1745 = vld [vmem:[%s9] sm:$0x3f]
        %v1746 = vlaneseq
        %v1747 = vand.u32 %v1746, 127
        %vm1748 = vcmp.ge.s32.totalorder %v1747, 0
        %vm1749 = vcmp.lt.s32.totalorder %v1747, 16
        %vm1750 = vmand %vm1748, %vm1749
        %v1751 = vsel %vm1750, 1, 0
        %v1752 = vcvt.s32.f32 %v1751
        %vm1753 = vcmp.ge.s32.totalorder %v1747, 16
        %vm1754 = vcmp.lt.s32.totalorder %v1747, 32
        %vm1755 = vmand %vm1753, %vm1754
        %v1756 = vsel %vm1755, 1, 0
        %v1757 = vcvt.s32.f32 %v1756
        %vm1758 = vcmp.ge.s32.totalorder %v1747, 32
        %vm1759 = vcmp.lt.s32.totalorder %v1747, 48
        %vm1760 = vmand %vm1758, %vm1759
        %v1761 = vsel %vm1760, 1, 0
        %v1762 = vcvt.s32.f32 %v1761
        %vm1763 = vcmp.ge.s32.totalorder %v1747, 48
        %vm1764 = vcmp.lt.s32.totalorder %v1747, 64
        %vm1765 = vmand %vm1763, %vm1764
        %v1766 = vsel %vm1765, 1, 0
        %v1767 = vcvt.s32.f32 %v1766
        %v1768 = vld [vmem:[%s1431] sm:$0xff]
        %v1769 = vld [vmem:[%s1431 + $0x8] sm:$0xff]
        %v1770 = vld [vmem:[%s1431 + $0x10] sm:$0xff]
        %v1771 = vld [vmem:[%s1431 + $0x18] sm:$0xff]
        %v1772 = vld [vmem:[%s1431 + $0x20] sm:$0xff]
        %v1773 = vld [vmem:[%s1431 + $0x28] sm:$0xff]
        %v1774 = vld [vmem:[%s1431 + $0x30] sm:$0xff]
        %v1775 = vld [vmem:[%s1431 + $0x38] sm:$0xff]
        %v1776 = vld [vmem:[%s1183] sm:$0x1]
        %v1778 = vlaneseq
        %v1779 = vshrl.u32 %v1778, 7
        %v1780 = vsub.s32 0, %v1779
        %v1781 = vrot.slane %v1776, %v1780
        %vm1783 = vcmask 523264
        %v1785 = vsel %vm1783, %v1743, 0
        %1787 = vmatprep.subr.mxu0 0.0
        %1788 = vmatpush1.msra.mxu0 %v1768
        %1789 = vmatprep.subr.mxu0 0.0
        %1790 = vmatpush1.msra.mxu0 %v1769
        %1791 = vmatprep.subr.mxu0 0.0
        %1792 = vmatpush1.msra.mxu0 %v1770
        %1793 = vmatprep.subr.mxu0 0.0
        %1794 = vmatpush1.msra.mxu0 %v1771
        %1795 = vmatprep.subr.mxu0 0.0
        %1796 = vmatpush1.msra.mxu0 %v1772
        %1797 = vmatprep.subr.mxu0 0.0
        %1798 = vmatpush1.msra.mxu0 %v1773
        %1799 = vmatprep.subr.mxu0 0.0
        %1800 = vmatpush1.msra.mxu0 %v1774
        %1801 = vmatprep.subr.mxu0 0.0
        %1802 = vmatpush1.msra.mxu0 %v1775
        %1803 = vmatprep.subr.mxu0 0.0
        %1804 = vmatpush1.msra.mxu0 0.0
        %1805 = vmatprep.subr.mxu0 0.0
        %1806 = vmatpush1.msra.mxu0 0.0
        %1807 = vmatprep.subr.mxu0 0.0
        %1808 = vmatpush1.msra.mxu0 0.0
        %1809 = vmatprep.subr.mxu0 0.0
        %1810 = vmatpush1.msra.mxu0 0.0
        %1811 = vmatprep.subr.mxu0 0.0
        %1812 = vmatpush1.msra.mxu0 0.0
        %1813 = vmatprep.subr.mxu0 0.0
        %1814 = vmatpush1.msra.mxu0 0.0
        %1815 = vmatprep.subr.mxu0 0.0
        %1816 = vmatpush1.msra.mxu0 0.0
        %1817 = vmatprep.subr.mxu0 0.0
        %1818 = vmatpush1.msra.mxu0 0.0
        %1819 = vmatprep.subr.mxu0 0.0
        %1820 = vmatpush1.msra.mxu0 0.0
        %1821 = vmatprep.subr.mxu0 0.0
        %1822 = vmatpush1.msra.mxu0 0.0
        %1823 = vmatprep.subr.mxu0 0.0
        %1824 = vmatpush1.msra.mxu0 0.0
        %1825 = vmatprep.subr.mxu0 0.0
        %1826 = vmatpush1.msra.mxu0 0.0
        %1827 = vmatprep.subr.mxu0 0.0
        %1828 = vmatpush1.msra.mxu0 0.0
        %1829 = vmatprep.subr.mxu0 0.0
        %1830 = vmatpush1.msra.mxu0 0.0
        %1831 = vmatprep.subr.mxu0 0.0
        %1832 = vmatpush1.msra.mxu0 0.0
        %1833 = vmatprep.subr.mxu0 0.0
        %1834 = vmatpush1.msra.mxu0 0.0
        %1835 = vmatprep.subr.mxu0 0.0
        %1836 = vmatpush1.msra.mxu0 0.0
        %1837 = vmatprep.subr.mxu0 0.0
        %1838 = vmatpush1.msra.mxu0 0.0
        %1839 = vmatprep.subr.mxu0 0.0
        %1840 = vmatpush1.msra.mxu0 0.0
        %1841 = vmatprep.subr.mxu0 0.0
        %1842 = vmatpush1.msra.mxu0 0.0
        %1843 = vmatprep.subr.mxu0 0.0
        %1844 = vmatpush1.msra.mxu0 0.0
        %1845 = vmatprep.subr.mxu0 0.0
        %1846 = vmatpush1.msra.mxu0 0.0
        %1847 = vmatprep.subr.mxu0 0.0
        %1848 = vmatpush1.msra.mxu0 0.0
        %1849 = vmatprep.subr.mxu0 0.0
        %1850 = vmatpush1.msra.mxu0 0.0
        %1851 = vmatprep.mubr.f32.mxu0 0.0
        %1852 = vmatmul.mubr.f32.gmra.mrb[0].mxu0 %v1785
        %v1853 = vpop.f32.mrb[0].mxu0
        %v1854 = vadd.f32 %v1781, %v1853
        %v1855 = vpop.f32.mrb[0].mxu0
        %1856 = vdwg.mxu0
        %s1857 = scalar_lea.vmem %s1431, 64
        %v1858 = vld [vmem:[%s1857] sm:$0xff]
        %v1859 = vld [vmem:[%s1857 + $0x8] sm:$0xff]
        %v1860 = vld [vmem:[%s1857 + $0x10] sm:$0xff]
        %v1861 = vld [vmem:[%s1857 + $0x18] sm:$0xff]
        %v1862 = vld [vmem:[%s1857 + $0x20] sm:$0xff]
        %v1863 = vld [vmem:[%s1857 + $0x28] sm:$0xff]
        %v1864 = vld [vmem:[%s1857 + $0x30] sm:$0xff]
        %v1865 = vld [vmem:[%s1857 + $0x38] sm:$0xff]
        %s1866 = scalar_lea.vmem %s1183, 1 [#allocation9]
        %v1867 = vld [vmem:[%s1866] sm:$0x1]
        %v1869 = vlaneseq
        %v1870 = vshrl.u32 %v1869, 7
        %v1871 = vsub.s32 0, %v1870
        %v1872 = vrot.slane %v1867, %v1871
        %1874 = vmatprep.subr.mxu0 0.0
        %1875 = vmatpush1.msra.mxu0 %v1858
        %1876 = vmatprep.subr.mxu0 0.0
        %1877 = vmatpush1.msra.mxu0 %v1859
        %1878 = vmatprep.subr.mxu0 0.0
        %1879 = vmatpush1.msra.mxu0 %v1860
        %1880 = vmatprep.subr.mxu0 0.0
        %1881 = vmatpush1.msra.mxu0 %v1861
        %1882 = vmatprep.subr.mxu0 0.0
        %1883 = vmatpush1.msra.mxu0 %v1862
        %1884 = vmatprep.subr.mxu0 0.0
        %1885 = vmatpush1.msra.mxu0 %v1863
        %1886 = vmatprep.subr.mxu0 0.0
        %1887 = vmatpush1.msra.mxu0 %v1864
        %1888 = vmatprep.subr.mxu0 0.0
        %1889 = vmatpush1.msra.mxu0 %v1865
        %1890 = vmatprep.subr.mxu0 0.0
        %1891 = vmatpush1.msra.mxu0 0.0
        %1892 = vmatprep.subr.mxu0 0.0
        %1893 = vmatpush1.msra.mxu0 0.0
        %1894 = vmatprep.subr.mxu0 0.0
        %1895 = vmatpush1.msra.mxu0 0.0
        %1896 = vmatprep.subr.mxu0 0.0
        %1897 = vmatpush1.msra.mxu0 0.0
        %1898 = vmatprep.subr.mxu0 0.0
        %1899 = vmatpush1.msra.mxu0 0.0
        %1900 = vmatprep.subr.mxu0 0.0
        %1901 = vmatpush1.msra.mxu0 0.0
        %1902 = vmatprep.subr.mxu0 0.0
        %1903 = vmatpush1.msra.mxu0 0.0
        %1904 = vmatprep.subr.mxu0 0.0
        %1905 = vmatpush1.msra.mxu0 0.0
        %1906 = vmatprep.subr.mxu0 0.0
        %1907 = vmatpush1.msra.mxu0 0.0
        %1908 = vmatprep.subr.mxu0 0.0
        %1909 = vmatpush1.msra.mxu0 0.0
        %1910 = vmatprep.subr.mxu0 0.0
        %1911 = vmatpush1.msra.mxu0 0.0
        %1912 = vmatprep.subr.mxu0 0.0
        %1913 = vmatpush1.msra.mxu0 0.0
        %1914 = vmatprep.subr.mxu0 0.0
        %1915 = vmatpush1.msra.mxu0 0.0
        %1916 = vmatprep.subr.mxu0 0.0
        %1917 = vmatpush1.msra.mxu0 0.0
        %1918 = vmatprep.subr.mxu0 0.0
        %1919 = vmatpush1.msra.mxu0 0.0
        %1920 = vmatprep.subr.mxu0 0.0
        %1921 = vmatpush1.msra.mxu0 0.0
        %1922 = vmatprep.subr.mxu0 0.0
        %1923 = vmatpush1.msra.mxu0 0.0
        %1924 = vmatprep.subr.mxu0 0.0
        %1925 = vmatpush1.msra.mxu0 0.0
        %1926 = vmatprep.subr.mxu0 0.0
        %1927 = vmatpush1.msra.mxu0 0.0
        %1928 = vmatprep.subr.mxu0 0.0
        %1929 = vmatpush1.msra.mxu0 0.0
        %1930 = vmatprep.subr.mxu0 0.0
        %1931 = vmatpush1.msra.mxu0 0.0
        %1932 = vmatprep.subr.mxu0 0.0
        %1933 = vmatpush1.msra.mxu0 0.0
        %1934 = vmatprep.subr.mxu0 0.0
        %1935 = vmatpush1.msra.mxu0 0.0
        %1936 = vmatprep.subr.mxu0 0.0
        %1937 = vmatpush1.msra.mxu0 0.0
        %1938 = vmatprep.mubr.f32.mxu0 0.0
        %1939 = vmatmul.mubr.f32.gmra.mrb[0].mxu0 %v1785
        %v1940 = vpop.f32.mrb[0].mxu0
        %v1941 = vadd.f32 %v1872, %v1940
        %v1942 = vpop.f32.mrb[0].mxu0
        %1943 = vdwg.mxu0
        %s1944 = scalar_lea.vmem %s1431, 128
        %v1945 = vld [vmem:[%s1944] sm:$0xff]
        %v1946 = vld [vmem:[%s1944 + $0x8] sm:$0xff]
        %v1947 = vld [vmem:[%s1944 + $0x10] sm:$0xff]
        %v1948 = vld [vmem:[%s1944 + $0x18] sm:$0xff]
        %v1949 = vld [vmem:[%s1944 + $0x20] sm:$0xff]
        %v1950 = vld [vmem:[%s1944 + $0x28] sm:$0xff]
        %v1951 = vld [vmem:[%s1944 + $0x30] sm:$0xff]
        %v1952 = vld [vmem:[%s1944 + $0x38] sm:$0xff]
        %s1953 = scalar_lea.vmem %s1183, 2 [#allocation9]
        %v1954 = vld [vmem:[%s1953] sm:$0x1]
        %v1956 = vlaneseq
        %v1957 = vshrl.u32 %v1956, 7
        %v1958 = vsub.s32 0, %v1957
        %v1959 = vrot.slane %v1954, %v1958
        %1961 = vmatprep.subr.mxu0 0.0
        %1962 = vmatpush1.msra.mxu0 %v1945
        %1963 = vmatprep.subr.mxu0 0.0
        %1964 = vmatpush1.msra.mxu0 %v1946
        %1965 = vmatprep.subr.mxu0 0.0
        %1966 = vmatpush1.msra.mxu0 %v1947
        %1967 = vmatprep.subr.mxu0 0.0
        %1968 = vmatpush1.msra.mxu0 %v1948
        %1969 = vmatprep.subr.mxu0 0.0
        %1970 = vmatpush1.msra.mxu0 %v1949
        %1971 = vmatprep.subr.mxu0 0.0
        %1972 = vmatpush1.msra.mxu0 %v1950
        %1973 = vmatprep.subr.mxu0 0.0
        %1974 = vmatpush1.msra.mxu0 %v1951
        %1975 = vmatprep.subr.mxu0 0.0
        %1976 = vmatpush1.msra.mxu0 %v1952
        %1977 = vmatprep.subr.mxu0 0.0
        %1978 = vmatpush1.msra.mxu0 0.0
        %1979 = vmatprep.subr.mxu0 0.0
        %1980 = vmatpush1.msra.mxu0 0.0
        %1981 = vmatprep.subr.mxu0 0.0
        %1982 = vmatpush1.msra.mxu0 0.0
        %1983 = vmatprep.subr.mxu0 0.0
        %1984 = vmatpush1.msra.mxu0 0.0
        %1985 = vmatprep.subr.mxu0 0.0
        %1986 = vmatpush1.msra.mxu0 0.0
        %1987 = vmatprep.subr.mxu0 0.0
        %1988 = vmatpush1.msra.mxu0 0.0
        %1989 = vmatprep.subr.mxu0 0.0
        %1990 = vmatpush1.msra.mxu0 0.0
        %1991 = vmatprep.subr.mxu0 0.0
        %1992 = vmatpush1.msra.mxu0 0.0
        %1993 = vmatprep.subr.mxu0 0.0
        %1994 = vmatpush1.msra.mxu0 0.0
        %1995 = vmatprep.subr.mxu0 0.0
        %1996 = vmatpush1.msra.mxu0 0.0
        %1997 = vmatprep.subr.mxu0 0.0
        %1998 = vmatpush1.msra.mxu0 0.0
        %1999 = vmatprep.subr.mxu0 0.0
        %2000 = vmatpush1.msra.mxu0 0.0
        %2001 = vmatprep.subr.mxu0 0.0
        %2002 = vmatpush1.msra.mxu0 0.0
        %2003 = vmatprep.subr.mxu0 0.0
        %2004 = vmatpush1.msra.mxu0 0.0
        %2005 = vmatprep.subr.mxu0 0.0
        %2006 = vmatpush1.msra.mxu0 0.0
        %2007 = vmatprep.subr.mxu0 0.0
        %2008 = vmatpush1.msra.mxu0 0.0
        %2009 = vmatprep.subr.mxu0 0.0
        %2010 = vmatpush1.msra.mxu0 0.0
        %2011 = vmatprep.subr.mxu0 0.0
        %2012 = vmatpush1.msra.mxu0 0.0
        %2013 = vmatprep.subr.mxu0 0.0
        %2014 = vmatpush1.msra.mxu0 0.0
        %2015 = vmatprep.subr.mxu0 0.0
        %2016 = vmatpush1.msra.mxu0 0.0
        %2017 = vmatprep.subr.mxu0 0.0
        %2018 = vmatpush1.msra.mxu0 0.0
        %2019 = vmatprep.subr.mxu0 0.0
        %2020 = vmatpush1.msra.mxu0 0.0
        %2021 = vmatprep.subr.mxu0 0.0
        %2022 = vmatpush1.msra.mxu0 0.0
        %2023 = vmatprep.subr.mxu0 0.0
        %2024 = vmatpush1.msra.mxu0 0.0
        %2025 = vmatprep.mubr.f32.mxu0 0.0
        %2026 = vmatmul.mubr.f32.gmra.mrb[0].mxu0 %v1785
        %v2027 = vpop.f32.mrb[0].mxu0
        %v2028 = vadd.f32 %v1959, %v2027
        %v2029 = vpop.f32.mrb[0].mxu0
        %2030 = vdwg.mxu0
        %v2031 = vmul.f32 %v1854, %v1752
        %v2033 = vsel %vm1783, %v2031, 0
        %v2036 = vsel %vm1783, %v1941, 0
        %2038 = vmatprep.subr.mxu0 0.0
        %2039 = vmatpush1.xpose.msra.mxu0 %v2036
        %2040 = vmatprep.subr.mxu0 0.0
        %2041 = vmatpush1.xpose.msra.mxu0 0.0
        %2042 = vmatprep.subr.mxu0 0.0
        %2043 = vmatpush1.xpose.msra.mxu0 0.0
        %2044 = vmatprep.subr.mxu0 0.0
        %2045 = vmatpush1.xpose.msra.mxu0 0.0
        %2046 = vmatprep.subr.mxu0 0.0
        %2047 = vmatpush1.xpose.msra.mxu0 0.0
        %2048 = vmatprep.subr.mxu0 0.0
        %2049 = vmatpush1.xpose.msra.mxu0 0.0
        %2050 = vmatprep.subr.mxu0 0.0
        %2051 = vmatpush1.xpose.msra.mxu0 0.0
        %2052 = vmatprep.subr.mxu0 0.0
        %2053 = vmatpush1.xpose.msra.mxu0 0.0
        %2054 = vmatprep.subr.mxu0 0.0
        %2055 = vmatpush1.xpose.msra.mxu0 0.0
        %2056 = vmatprep.subr.mxu0 0.0
        %2057 = vmatpush1.xpose.msra.mxu0 0.0
        %2058 = vmatprep.subr.mxu0 0.0
        %2059 = vmatpush1.xpose.msra.mxu0 0.0
        %2060 = vmatprep.subr.mxu0 0.0
        %2061 = vmatpush1.xpose.msra.mxu0 0.0
        %2062 = vmatprep.subr.mxu0 0.0
        %2063 = vmatpush1.xpose.msra.mxu0 0.0
        %2064 = vmatprep.subr.mxu0 0.0
        %2065 = vmatpush1.xpose.msra.mxu0 0.0
        %2066 = vmatprep.subr.mxu0 0.0
        %2067 = vmatpush1.xpose.msra.mxu0 0.0
        %2068 = vmatprep.subr.mxu0 0.0
        %2069 = vmatpush1.xpose.msra.mxu0 0.0
        %2070 = vmatprep.subr.mxu0 0.0
        %2071 = vmatpush1.xpose.msra.mxu0 0.0
        %2072 = vmatprep.subr.mxu0 0.0
        %2073 = vmatpush1.xpose.msra.mxu0 0.0
        %2074 = vmatprep.subr.mxu0 0.0
        %2075 = vmatpush1.xpose.msra.mxu0 0.0
        %2076 = vmatprep.subr.mxu0 0.0
        %2077 = vmatpush1.xpose.msra.mxu0 0.0
        %2078 = vmatprep.subr.mxu0 0.0
        %2079 = vmatpush1.xpose.msra.mxu0 0.0
        %2080 = vmatprep.subr.mxu0 0.0
        %2081 = vmatpush1.xpose.msra.mxu0 0.0
        %2082 = vmatprep.subr.mxu0 0.0
        %2083 = vmatpush1.xpose.msra.mxu0 0.0
        %2084 = vmatprep.subr.mxu0 0.0
        %2085 = vmatpush1.xpose.msra.mxu0 0.0
        %2086 = vmatprep.subr.mxu0 0.0
        %2087 = vmatpush1.xpose.msra.mxu0 0.0
        %2088 = vmatprep.subr.mxu0 0.0
        %2089 = vmatpush1.xpose.msra.mxu0 0.0
        %2090 = vmatprep.subr.mxu0 0.0
        %2091 = vmatpush1.xpose.msra.mxu0 0.0
        %2092 = vmatprep.subr.mxu0 0.0
        %2093 = vmatpush1.xpose.msra.mxu0 0.0
        %2094 = vmatprep.subr.mxu0 0.0
        %2095 = vmatpush1.xpose.msra.mxu0 0.0
        %2096 = vmatprep.subr.mxu0 0.0
        %2097 = vmatpush1.xpose.msra.mxu0 0.0
        %2098 = vmatprep.subr.mxu0 0.0
        %2099 = vmatpush1.xpose.msra.mxu0 0.0
        %2100 = vmatprep.subr.mxu0 0.0
        %2101 = vmatpush1.xpose.msra.mxu0 0.0
        %2102 = vmatprep.mubr.f32.mxu0 0.0
        %2103 = vmatmul.mubr.f32.gmra.mrb[0].mxu0 %v2033
        %v2104 = vpop.f32.mrb[0].mxu0
        %v2105 = vadd.f32 0.0, %v2104
        %v2106 = vpop.f32.mrb[0].mxu0
        %2107 = vdwg.mxu0
        %v2108 = vmul.f32 %v2105, 0.25
        %vm2109 = vcmask 46080
        %v2110 = vsel %vm2109, %v2108, -inf
        %2111 = vmax.xlane.f32.xlu0 %v2110
        %v2112 = vpop.xlane.xlu0 %2111
        %v2113 = vsub.f32 %v2108, %v2112
        %v2114 = vmul.f32 %v2113, 1.442695
        %v2115 = vpow.pop %v2114
        %v2116 = vsel %vm2109, %v2115, 0.0
        %2117 = vadd.xlane.f32.xlu0 %v2116
        %v2118 = vpop.xlane.xlu0 %2117
        %v2119 = vrcp.pop %v2118
        %v2120 = vmul.f32 %v2115, %v2119
        %v2121 = vmul.f32 %v2028, %v1752
        %v2122 = vmul.f32 %v1854, %v1757
        %v2124 = vsel %vm1783, %v2122, 0
        %2126 = vmatprep.subr.mxu0 0.0
        %2127 = vmatpush1.xpose.msra.mxu0 %v2036
        %2128 = vmatprep.subr.mxu0 0.0
        %2129 = vmatpush1.xpose.msra.mxu0 0.0
        %2130 = vmatprep.subr.mxu0 0.0
        %2131 = vmatpush1.xpose.msra.mxu0 0.0
        %2132 = vmatprep.subr.mxu0 0.0
        %2133 = vmatpush1.xpose.msra.mxu0 0.0
        %2134 = vmatprep.subr.mxu0 0.0
        %2135 = vmatpush1.xpose.msra.mxu0 0.0
        %2136 = vmatprep.subr.mxu0 0.0
        %2137 = vmatpush1.xpose.msra.mxu0 0.0
        %2138 = vmatprep.subr.mxu0 0.0
        %2139 = vmatpush1.xpose.msra.mxu0 0.0
        %2140 = vmatprep.subr.mxu0 0.0
        %2141 = vmatpush1.xpose.msra.mxu0 0.0
        %2142 = vmatprep.subr.mxu0 0.0
        %2143 = vmatpush1.xpose.msra.mxu0 0.0
        %2144 = vmatprep.subr.mxu0 0.0
        %2145 = vmatpush1.xpose.msra.mxu0 0.0
        %2146 = vmatprep.subr.mxu0 0.0
        %2147 = vmatpush1.xpose.msra.mxu0 0.0
        %2148 = vmatprep.subr.mxu0 0.0
        %2149 = vmatpush1.xpose.msra.mxu0 0.0
        %2150 = vmatprep.subr.mxu0 0.0
        %2151 = vmatpush1.xpose.msra.mxu0 0.0
        %2152 = vmatprep.subr.mxu0 0.0
        %2153 = vmatpush1.xpose.msra.mxu0 0.0
        %2154 = vmatprep.subr.mxu0 0.0
        %2155 = vmatpush1.xpose.msra.mxu0 0.0
        %2156 = vmatprep.subr.mxu0 0.0
        %2157 = vmatpush1.xpose.msra.mxu0 0.0
        %2158 = vmatprep.subr.mxu0 0.0
        %2159 = vmatpush1.xpose.msra.mxu0 0.0
        %2160 = vmatprep.subr.mxu0 0.0
        %2161 = vmatpush1.xpose.msra.mxu0 0.0
        %2162 = vmatprep.subr.mxu0 0.0
        %2163 = vmatpush1.xpose.msra.mxu0 0.0
        %2164 = vmatprep.subr.mxu0 0.0
        %2165 = vmatpush1.xpose.msra.mxu0 0.0
        %2166 = vmatprep.subr.mxu0 0.0
        %2167 = vmatpush1.xpose.msra.mxu0 0.0
        %2168 = vmatprep.subr.mxu0 0.0
        %2169 = vmatpush1.xpose.msra.mxu0 0.0
        %2170 = vmatprep.subr.mxu0 0.0
        %2171 = vmatpush1.xpose.msra.mxu0 0.0
        %2172 = vmatprep.subr.mxu0 0.0
        %2173 = vmatpush1.xpose.msra.mxu0 0.0
        %2174 = vmatprep.subr.mxu0 0.0
        %2175 = vmatpush1.xpose.msra.mxu0 0.0
        %2176 = vmatprep.subr.mxu0 0.0
        %2177 = vmatpush1.xpose.msra.mxu0 0.0
        %2178 = vmatprep.subr.mxu0 0.0
        %2179 = vmatpush1.xpose.msra.mxu0 0.0
        %2180 = vmatprep.subr.mxu0 0.0
        %2181 = vmatpush1.xpose.msra.mxu0 0.0
        %2182 = vmatprep.subr.mxu0 0.0
        %2183 = vmatpush1.xpose.msra.mxu0 0.0
        %2184 = vmatprep.subr.mxu0 0.0
        %2185 = vmatpush1.xpose.msra.mxu0 0.0
        %2186 = vmatprep.subr.mxu0 0.0
        %2187 = vmatpush1.xpose.msra.mxu0 0.0
        %2188 = vmatprep.subr.mxu0 0.0
        %2189 = vmatpush1.xpose.msra.mxu0 0.0
        %2190 = vmatprep.mubr.f32.mxu0 0.0
        %2191 = vmatmul.mubr.f32.gmra.mrb[0].mxu0 %v2124
        %v2192 = vpop.f32.mrb[0].mxu0
        %v2193 = vadd.f32 0.0, %v2192
        %v2194 = vpop.f32.mrb[0].mxu0
        %2195 = vdwg.mxu0
        %v2196 = vmul.f32 %v2193, 0.25
        %v2197 = vsel %vm2109, %v2196, -inf
        %2198 = vmax.xlane.f32.xlu0 %v2197
        %v2199 = vpop.xlane.xlu0 %2198
        %v2200 = vsub.f32 %v2196, %v2199
        %v2201 = vmul.f32 %v2200, 1.442695
        %v2202 = vpow.pop %v2201
        %v2203 = vsel %vm2109, %v2202, 0.0
        %2204 = vadd.xlane.f32.xlu0 %v2203
        %v2205 = vpop.xlane.xlu0 %2204
        %v2206 = vrcp.pop %v2205
        %v2207 = vmul.f32 %v2202, %v2206
        %v2208 = vmul.f32 %v2028, %v1757
        %vm2209 = vcmask 48128
        %v2211 = vsel %vm2209, %v2207, 0
        %vm2213 = vcmask 1045504
        %v2215 = vsel %vm2213, %v2208, 0
        %2217 = vmatprep.subr.mxu0 0.0
        %2218 = vmatpush1.msra.mxu0 %v2215
        %2219 = vmatprep.subr.mxu0 0.0
        %2220 = vmatpush1.msra.mxu0 0.0
        %2221 = vmatprep.subr.mxu0 0.0
        %2222 = vmatpush1.msra.mxu0 0.0
        %2223 = vmatprep.subr.mxu0 0.0
        %2224 = vmatpush1.msra.mxu0 0.0
        %2225 = vmatprep.subr.mxu0 0.0
        %2226 = vmatpush1.msra.mxu0 0.0
        %2227 = vmatprep.subr.mxu0 0.0
        %2228 = vmatpush1.msra.mxu0 0.0
        %2229 = vmatprep.subr.mxu0 0.0
        %2230 = vmatpush1.msra.mxu0 0.0
        %2231 = vmatprep.subr.mxu0 0.0
        %2232 = vmatpush1.msra.mxu0 0.0
        %2233 = vmatprep.subr.mxu0 0.0
        %2234 = vmatpush1.msra.mxu0 0.0
        %2235 = vmatprep.subr.mxu0 0.0
        %2236 = vmatpush1.msra.mxu0 0.0
        %2237 = vmatprep.subr.mxu0 0.0
        %2238 = vmatpush1.msra.mxu0 0.0
        %2239 = vmatprep.subr.mxu0 0.0
        %2240 = vmatpush1.msra.mxu0 0.0
        %2241 = vmatprep.subr.mxu0 0.0
        %2242 = vmatpush1.msra.mxu0 0.0
        %2243 = vmatprep.subr.mxu0 0.0
        %2244 = vmatpush1.msra.mxu0 0.0
        %2245 = vmatprep.subr.mxu0 0.0
        %2246 = vmatpush1.msra.mxu0 0.0
        %2247 = vmatprep.subr.mxu0 0.0
        %2248 = vmatpush1.msra.mxu0 0.0
        %2249 = vmatprep.subr.mxu0 0.0
        %2250 = vmatpush1.msra.mxu0 0.0
        %2251 = vmatprep.subr.mxu0 0.0
        %2252 = vmatpush1.msra.mxu0 0.0
        %2253 = vmatprep.subr.mxu0 0.0
        %2254 = vmatpush1.msra.mxu0 0.0
        %2255 = vmatprep.subr.mxu0 0.0
        %2256 = vmatpush1.msra.mxu0 0.0
        %2257 = vmatprep.subr.mxu0 0.0
        %2258 = vmatpush1.msra.mxu0 0.0
        %2259 = vmatprep.subr.mxu0 0.0
        %2260 = vmatpush1.msra.mxu0 0.0
        %2261 = vmatprep.subr.mxu0 0.0
        %2262 = vmatpush1.msra.mxu0 0.0
        %2263 = vmatprep.subr.mxu0 0.0
        %2264 = vmatpush1.msra.mxu0 0.0
        %2265 = vmatprep.subr.mxu0 0.0
        %2266 = vmatpush1.msra.mxu0 0.0
        %2267 = vmatprep.subr.mxu0 0.0
        %2268 = vmatpush1.msra.mxu0 0.0
        %2269 = vmatprep.subr.mxu0 0.0
        %2270 = vmatpush1.msra.mxu0 0.0
        %2271 = vmatprep.subr.mxu0 0.0
        %2272 = vmatpush1.msra.mxu0 0.0
        %2273 = vmatprep.subr.mxu0 0.0
        %2274 = vmatpush1.msra.mxu0 0.0
        %2275 = vmatprep.subr.mxu0 0.0
        %2276 = vmatpush1.msra.mxu0 0.0
        %2277 = vmatprep.subr.mxu0 0.0
        %2278 = vmatpush1.msra.mxu0 0.0
        %2279 = vmatprep.subr.mxu0 0.0
        %2280 = vmatpush1.msra.mxu0 0.0
        %2281 = vmatprep.mubr.f32.mxu0 0.0
        %2282 = vmatmul.mubr.f32.gmra.mrb[0].mxu0 %v2211
        %v2283 = vpop.f32.mrb[0].mxu0
        %v2284 = vadd.f32 0.0, %v2283
        %v2285 = vpop.f32.mrb[0].mxu0
        %2286 = vdwg.mxu0
        %v2288 = vsel %vm2209, %v2120, 0
        %v2291 = vsel %vm2213, %v2121, 0
        %2293 = vmatprep.subr.mxu0 0.0
        %2294 = vmatpush1.msra.mxu0 %v2291
        %2295 = vmatprep.subr.mxu0 0.0
        %2296 = vmatpush1.msra.mxu0 0.0
        %2297 = vmatprep.subr.mxu0 0.0
        %2298 = vmatpush1.msra.mxu0 0.0
        %2299 = vmatprep.subr.mxu0 0.0
        %2300 = vmatpush1.msra.mxu0 0.0
        %2301 = vmatprep.subr.mxu0 0.0
        %2302 = vmatpush1.msra.mxu0 0.0
        %2303 = vmatprep.subr.mxu0 0.0
        %2304 = vmatpush1.msra.mxu0 0.0
        %2305 = vmatprep.subr.mxu0 0.0
        %2306 = vmatpush1.msra.mxu0 0.0
        %2307 = vmatprep.subr.mxu0 0.0
        %2308 = vmatpush1.msra.mxu0 0.0
        %2309 = vmatprep.subr.mxu0 0.0
        %2310 = vmatpush1.msra.mxu0 0.0
        %2311 = vmatprep.subr.mxu0 0.0
        %2312 = vmatpush1.msra.mxu0 0.0
        %2313 = vmatprep.subr.mxu0 0.0
        %2314 = vmatpush1.msra.mxu0 0.0
        %2315 = vmatprep.subr.mxu0 0.0
        %2316 = vmatpush1.msra.mxu0 0.0
        %2317 = vmatprep.subr.mxu0 0.0
        %2318 = vmatpush1.msra.mxu0 0.0
        %2319 = vmatprep.subr.mxu0 0.0
        %2320 = vmatpush1.msra.mxu0 0.0
        %2321 = vmatprep.subr.mxu0 0.0
        %2322 = vmatpush1.msra.mxu0 0.0
        %2323 = vmatprep.subr.mxu0 0.0
        %2324 = vmatpush1.msra.mxu0 0.0
        %2325 = vmatprep.subr.mxu0 0.0
        %2326 = vmatpush1.msra.mxu0 0.0
        %2327 = vmatprep.subr.mxu0 0.0
        %2328 = vmatpush1.msra.mxu0 0.0
        %2329 = vmatprep.subr.mxu0 0.0
        %2330 = vmatpush1.msra.mxu0 0.0
        %2331 = vmatprep.subr.mxu0 0.0
        %2332 = vmatpush1.msra.mxu0 0.0
        %2333 = vmatprep.subr.mxu0 0.0
        %2334 = vmatpush1.msra.mxu0 0.0
        %2335 = vmatprep.subr.mxu0 0.0
        %2336 = vmatpush1.msra.mxu0 0.0
        %2337 = vmatprep.subr.mxu0 0.0
        %2338 = vmatpush1.msra.mxu0 0.0
        %2339 = vmatprep.subr.mxu0 0.0
        %2340 = vmatpush1.msra.mxu0 0.0
        %2341 = vmatprep.subr.mxu0 0.0
        %2342 = vmatpush1.msra.mxu0 0.0
        %2343 = vmatprep.subr.mxu0 0.0
        %2344 = vmatpush1.msra.mxu0 0.0
        %2345 = vmatprep.subr.mxu0 0.0
        %2346 = vmatpush1.msra.mxu0 0.0
        %2347 = vmatprep.subr.mxu0 0.0
        %2348 = vmatpush1.msra.mxu0 0.0
        %2349 = vmatprep.subr.mxu0 0.0
        %2350 = vmatpush1.msra.mxu0 0.0
        %2351 = vmatprep.subr.mxu0 0.0
        %2352 = vmatpush1.msra.mxu0 0.0
        %2353 = vmatprep.subr.mxu0 0.0
        %2354 = vmatpush1.msra.mxu0 0.0
        %2355 = vmatprep.subr.mxu0 0.0
        %2356 = vmatpush1.msra.mxu0 0.0
        %2357 = vmatprep.mubr.f32.mxu0 0.0
        %2358 = vmatmul.mubr.f32.gmra.mrb[0].mxu0 %v2288
        %v2359 = vpop.f32.mrb[0].mxu0
        %v2360 = vadd.f32 %v2284, %v2359
        %v2361 = vpop.f32.mrb[0].mxu0
        %2362 = vdwg.mxu0
        %v2363 = vmul.f32 %v1854, %v1762
        %v2365 = vsel %vm1783, %v2363, 0
        %2367 = vmatprep.subr.mxu0 0.0
        %2368 = vmatpush1.xpose.msra.mxu0 %v2036
        %2369 = vmatprep.subr.mxu0 0.0
        %2370 = vmatpush1.xpose.msra.mxu0 0.0
        %2371 = vmatprep.subr.mxu0 0.0
        %2372 = vmatpush1.xpose.msra.mxu0 0.0
        %2373 = vmatprep.subr.mxu0 0.0
        %2374 = vmatpush1.xpose.msra.mxu0 0.0
        %2375 = vmatprep.subr.mxu0 0.0
        %2376 = vmatpush1.xpose.msra.mxu0 0.0
        %2377 = vmatprep.subr.mxu0 0.0
        %2378 = vmatpush1.xpose.msra.mxu0 0.0
        %2379 = vmatprep.subr.mxu0 0.0
        %2380 = vmatpush1.xpose.msra.mxu0 0.0
        %2381 = vmatprep.subr.mxu0 0.0
        %2382 = vmatpush1.xpose.msra.mxu0 0.0
        %2383 = vmatprep.subr.mxu0 0.0
        %2384 = vmatpush1.xpose.msra.mxu0 0.0
        %2385 = vmatprep.subr.mxu0 0.0
        %2386 = vmatpush1.xpose.msra.mxu0 0.0
        %2387 = vmatprep.subr.mxu0 0.0
        %2388 = vmatpush1.xpose.msra.mxu0 0.0
        %2389 = vmatprep.subr.mxu0 0.0
        %2390 = vmatpush1.xpose.msra.mxu0 0.0
        %2391 = vmatprep.subr.mxu0 0.0
        %2392 = vmatpush1.xpose.msra.mxu0 0.0
        %2393 = vmatprep.subr.mxu0 0.0
        %2394 = vmatpush1.xpose.msra.mxu0 0.0
        %2395 = vmatprep.subr.mxu0 0.0
        %2396 = vmatpush1.xpose.msra.mxu0 0.0
        %2397 = vmatprep.subr.mxu0 0.0
        %2398 = vmatpush1.xpose.msra.mxu0 0.0
        %2399 = vmatprep.subr.mxu0 0.0
        %2400 = vmatpush1.xpose.msra.mxu0 0.0
        %2401 = vmatprep.subr.mxu0 0.0
        %2402 = vmatpush1.xpose.msra.mxu0 0.0
        %2403 = vmatprep.subr.mxu0 0.0
        %2404 = vmatpush1.xpose.msra.mxu0 0.0
        %2405 = vmatprep.subr.mxu0 0.0
        %2406 = vmatpush1.xpose.msra.mxu0 0.0
        %2407 = vmatprep.subr.mxu0 0.0
        %2408 = vmatpush1.xpose.msra.mxu0 0.0
        %2409 = vmatprep.subr.mxu0 0.0
        %2410 = vmatpush1.xpose.msra.mxu0 0.0
        %2411 = vmatprep.subr.mxu0 0.0
        %2412 = vmatpush1.xpose.msra.mxu0 0.0
        %2413 = vmatprep.subr.mxu0 0.0
        %2414 = vmatpush1.xpose.msra.mxu0 0.0
        %2415 = vmatprep.subr.mxu0 0.0
        %2416 = vmatpush1.xpose.msra.mxu0 0.0
        %2417 = vmatprep.subr.mxu0 0.0
        %2418 = vmatpush1.xpose.msra.mxu0 0.0
        %2419 = vmatprep.subr.mxu0 0.0
        %2420 = vmatpush1.xpose.msra.mxu0 0.0
        %2421 = vmatprep.subr.mxu0 0.0
        %2422 = vmatpush1.xpose.msra.mxu0 0.0
        %2423 = vmatprep.subr.mxu0 0.0
        %2424 = vmatpush1.xpose.msra.mxu0 0.0
        %2425 = vmatprep.subr.mxu0 0.0
        %2426 = vmatpush1.xpose.msra.mxu0 0.0
        %2427 = vmatprep.subr.mxu0 0.0
        %2428 = vmatpush1.xpose.msra.mxu0 0.0
        %2429 = vmatprep.subr.mxu0 0.0
        %2430 = vmatpush1.xpose.msra.mxu0 0.0
        %2431 = vmatprep.mubr.f32.mxu0 0.0
        %2432 = vmatmul.mubr.f32.gmra.mrb[0].mxu0 %v2365
        %v2433 = vpop.f32.mrb[0].mxu0
        %v2434 = vadd.f32 0.0, %v2433
        %v2435 = vpop.f32.mrb[0].mxu0
        %2436 = vdwg.mxu0
        %v2437 = vmul.f32 %v2434, 0.25
        %v2438 = vsel %vm2109, %v2437, -inf
        %2439 = vmax.xlane.f32.xlu0 %v2438
        %v2440 = vpop.xlane.xlu0 %2439
        %v2441 = vsub.f32 %v2437, %v2440
        %v2442 = vmul.f32 %v2441, 1.442695
        %v2443 = vpow.pop %v2442
        %v2444 = vsel %vm2109, %v2443, 0.0
        %2445 = vadd.xlane.f32.xlu0 %v2444
        %v2446 = vpop.xlane.xlu0 %2445
        %v2447 = vrcp.pop %v2446
        %v2448 = vmul.f32 %v2443, %v2447
        %v2449 = vmul.f32 %v2028, %v1762
        %v2451 = vsel %vm2209, %v2448, 0
        %v2454 = vsel %vm2213, %v2449, 0
        %2456 = vmatprep.subr.mxu0 0.0
        %2457 = vmatpush1.msra.mxu0 %v2454
        %2458 = vmatprep.subr.mxu0 0.0
        %2459 = vmatpush1.msra.mxu0 0.0
        %2460 = vmatprep.subr.mxu0 0.0
        %2461 = vmatpush1.msra.mxu0 0.0
        %2462 = vmatprep.subr.mxu0 0.0
        %2463 = vmatpush1.msra.mxu0 0.0
        %2464 = vmatprep.subr.mxu0 0.0
        %2465 = vmatpush1.msra.mxu0 0.0
        %2466 = vmatprep.subr.mxu0 0.0
        %2467 = vmatpush1.msra.mxu0 0.0
        %2468 = vmatprep.subr.mxu0 0.0
        %2469 = vmatpush1.msra.mxu0 0.0
        %2470 = vmatprep.subr.mxu0 0.0
        %2471 = vmatpush1.msra.mxu0 0.0
        %2472 = vmatprep.subr.mxu0 0.0
        %2473 = vmatpush1.msra.mxu0 0.0
        %2474 = vmatprep.subr.mxu0 0.0
        %2475 = vmatpush1.msra.mxu0 0.0
        %2476 = vmatprep.subr.mxu0 0.0
        %2477 = vmatpush1.msra.mxu0 0.0
        %2478 = vmatprep.subr.mxu0 0.0
        %2479 = vmatpush1.msra.mxu0 0.0
        %2480 = vmatprep.subr.mxu0 0.0
        %2481 = vmatpush1.msra.mxu0 0.0
        %2482 = vmatprep.subr.mxu0 0.0
        %2483 = vmatpush1.msra.mxu0 0.0
        %2484 = vmatprep.subr.mxu0 0.0
        %2485 = vmatpush1.msra.mxu0 0.0
        %2486 = vmatprep.subr.mxu0 0.0
        %2487 = vmatpush1.msra.mxu0 0.0
        %2488 = vmatprep.subr.mxu0 0.0
        %2489 = vmatpush1.msra.mxu0 0.0
        %2490 = vmatprep.subr.mxu0 0.0
        %2491 = vmatpush1.msra.mxu0 0.0
        %2492 = vmatprep.subr.mxu0 0.0
        %2493 = vmatpush1.msra.mxu0 0.0
        %2494 = vmatprep.subr.mxu0 0.0
        %2495 = vmatpush1.msra.mxu0 0.0
        %2496 = vmatprep.subr.mxu0 0.0
        %2497 = vmatpush1.msra.mxu0 0.0
        %2498 = vmatprep.subr.mxu0 0.0
        %2499 = vmatpush1.msra.mxu0 0.0
        %2500 = vmatprep.subr.mxu0 0.0
        %2501 = vmatpush1.msra.mxu0 0.0
        %2502 = vmatprep.subr.mxu0 0.0
        %2503 = vmatpush1.msra.mxu0 0.0
        %2504 = vmatprep.subr.mxu0 0.0
        %2505 = vmatpush1.msra.mxu0 0.0
        %2506 = vmatprep.subr.mxu0 0.0
        %2507 = vmatpush1.msra.mxu0 0.0
        %2508 = vmatprep.subr.mxu0 0.0
        %2509 = vmatpush1.msra.mxu0 0.0
        %2510 = vmatprep.subr.mxu0 0.0
        %2511 = vmatpush1.msra.mxu0 0.0
        %2512 = vmatprep.subr.mxu0 0.0
        %2513 = vmatpush1.msra.mxu0 0.0
        %2514 = vmatprep.subr.mxu0 0.0
        %2515 = vmatpush1.msra.mxu0 0.0
        %2516 = vmatprep.subr.mxu0 0.0
        %2517 = vmatpush1.msra.mxu0 0.0
        %2518 = vmatprep.subr.mxu0 0.0
        %2519 = vmatpush1.msra.mxu0 0.0
        %2520 = vmatprep.mubr.f32.mxu0 0.0
        %2521 = vmatmul.mubr.f32.gmra.mrb[0].mxu0 %v2451
        %v2522 = vpop.f32.mrb[0].mxu0
        %v2523 = vadd.f32 0.0, %v2522
        %v2524 = vpop.f32.mrb[0].mxu0
        %2525 = vdwg.mxu0
        %v2526 = vadd.f32 %v2360, %v2523
        %v2527 = vmul.f32 %v1854, %v1767
        %v2529 = vsel %vm1783, %v2527, 0
        %2531 = vmatprep.subr.mxu0 0.0
        %2532 = vmatpush1.xpose.msra.mxu0 %v2036
        %2533 = vmatprep.subr.mxu0 0.0
        %2534 = vmatpush1.xpose.msra.mxu0 0.0
        %2535 = vmatprep.subr.mxu0 0.0
        %2536 = vmatpush1.xpose.msra.mxu0 0.0
        %2537 = vmatprep.subr.mxu0 0.0
        %2538 = vmatpush1.xpose.msra.mxu0 0.0
        %2539 = vmatprep.subr.mxu0 0.0
        %2540 = vmatpush1.xpose.msra.mxu0 0.0
        %2541 = vmatprep.subr.mxu0 0.0
        %2542 = vmatpush1.xpose.msra.mxu0 0.0
        %2543 = vmatprep.subr.mxu0 0.0
        %2544 = vmatpush1.xpose.msra.mxu0 0.0
        %2545 = vmatprep.subr.mxu0 0.0
        %2546 = vmatpush1.xpose.msra.mxu0 0.0
        %2547 = vmatprep.subr.mxu0 0.0
        %2548 = vmatpush1.xpose.msra.mxu0 0.0
        %2549 = vmatprep.subr.mxu0 0.0
        %2550 = vmatpush1.xpose.msra.mxu0 0.0
        %2551 = vmatprep.subr.mxu0 0.0
        %2552 = vmatpush1.xpose.msra.mxu0 0.0
        %2553 = vmatprep.subr.mxu0 0.0
        %2554 = vmatpush1.xpose.msra.mxu0 0.0
        %2555 = vmatprep.subr.mxu0 0.0
        %2556 = vmatpush1.xpose.msra.mxu0 0.0
        %2557 = vmatprep.subr.mxu0 0.0
        %2558 = vmatpush1.xpose.msra.mxu0 0.0
        %2559 = vmatprep.subr.mxu0 0.0
        %2560 = vmatpush1.xpose.msra.mxu0 0.0
        %2561 = vmatprep.subr.mxu0 0.0
        %2562 = vmatpush1.xpose.msra.mxu0 0.0
        %2563 = vmatprep.subr.mxu0 0.0
        %2564 = vmatpush1.xpose.msra.mxu0 0.0
        %2565 = vmatprep.subr.mxu0 0.0
        %2566 = vmatpush1.xpose.msra.mxu0 0.0
        %2567 = vmatprep.subr.mxu0 0.0
        %2568 = vmatpush1.xpose.msra.mxu0 0.0
        %2569 = vmatprep.subr.mxu0 0.0
        %2570 = vmatpush1.xpose.msra.mxu0 0.0
        %2571 = vmatprep.subr.mxu0 0.0
        %2572 = vmatpush1.xpose.msra.mxu0 0.0
        %2573 = vmatprep.subr.mxu0 0.0
        %2574 = vmatpush1.xpose.msra.mxu0 0.0
        %2575 = vmatprep.subr.mxu0 0.0
        %2576 = vmatpush1.xpose.msra.mxu0 0.0
        %2577 = vmatprep.subr.mxu0 0.0
        %2578 = vmatpush1.xpose.msra.mxu0 0.0
        %2579 = vmatprep.subr.mxu0 0.0
        %2580 = vmatpush1.xpose.msra.mxu0 0.0
        %2581 = vmatprep.subr.mxu0 0.0
        %2582 = vmatpush1.xpose.msra.mxu0 0.0
        %2583 = vmatprep.subr.mxu0 0.0
        %2584 = vmatpush1.xpose.msra.mxu0 0.0
        %2585 = vmatprep.subr.mxu0 0.0
        %2586 = vmatpush1.xpose.msra.mxu0 0.0
        %2587 = vmatprep.subr.mxu0 0.0
        %2588 = vmatpush1.xpose.msra.mxu0 0.0
        %2589 = vmatprep.subr.mxu0 0.0
        %2590 = vmatpush1.xpose.msra.mxu0 0.0
        %2591 = vmatprep.subr.mxu0 0.0
        %2592 = vmatpush1.xpose.msra.mxu0 0.0
        %2593 = vmatprep.subr.mxu0 0.0
        %2594 = vmatpush1.xpose.msra.mxu0 0.0
        %2595 = vmatprep.mubr.f32.mxu0 0.0
        %2596 = vmatmul.mubr.f32.gmra.mrb[0].mxu0 %v2529
        %v2597 = vpop.f32.mrb[0].mxu0
        %v2598 = vadd.f32 0.0, %v2597
        %v2599 = vpop.f32.mrb[0].mxu0
        %2600 = vdwg.mxu0
        %v2601 = vmul.f32 %v2598, 0.25
        %v2602 = vsel %vm2109, %v2601, -inf
        %2603 = vmax.xlane.f32.xlu0 %v2602
        %v2604 = vpop.xlane.xlu0 %2603
        %v2605 = vsub.f32 %v2601, %v2604
        %v2606 = vmul.f32 %v2605, 1.442695
        %v2607 = vpow.pop %v2606
        %v2608 = vsel %vm2109, %v2607, 0.0
        %2609 = vadd.xlane.f32.xlu0 %v2608
        %v2610 = vpop.xlane.xlu0 %2609
        %v2611 = vrcp.pop %v2610
        %v2612 = vmul.f32 %v2607, %v2611
        %v2613 = vmul.f32 %v2028, %v1767
        %v2615 = vsel %vm2209, %v2612, 0
        %v2618 = vsel %vm2213, %v2613, 0
        %2620 = vmatprep.subr.mxu0 0.0
        %2621 = vmatpush1.msra.mxu0 %v2618
        %2622 = vmatprep.subr.mxu0 0.0
        %2623 = vmatpush1.msra.mxu0 0.0
        %2624 = vmatprep.subr.mxu0 0.0
        %2625 = vmatpush1.msra.mxu0 0.0
        %2626 = vmatprep.subr.mxu0 0.0
        %2627 = vmatpush1.msra.mxu0 0.0
        %2628 = vmatprep.subr.mxu0 0.0
        %2629 = vmatpush1.msra.mxu0 0.0
        %2630 = vmatprep.subr.mxu0 0.0
        %2631 = vmatpush1.msra.mxu0 0.0
        %2632 = vmatprep.subr.mxu0 0.0
        %2633 = vmatpush1.msra.mxu0 0.0
        %2634 = vmatprep.subr.mxu0 0.0
        %2635 = vmatpush1.msra.mxu0 0.0
        %2636 = vmatprep.subr.mxu0 0.0
        %2637 = vmatpush1.msra.mxu0 0.0
        %2638 = vmatprep.subr.mxu0 0.0
        %2639 = vmatpush1.msra.mxu0 0.0
        %2640 = vmatprep.subr.mxu0 0.0
        %2641 = vmatpush1.msra.mxu0 0.0
        %2642 = vmatprep.subr.mxu0 0.0
        %2643 = vmatpush1.msra.mxu0 0.0
        %2644 = vmatprep.subr.mxu0 0.0
        %2645 = vmatpush1.msra.mxu0 0.0
        %2646 = vmatprep.subr.mxu0 0.0
        %2647 = vmatpush1.msra.mxu0 0.0
        %2648 = vmatprep.subr.mxu0 0.0
        %2649 = vmatpush1.msra.mxu0 0.0
        %2650 = vmatprep.subr.mxu0 0.0
        %2651 = vmatpush1.msra.mxu0 0.0
        %2652 = vmatprep.subr.mxu0 0.0
        %2653 = vmatpush1.msra.mxu0 0.0
        %2654 = vmatprep.subr.mxu0 0.0
        %2655 = vmatpush1.msra.mxu0 0.0
        %2656 = vmatprep.subr.mxu0 0.0
        %2657 = vmatpush1.msra.mxu0 0.0
        %2658 = vmatprep.subr.mxu0 0.0
        %2659 = vmatpush1.msra.mxu0 0.0
        %2660 = vmatprep.subr.mxu0 0.0
        %2661 = vmatpush1.msra.mxu0 0.0
        %2662 = vmatprep.subr.mxu0 0.0
        %2663 = vmatpush1.msra.mxu0 0.0
        %2664 = vmatprep.subr.mxu0 0.0
        %2665 = vmatpush1.msra.mxu0 0.0
        %2666 = vmatprep.subr.mxu0 0.0
        %2667 = vmatpush1.msra.mxu0 0.0
        %2668 = vmatprep.subr.mxu0 0.0
        %2669 = vmatpush1.msra.mxu0 0.0
        %2670 = vmatprep.subr.mxu0 0.0
        %2671 = vmatpush1.msra.mxu0 0.0
        %2672 = vmatprep.subr.mxu0 0.0
        %2673 = vmatpush1.msra.mxu0 0.0
        %2674 = vmatprep.subr.mxu0 0.0
        %2675 = vmatpush1.msra.mxu0 0.0
        %2676 = vmatprep.subr.mxu0 0.0
        %2677 = vmatpush1.msra.mxu0 0.0
        %2678 = vmatprep.subr.mxu0 0.0
        %2679 = vmatpush1.msra.mxu0 0.0
        %2680 = vmatprep.subr.mxu0 0.0
        %2681 = vmatpush1.msra.mxu0 0.0
        %2682 = vmatprep.subr.mxu0 0.0
        %2683 = vmatpush1.msra.mxu0 0.0
        %2684 = vmatprep.mubr.f32.mxu0 0.0
        %2685 = vmatmul.mubr.f32.gmra.mrb[0].mxu0 %v2615
        %v2686 = vpop.f32.mrb[0].mxu0
        %v2687 = vadd.f32 0.0, %v2686
        %v2688 = vpop.f32.mrb[0].mxu0
        %2689 = vdwg.mxu0
        %v2690 = vadd.f32 %v2526, %v2687
        %v2691 = vld [vmem:[%s1436] sm:$0xff]
        %v2692 = vld [vmem:[%s1436 + $0x8] sm:$0xff]
        %v2693 = vld [vmem:[%s1436 + $0x10] sm:$0xff]
        %v2694 = vld [vmem:[%s1436 + $0x18] sm:$0xff]
        %v2695 = vld [vmem:[%s1436 + $0x20] sm:$0xff]
        %v2696 = vld [vmem:[%s1436 + $0x28] sm:$0xff]
        %v2697 = vld [vmem:[%s1436 + $0x30] sm:$0xff]
        %v2698 = vld [vmem:[%s1436 + $0x38] sm:$0xff]
        %v2699 = vld [vmem:[%s1191] sm:$0x1]
        %v2701 = vlaneseq
        %v2702 = vshrl.u32 %v2701, 7
        %v2703 = vsub.s32 0, %v2702
        %v2704 = vrot.slane %v2699, %v2703
        %v2707 = vsel %vm1783, %v2690, 0
        %2709 = vmatprep.subr.mxu0 0.0
        %2710 = vmatpush1.msra.mxu0 %v2691
        %2711 = vmatprep.subr.mxu0 0.0
        %2712 = vmatpush1.msra.mxu0 %v2692
        %2713 = vmatprep.subr.mxu0 0.0
        %2714 = vmatpush1.msra.mxu0 %v2693
        %2715 = vmatprep.subr.mxu0 0.0
        %2716 = vmatpush1.msra.mxu0 %v2694
        %2717 = vmatprep.subr.mxu0 0.0
        %2718 = vmatpush1.msra.mxu0 %v2695
        %2719 = vmatprep.subr.mxu0 0.0
        %2720 = vmatpush1.msra.mxu0 %v2696
        %2721 = vmatprep.subr.mxu0 0.0
        %2722 = vmatpush1.msra.mxu0 %v2697
        %2723 = vmatprep.subr.mxu0 0.0
        %2724 = vmatpush1.msra.mxu0 %v2698
        %2725 = vmatprep.subr.mxu0 0.0
        %2726 = vmatpush1.msra.mxu0 0.0
        %2727 = vmatprep.subr.mxu0 0.0
        %2728 = vmatpush1.msra.mxu0 0.0
        %2729 = vmatprep.subr.mxu0 0.0
        %2730 = vmatpush1.msra.mxu0 0.0
        %2731 = vmatprep.subr.mxu0 0.0
        %2732 = vmatpush1.msra.mxu0 0.0
        %2733 = vmatprep.subr.mxu0 0.0
        %2734 = vmatpush1.msra.mxu0 0.0
        %2735 = vmatprep.subr.mxu0 0.0
        %2736 = vmatpush1.msra.mxu0 0.0
        %2737 = vmatprep.subr.mxu0 0.0
        %2738 = vmatpush1.msra.mxu0 0.0
        %2739 = vmatprep.subr.mxu0 0.0
        %2740 = vmatpush1.msra.mxu0 0.0
        %2741 = vmatprep.subr.mxu0 0.0
        %2742 = vmatpush1.msra.mxu0 0.0
        %2743 = vmatprep.subr.mxu0 0.0
        %2744 = vmatpush1.msra.mxu0 0.0
        %2745 = vmatprep.subr.mxu0 0.0
        %2746 = vmatpush1.msra.mxu0 0.0
        %2747 = vmatprep.subr.mxu0 0.0
        %2748 = vmatpush1.msra.mxu0 0.0
        %2749 = vmatprep.subr.mxu0 0.0
        %2750 = vmatpush1.msra.mxu0 0.0
        %2751 = vmatprep.subr.mxu0 0.0
        %2752 = vmatpush1.msra.mxu0 0.0
        %2753 = vmatprep.subr.mxu0 0.0
        %2754 = vmatpush1.msra.mxu0 0.0
        %2755 = vmatprep.subr.mxu0 0.0
        %2756 = vmatpush1.msra.mxu0 0.0
        %2757 = vmatprep.subr.mxu0 0.0
        %2758 = vmatpush1.msra.mxu0 0.0
        %2759 = vmatprep.subr.mxu0 0.0
        %2760 = vmatpush1.msra.mxu0 0.0
        %2761 = vmatprep.subr.mxu0 0.0
        %2762 = vmatpush1.msra.mxu0 0.0
        %2763 = vmatprep.subr.mxu0 0.0
        %2764 = vmatpush1.msra.mxu0 0.0
        %2765 = vmatprep.subr.mxu0 0.0
        %2766 = vmatpush1.msra.mxu0 0.0
        %2767 = vmatprep.subr.mxu0 0.0
        %2768 = vmatpush1.msra.mxu0 0.0
        %2769 = vmatprep.subr.mxu0 0.0
        %2770 = vmatpush1.msra.mxu0 0.0
        %2771 = vmatprep.subr.mxu0 0.0
        %2772 = vmatpush1.msra.mxu0 0.0
        %2773 = vmatprep.mubr.f32.mxu0 0.0
        %2774 = vmatmul.mubr.f32.gmra.mrb[0].mxu0 %v2707
        %v2775 = vpop.f32.mrb[0].mxu0
        %v2776 = vadd.f32 %v2704, %v2775
        %v2777 = vpop.f32.mrb[0].mxu0
        %2778 = vdwg.mxu0
        %v2779 = vadd.f32 %v1743, %v2776
        %vm2780 = vcmask 521216
        %v2781 = vsel %vm2780, %v2779, 0.0
        %2782 = vadd.xlane.f32.xlu0 %v2781
        %v2783 = vpop.xlane.xlu0 %2782
        %v2784 = vrcp.pop 64.0
        %v2785 = vmul.f32 %v2783, %v2784
        %v2786 = vsub.f32 %v2779, %v2785
        %v2787 = vmul.f32 %v2786, %v2786
        %v2788 = vsel %vm2780, %v2787, 0.0
        %2789 = vadd.xlane.f32.xlu0 %v2788
        %v2790 = vpop.xlane.xlu0 %2789
        %v2791 = vmul.f32 %v2790, %v2784
        %v2792 = vadd.f32 %v2791, 1e-05
        %v2793 = vrsqrt.pop %v2792
        %v2794 = vmul.f32 %v2786, %v2793
        %v2795 = vld [vmem:[%s1252] sm:$0x1]
        %v2797 = vlaneseq
        %v2798 = vshrl.u32 %v2797, 7
        %v2799 = vsub.s32 0, %v2798
        %v2800 = vrot.slane %v2795, %v2799
        %v2802 = vmul.f32 %v2794, %v2800
        %v2803 = vld [vmem:[%s1261] sm:$0x1]
        %v2805 = vlaneseq
        %v2806 = vshrl.u32 %v2805, 7
        %v2807 = vsub.s32 0, %v2806
        %v2808 = vrot.slane %v2803, %v2807
        %v2810 = vadd.f32 %v2802, %v2808
        %v2811 = vld [vmem:[%s1441] sm:$0xff]
        %v2812 = vld [vmem:[%s1441 + $0x8] sm:$0xff]
        %v2813 = vld [vmem:[%s1441 + $0x10] sm:$0xff]
        %v2814 = vld [vmem:[%s1441 + $0x18] sm:$0xff]
        %v2815 = vld [vmem:[%s1441 + $0x20] sm:$0xff]
        %v2816 = vld [vmem:[%s1441 + $0x28] sm:$0xff]
        %v2817 = vld [vmem:[%s1441 + $0x30] sm:$0xff]
        %v2818 = vld [vmem:[%s1441 + $0x38] sm:$0xff]
        %v2819 = vld [vmem:[%s1200] sm:$0x1]
        %v2821 = vlaneseq
        %v2822 = vshrl.u32 %v2821, 7
        %v2823 = vsub.s32 0, %v2822
        %v2824 = vrot.slane %v2819, %v2823
        %v2827 = vsel %vm1783, %v2810, 0
        %2829 = vmatprep.subr.mxu0 0.0
        %2830 = vmatpush1.msra.mxu0 %v2811
        %2831 = vmatprep.subr.mxu0 0.0
        %2832 = vmatpush1.msra.mxu0 %v2812
        %2833 = vmatprep.subr.mxu0 0.0
        %2834 = vmatpush1.msra.mxu0 %v2813
        %2835 = vmatprep.subr.mxu0 0.0
        %2836 = vmatpush1.msra.mxu0 %v2814
        %2837 = vmatprep.subr.mxu0 0.0
        %2838 = vmatpush1.msra.mxu0 %v2815
        %2839 = vmatprep.subr.mxu0 0.0
        %2840 = vmatpush1.msra.mxu0 %v2816
        %2841 = vmatprep.subr.mxu0 0.0
        %2842 = vmatpush1.msra.mxu0 %v2817
        %2843 = vmatprep.subr.mxu0 0.0
        %2844 = vmatpush1.msra.mxu0 %v2818
        %2845 = vmatprep.subr.mxu0 0.0
        %2846 = vmatpush1.msra.mxu0 0.0
        %2847 = vmatprep.subr.mxu0 0.0
        %2848 = vmatpush1.msra.mxu0 0.0
        %2849 = vmatprep.subr.mxu0 0.0
        %2850 = vmatpush1.msra.mxu0 0.0
        %2851 = vmatprep.subr.mxu0 0.0
        %2852 = vmatpush1.msra.mxu0 0.0
        %2853 = vmatprep.subr.mxu0 0.0
        %2854 = vmatpush1.msra.mxu0 0.0
        %2855 = vmatprep.subr.mxu0 0.0
        %2856 = vmatpush1.msra.mxu0 0.0
        %2857 = vmatprep.subr.mxu0 0.0
        %2858 = vmatpush1.msra.mxu0 0.0
        %2859 = vmatprep.subr.mxu0 0.0
        %2860 = vmatpush1.msra.mxu0 0.0
        %2861 = vmatprep.subr.mxu0 0.0
        %2862 = vmatpush1.msra.mxu0 0.0
        %2863 = vmatprep.subr.mxu0 0.0
        %2864 = vmatpush1.msra.mxu0 0.0
        %2865 = vmatprep.subr.mxu0 0.0
        %2866 = vmatpush1.msra.mxu0 0.0
        %2867 = vmatprep.subr.mxu0 0.0
        %2868 = vmatpush1.msra.mxu0 0.0
        %2869 = vmatprep.subr.mxu0 0.0
        %2870 = vmatpush1.msra.mxu0 0.0
        %2871 = vmatprep.subr.mxu0 0.0
        %2872 = vmatpush1.msra.mxu0 0.0
        %2873 = vmatprep.subr.mxu0 0.0
        %2874 = vmatpush1.msra.mxu0 0.0
        %2875 = vmatprep.subr.mxu0 0.0
        %2876 = vmatpush1.msra.mxu0 0.0
        %2877 = vmatprep.subr.mxu0 0.0
        %2878 = vmatpush1.msra.mxu0 0.0
        %2879 = vmatprep.subr.mxu0 0.0
        %2880 = vmatpush1.msra.mxu0 0.0
        %2881 = vmatprep.subr.mxu0 0.0
        %2882 = vmatpush1.msra.mxu0 0.0
        %2883 = vmatprep.subr.mxu0 0.0
        %2884 = vmatpush1.msra.mxu0 0.0
        %2885 = vmatprep.subr.mxu0 0.0
        %2886 = vmatpush1.msra.mxu0 0.0
        %2887 = vmatprep.subr.mxu0 0.0
        %2888 = vmatpush1.msra.mxu0 0.0
        %2889 = vmatprep.subr.mxu0 0.0
        %2890 = vmatpush1.msra.mxu0 0.0
        %2891 = vmatprep.subr.mxu0 0.0
        %2892 = vmatpush1.msra.mxu0 0.0
        %2893 = vmatprep.mubr.f32.mxu0 0.0
        %2894 = vmatmul.mubr.f32.gmra.mrb[0].mxu0 %v2827
        %v2895 = vpop.f32.mrb[0].mxu0
        %v2896 = vadd.f32 %v2824, %v2895
        %v2897 = vpop.f32.mrb[0].mxu0
        %2898 = vdwg.mxu0
        %s2899 = scalar_lea.vmem %s1441, 64
        %v2900 = vld [vmem:[%s2899] sm:$0xff]
        %v2901 = vld [vmem:[%s2899 + $0x8] sm:$0xff]
        %v2902 = vld [vmem:[%s2899 + $0x10] sm:$0xff]
        %v2903 = vld [vmem:[%s2899 + $0x18] sm:$0xff]
        %v2904 = vld [vmem:[%s2899 + $0x20] sm:$0xff]
        %v2905 = vld [vmem:[%s2899 + $0x28] sm:$0xff]
        %v2906 = vld [vmem:[%s2899 + $0x30] sm:$0xff]
        %v2907 = vld [vmem:[%s2899 + $0x38] sm:$0xff]
        %s2908 = scalar_lea.vmem %s1200, 1 [#allocation12]
        %v2909 = vld [vmem:[%s2908] sm:$0x1]
        %v2911 = vlaneseq
        %v2912 = vshrl.u32 %v2911, 7
        %v2913 = vsub.s32 0, %v2912
        %v2914 = vrot.slane %v2909, %v2913
        %v2917 = vsel %vm1783, %v1744, 0
        %2919 = vmatprep.subr.mxu0 0.0
        %2920 = vmatpush1.msra.mxu0 %v2900
        %2921 = vmatprep.subr.mxu0 0.0
        %2922 = vmatpush1.msra.mxu0 %v2901
        %2923 = vmatprep.subr.mxu0 0.0
        %2924 = vmatpush1.msra.mxu0 %v2902
        %2925 = vmatprep.subr.mxu0 0.0
        %2926 = vmatpush1.msra.mxu0 %v2903
        %2927 = vmatprep.subr.mxu0 0.0
        %2928 = vmatpush1.msra.mxu0 %v2904
        %2929 = vmatprep.subr.mxu0 0.0
        %2930 = vmatpush1.msra.mxu0 %v2905
        %2931 = vmatprep.subr.mxu0 0.0
        %2932 = vmatpush1.msra.mxu0 %v2906
        %2933 = vmatprep.subr.mxu0 0.0
        %2934 = vmatpush1.msra.mxu0 %v2907
        %2935 = vmatprep.subr.mxu0 0.0
        %2936 = vmatpush1.msra.mxu0 0.0
        %2937 = vmatprep.subr.mxu0 0.0
        %2938 = vmatpush1.msra.mxu0 0.0
        %2939 = vmatprep.subr.mxu0 0.0
        %2940 = vmatpush1.msra.mxu0 0.0
        %2941 = vmatprep.subr.mxu0 0.0
        %2942 = vmatpush1.msra.mxu0 0.0
        %2943 = vmatprep.subr.mxu0 0.0
        %2944 = vmatpush1.msra.mxu0 0.0
        %2945 = vmatprep.subr.mxu0 0.0
        %2946 = vmatpush1.msra.mxu0 0.0
        %2947 = vmatprep.subr.mxu0 0.0
        %2948 = vmatpush1.msra.mxu0 0.0
        %2949 = vmatprep.subr.mxu0 0.0
        %2950 = vmatpush1.msra.mxu0 0.0
        %2951 = vmatprep.subr.mxu0 0.0
        %2952 = vmatpush1.msra.mxu0 0.0
        %2953 = vmatprep.subr.mxu0 0.0
        %2954 = vmatpush1.msra.mxu0 0.0
        %2955 = vmatprep.subr.mxu0 0.0
        %2956 = vmatpush1.msra.mxu0 0.0
        %2957 = vmatprep.subr.mxu0 0.0
        %2958 = vmatpush1.msra.mxu0 0.0
        %2959 = vmatprep.subr.mxu0 0.0
        %2960 = vmatpush1.msra.mxu0 0.0
        %2961 = vmatprep.subr.mxu0 0.0
        %2962 = vmatpush1.msra.mxu0 0.0
        %2963 = vmatprep.subr.mxu0 0.0
        %2964 = vmatpush1.msra.mxu0 0.0
        %2965 = vmatprep.subr.mxu0 0.0
        %2966 = vmatpush1.msra.mxu0 0.0
        %2967 = vmatprep.subr.mxu0 0.0
        %2968 = vmatpush1.msra.mxu0 0.0
        %2969 = vmatprep.subr.mxu0 0.0
        %2970 = vmatpush1.msra.mxu0 0.0
        %2971 = vmatprep.subr.mxu0 0.0
        %2972 = vmatpush1.msra.mxu0 0.0
        %2973 = vmatprep.subr.mxu0 0.0
        %2974 = vmatpush1.msra.mxu0 0.0
        %2975 = vmatprep.subr.mxu0 0.0
        %2976 = vmatpush1.msra.mxu0 0.0
        %2977 = vmatprep.subr.mxu0 0.0
        %2978 = vmatpush1.msra.mxu0 0.0
        %2979 = vmatprep.subr.mxu0 0.0
        %2980 = vmatpush1.msra.mxu0 0.0
        %2981 = vmatprep.subr.mxu0 0.0
        %2982 = vmatpush1.msra.mxu0 0.0
        %2983 = vmatprep.mubr.f32.mxu0 0.0
        %2984 = vmatmul.mubr.f32.gmra.mrb[0].mxu0 %v2917
        %v2985 = vpop.f32.mrb[0].mxu0
        %v2986 = vadd.f32 %v2914, %v2985
        %v2987 = vpop.f32.mrb[0].mxu0
        %2988 = vdwg.mxu0
        %s2989 = scalar_lea.vmem %s1441, 128
        %v2990 = vld [vmem:[%s2989] sm:$0xff]
        %v2991 = vld [vmem:[%s2989 + $0x8] sm:$0xff]
        %v2992 = vld [vmem:[%s2989 + $0x10] sm:$0xff]
        %v2993 = vld [vmem:[%s2989 + $0x18] sm:$0xff]
        %v2994 = vld [vmem:[%s2989 + $0x20] sm:$0xff]
        %v2995 = vld [vmem:[%s2989 + $0x28] sm:$0xff]
        %v2996 = vld [vmem:[%s2989 + $0x30] sm:$0xff]
        %v2997 = vld [vmem:[%s2989 + $0x38] sm:$0xff]
        %s2998 = scalar_lea.vmem %s1200, 2 [#allocation12]
        %v2999 = vld [vmem:[%s2998] sm:$0x1]
        %v3001 = vlaneseq
        %v3002 = vshrl.u32 %v3001, 7
        %v3003 = vsub.s32 0, %v3002
        %v3004 = vrot.slane %v2999, %v3003
        %3006 = vmatprep.subr.mxu0 0.0
        %3007 = vmatpush1.msra.mxu0 %v2990
        %3008 = vmatprep.subr.mxu0 0.0
        %3009 = vmatpush1.msra.mxu0 %v2991
        %3010 = vmatprep.subr.mxu0 0.0
        %3011 = vmatpush1.msra.mxu0 %v2992
        %3012 = vmatprep.subr.mxu0 0.0
        %3013 = vmatpush1.msra.mxu0 %v2993
        %3014 = vmatprep.subr.mxu0 0.0
        %3015 = vmatpush1.msra.mxu0 %v2994
        %3016 = vmatprep.subr.mxu0 0.0
        %3017 = vmatpush1.msra.mxu0 %v2995
        %3018 = vmatprep.subr.mxu0 0.0
        %3019 = vmatpush1.msra.mxu0 %v2996
        %3020 = vmatprep.subr.mxu0 0.0
        %3021 = vmatpush1.msra.mxu0 %v2997
        %3022 = vmatprep.subr.mxu0 0.0
        %3023 = vmatpush1.msra.mxu0 0.0
        %3024 = vmatprep.subr.mxu0 0.0
        %3025 = vmatpush1.msra.mxu0 0.0
        %3026 = vmatprep.subr.mxu0 0.0
        %3027 = vmatpush1.msra.mxu0 0.0
        %3028 = vmatprep.subr.mxu0 0.0
        %3029 = vmatpush1.msra.mxu0 0.0
        %3030 = vmatprep.subr.mxu0 0.0
        %3031 = vmatpush1.msra.mxu0 0.0
        %3032 = vmatprep.subr.mxu0 0.0
        %3033 = vmatpush1.msra.mxu0 0.0
        %3034 = vmatprep.subr.mxu0 0.0
        %3035 = vmatpush1.msra.mxu0 0.0
        %3036 = vmatprep.subr.mxu0 0.0
        %3037 = vmatpush1.msra.mxu0 0.0
        %3038 = vmatprep.subr.mxu0 0.0
        %3039 = vmatpush1.msra.mxu0 0.0
        %3040 = vmatprep.subr.mxu0 0.0
        %3041 = vmatpush1.msra.mxu0 0.0
        %3042 = vmatprep.subr.mxu0 0.0
        %3043 = vmatpush1.msra.mxu0 0.0
        %3044 = vmatprep.subr.mxu0 0.0
        %3045 = vmatpush1.msra.mxu0 0.0
        %3046 = vmatprep.subr.mxu0 0.0
        %3047 = vmatpush1.msra.mxu0 0.0
        %3048 = vmatprep.subr.mxu0 0.0
        %3049 = vmatpush1.msra.mxu0 0.0
        %3050 = vmatprep.subr.mxu0 0.0
        %3051 = vmatpush1.msra.mxu0 0.0
        %3052 = vmatprep.subr.mxu0 0.0
        %3053 = vmatpush1.msra.mxu0 0.0
        %3054 = vmatprep.subr.mxu0 0.0
        %3055 = vmatpush1.msra.mxu0 0.0
        %3056 = vmatprep.subr.mxu0 0.0
        %3057 = vmatpush1.msra.mxu0 0.0
        %3058 = vmatprep.subr.mxu0 0.0
        %3059 = vmatpush1.msra.mxu0 0.0
        %3060 = vmatprep.subr.mxu0 0.0
        %3061 = vmatpush1.msra.mxu0 0.0
        %3062 = vmatprep.subr.mxu0 0.0
        %3063 = vmatpush1.msra.mxu0 0.0
        %3064 = vmatprep.subr.mxu0 0.0
        %3065 = vmatpush1.msra.mxu0 0.0
        %3066 = vmatprep.subr.mxu0 0.0
        %3067 = vmatpush1.msra.mxu0 0.0
        %3068 = vmatprep.subr.mxu0 0.0
        %3069 = vmatpush1.msra.mxu0 0.0
        %3070 = vmatprep.mubr.f32.mxu0 0.0
        %3071 = vmatmul.mubr.f32.gmra.mrb[0].mxu0 %v2917
        %v3072 = vpop.f32.mrb[0].mxu0
        %v3073 = vadd.f32 %v3004, %v3072
        %v3074 = vpop.f32.mrb[0].mxu0
        %3075 = vdwg.mxu0
        %v3076 = vmul.f32 %v2896, %v1752
        %v3078 = vsel %vm1783, %v3076, 0
        %v3081 = vsel %vm1783, %v2986, 0
        %3083 = vmatprep.subr.mxu0 0.0
        %3084 = vmatpush1.xpose.msra.mxu0 %v3081
        %3085 = vmatprep.subr.mxu0 0.0
        %3086 = vmatpush1.xpose.msra.mxu0 0.0
        %3087 = vmatprep.subr.mxu0 0.0
        %3088 = vmatpush1.xpose.msra.mxu0 0.0
        %3089 = vmatprep.subr.mxu0 0.0
        %3090 = vmatpush1.xpose.msra.mxu0 0.0
        %3091 = vmatprep.subr.mxu0 0.0
        %3092 = vmatpush1.xpose.msra.mxu0 0.0
        %3093 = vmatprep.subr.mxu0 0.0
        %3094 = vmatpush1.xpose.msra.mxu0 0.0
        %3095 = vmatprep.subr.mxu0 0.0
        %3096 = vmatpush1.xpose.msra.mxu0 0.0
        %3097 = vmatprep.subr.mxu0 0.0
        %3098 = vmatpush1.xpose.msra.mxu0 0.0
        %3099 = vmatprep.subr.mxu0 0.0
        %3100 = vmatpush1.xpose.msra.mxu0 0.0
        %3101 = vmatprep.subr.mxu0 0.0
        %3102 = vmatpush1.xpose.msra.mxu0 0.0
        %3103 = vmatprep.subr.mxu0 0.0
        %3104 = vmatpush1.xpose.msra.mxu0 0.0
        %3105 = vmatprep.subr.mxu0 0.0
        %3106 = vmatpush1.xpose.msra.mxu0 0.0
        %3107 = vmatprep.subr.mxu0 0.0
        %3108 = vmatpush1.xpose.msra.mxu0 0.0
        %3109 = vmatprep.subr.mxu0 0.0
        %3110 = vmatpush1.xpose.msra.mxu0 0.0
        %3111 = vmatprep.subr.mxu0 0.0
        %3112 = vmatpush1.xpose.msra.mxu0 0.0
        %3113 = vmatprep.subr.mxu0 0.0
        %3114 = vmatpush1.xpose.msra.mxu0 0.0
        %3115 = vmatprep.subr.mxu0 0.0
        %3116 = vmatpush1.xpose.msra.mxu0 0.0
        %3117 = vmatprep.subr.mxu0 0.0
        %3118 = vmatpush1.xpose.msra.mxu0 0.0
        %3119 = vmatprep.subr.mxu0 0.0
        %3120 = vmatpush1.xpose.msra.mxu0 0.0
        %3121 = vmatprep.subr.mxu0 0.0
        %3122 = vmatpush1.xpose.msra.mxu0 0.0
        %3123 = vmatprep.subr.mxu0 0.0
        %3124 = vmatpush1.xpose.msra.mxu0 0.0
        %3125 = vmatprep.subr.mxu0 0.0
        %3126 = vmatpush1.xpose.msra.mxu0 0.0
        %3127 = vmatprep.subr.mxu0 0.0
        %3128 = vmatpush1.xpose.msra.mxu0 0.0
        %3129 = vmatprep.subr.mxu0 0.0
        %3130 = vmatpush1.xpose.msra.mxu0 0.0
        %3131 = vmatprep.subr.mxu0 0.0
        %3132 = vmatpush1.xpose.msra.mxu0 0.0
        %3133 = vmatprep.subr.mxu0 0.0
        %3134 = vmatpush1.xpose.msra.mxu0 0.0
        %3135 = vmatprep.subr.mxu0 0.0
        %3136 = vmatpush1.xpose.msra.mxu0 0.0
        %3137 = vmatprep.subr.mxu0 0.0
        %3138 = vmatpush1.xpose.msra.mxu0 0.0
        %3139 = vmatprep.subr.mxu0 0.0
        %3140 = vmatpush1.xpose.msra.mxu0 0.0
        %3141 = vmatprep.subr.mxu0 0.0
        %3142 = vmatpush1.xpose.msra.mxu0 0.0
        %3143 = vmatprep.subr.mxu0 0.0
        %3144 = vmatpush1.xpose.msra.mxu0 0.0
        %3145 = vmatprep.subr.mxu0 0.0
        %3146 = vmatpush1.xpose.msra.mxu0 0.0
        %3147 = vmatprep.mubr.f32.mxu0 0.0
        %3148 = vmatmul.mubr.f32.gmra.mrb[0].mxu0 %v3078
        %v3149 = vpop.f32.mrb[0].mxu0
        %v3150 = vadd.f32 0.0, %v3149
        %v3151 = vpop.f32.mrb[0].mxu0
        %3152 = vdwg.mxu0
        %v3153 = vmul.f32 %v3150, 0.25
        %v3154 = vadd.f32 %v3153, %v1745
        %v3155 = vsel %vm2109, %v3154, -inf
        %3156 = vmax.xlane.f32.xlu0 %v3155
        %v3157 = vpop.xlane.xlu0 %3156
        %v3158 = vsub.f32 %v3154, %v3157
        %v3159 = vmul.f32 %v3158, 1.442695
        %v3160 = vpow.pop %v3159
        %v3161 = vsel %vm2109, %v3160, 0.0
        %3162 = vadd.xlane.f32.xlu0 %v3161
        %v3163 = vpop.xlane.xlu0 %3162
        %v3164 = vrcp.pop %v3163
        %v3165 = vmul.f32 %v3160, %v3164
        %v3166 = vmul.f32 %v3073, %v1752
        %v3167 = vmul.f32 %v2896, %v1757
        %v3169 = vsel %vm1783, %v3167, 0
        %3171 = vmatprep.subr.mxu0 0.0
        %3172 = vmatpush1.xpose.msra.mxu0 %v3081
        %3173 = vmatprep.subr.mxu0 0.0
        %3174 = vmatpush1.xpose.msra.mxu0 0.0
        %3175 = vmatprep.subr.mxu0 0.0
        %3176 = vmatpush1.xpose.msra.mxu0 0.0
        %3177 = vmatprep.subr.mxu0 0.0
        %3178 = vmatpush1.xpose.msra.mxu0 0.0
        %3179 = vmatprep.subr.mxu0 0.0
        %3180 = vmatpush1.xpose.msra.mxu0 0.0
        %3181 = vmatprep.subr.mxu0 0.0
        %3182 = vmatpush1.xpose.msra.mxu0 0.0
        %3183 = vmatprep.subr.mxu0 0.0
        %3184 = vmatpush1.xpose.msra.mxu0 0.0
        %3185 = vmatprep.subr.mxu0 0.0
        %3186 = vmatpush1.xpose.msra.mxu0 0.0
        %3187 = vmatprep.subr.mxu0 0.0
        %3188 = vmatpush1.xpose.msra.mxu0 0.0
        %3189 = vmatprep.subr.mxu0 0.0
        %3190 = vmatpush1.xpose.msra.mxu0 0.0
        %3191 = vmatprep.subr.mxu0 0.0
        %3192 = vmatpush1.xpose.msra.mxu0 0.0
        %3193 = vmatprep.subr.mxu0 0.0
        %3194 = vmatpush1.xpose.msra.mxu0 0.0
        %3195 = vmatprep.subr.mxu0 0.0
        %3196 = vmatpush1.xpose.msra.mxu0 0.0
        %3197 = vmatprep.subr.mxu0 0.0
        %3198 = vmatpush1.xpose.msra.mxu0 0.0
        %3199 = vmatprep.subr.mxu0 0.0
        %3200 = vmatpush1.xpose.msra.mxu0 0.0
        %3201 = vmatprep.subr.mxu0 0.0
        %3202 = vmatpush1.xpose.msra.mxu0 0.0
        %3203 = vmatprep.subr.mxu0 0.0
        %3204 = vmatpush1.xpose.msra.mxu0 0.0
        %3205 = vmatprep.subr.mxu0 0.0
        %3206 = vmatpush1.xpose.msra.mxu0 0.0
        %3207 = vmatprep.subr.mxu0 0.0
        %3208 = vmatpush1.xpose.msra.mxu0 0.0
        %3209 = vmatprep.subr.mxu0 0.0
        %3210 = vmatpush1.xpose.msra.mxu0 0.0
        %3211 = vmatprep.subr.mxu0 0.0
        %3212 = vmatpush1.xpose.msra.mxu0 0.0
        %3213 = vmatprep.subr.mxu0 0.0
        %3214 = vmatpush1.xpose.msra.mxu0 0.0
        %3215 = vmatprep.subr.mxu0 0.0
        %3216 = vmatpush1.xpose.msra.mxu0 0.0
        %3217 = vmatprep.subr.mxu0 0.0
        %3218 = vmatpush1.xpose.msra.mxu0 0.0
        %3219 = vmatprep.subr.mxu0 0.0
        %3220 = vmatpush1.xpose.msra.mxu0 0.0
        %3221 = vmatprep.subr.mxu0 0.0
        %3222 = vmatpush1.xpose.msra.mxu0 0.0
        %3223 = vmatprep.subr.mxu0 0.0
        %3224 = vmatpush1.xpose.msra.mxu0 0.0
        %3225 = vmatprep.subr.mxu0 0.0
        %3226 = vmatpush1.xpose.msra.mxu0 0.0
        %3227 = vmatprep.subr.mxu0 0.0
        %3228 = vmatpush1.xpose.msra.mxu0 0.0
        %3229 = vmatprep.subr.mxu0 0.0
        %3230 = vmatpush1.xpose.msra.mxu0 0.0
        %3231 = vmatprep.subr.mxu0 0.0
        %3232 = vmatpush1.xpose.msra.mxu0 0.0
        %3233 = vmatprep.subr.mxu0 0.0
        %3234 = vmatpush1.xpose.msra.mxu0 0.0
        %3235 = vmatprep.mubr.f32.mxu0 0.0
        %3236 = vmatmul.mubr.f32.gmra.mrb[0].mxu0 %v3169
        %v3237 = vpop.f32.mrb[0].mxu0
        %v3238 = vadd.f32 0.0, %v3237
        %v3239 = vpop.f32.mrb[0].mxu0
        %3240 = vdwg.mxu0
        %v3241 = vmul.f32 %v3238, 0.25
        %v3242 = vadd.f32 %v3241, %v1745
        %v3243 = vsel %vm2109, %v3242, -inf
        %3244 = vmax.xlane.f32.xlu0 %v3243
        %v3245 = vpop.xlane.xlu0 %3244
        %v3246 = vsub.f32 %v3242, %v3245
        %v3247 = vmul.f32 %v3246, 1.442695
        %v3248 = vpow.pop %v3247
        %v3249 = vsel %vm2109, %v3248, 0.0
        %3250 = vadd.xlane.f32.xlu0 %v3249
        %v3251 = vpop.xlane.xlu0 %3250
        %v3252 = vrcp.pop %v3251
        %v3253 = vmul.f32 %v3248, %v3252
        %v3254 = vmul.f32 %v3073, %v1757
        %v3256 = vsel %vm2209, %v3253, 0
        %v3259 = vsel %vm2213, %v3254, 0
        %3261 = vmatprep.subr.mxu0 0.0
        %3262 = vmatpush1.msra.mxu0 %v3259
        %3263 = vmatprep.subr.mxu0 0.0
        %3264 = vmatpush1.msra.mxu0 0.0
        %3265 = vmatprep.subr.mxu0 0.0
        %3266 = vmatpush1.msra.mxu0 0.0
        %3267 = vmatprep.subr.mxu0 0.0
        %3268 = vmatpush1.msra.mxu0 0.0
        %3269 = vmatprep.subr.mxu0 0.0
        %3270 = vmatpush1.msra.mxu0 0.0
        %3271 = vmatprep.subr.mxu0 0.0
        %3272 = vmatpush1.msra.mxu0 0.0
        %3273 = vmatprep.subr.mxu0 0.0
        %3274 = vmatpush1.msra.mxu0 0.0
        %3275 = vmatprep.subr.mxu0 0.0
        %3276 = vmatpush1.msra.mxu0 0.0
        %3277 = vmatprep.subr.mxu0 0.0
        %3278 = vmatpush1.msra.mxu0 0.0
        %3279 = vmatprep.subr.mxu0 0.0
        %3280 = vmatpush1.msra.mxu0 0.0
        %3281 = vmatprep.subr.mxu0 0.0
        %3282 = vmatpush1.msra.mxu0 0.0
        %3283 = vmatprep.subr.mxu0 0.0
        %3284 = vmatpush1.msra.mxu0 0.0
        %3285 = vmatprep.subr.mxu0 0.0
        %3286 = vmatpush1.msra.mxu0 0.0
        %3287 = vmatprep.subr.mxu0 0.0
        %3288 = vmatpush1.msra.mxu0 0.0
        %3289 = vmatprep.subr.mxu0 0.0
        %3290 = vmatpush1.msra.mxu0 0.0
        %3291 = vmatprep.subr.mxu0 0.0
        %3292 = vmatpush1.msra.mxu0 0.0
        %3293 = vmatprep.subr.mxu0 0.0
        %3294 = vmatpush1.msra.mxu0 0.0
        %3295 = vmatprep.subr.mxu0 0.0
        %3296 = vmatpush1.msra.mxu0 0.0
        %3297 = vmatprep.subr.mxu0 0.0
        %3298 = vmatpush1.msra.mxu0 0.0
        %3299 = vmatprep.subr.mxu0 0.0
        %3300 = vmatpush1.msra.mxu0 0.0
        %3301 = vmatprep.subr.mxu0 0.0
        %3302 = vmatpush1.msra.mxu0 0.0
        %3303 = vmatprep.subr.mxu0 0.0
        %3304 = vmatpush1.msra.mxu0 0.0
        %3305 = vmatprep.subr.mxu0 0.0
        %3306 = vmatpush1.msra.mxu0 0.0
        %3307 = vmatprep.subr.mxu0 0.0
        %3308 = vmatpush1.msra.mxu0 0.0
        %3309 = vmatprep.subr.mxu0 0.0
        %3310 = vmatpush1.msra.mxu0 0.0
        %3311 = vmatprep.subr.mxu0 0.0
        %3312 = vmatpush1.msra.mxu0 0.0
        %3313 = vmatprep.subr.mxu0 0.0
        %3314 = vmatpush1.msra.mxu0 0.0
        %3315 = vmatprep.subr.mxu0 0.0
        %3316 = vmatpush1.msra.mxu0 0.0
        %3317 = vmatprep.subr.mxu0 0.0
        %3318 = vmatpush1.msra.mxu0 0.0
        %3319 = vmatprep.subr.mxu0 0.0
        %3320 = vmatpush1.msra.mxu0 0.0
        %3321 = vmatprep.subr.mxu0 0.0
        %3322 = vmatpush1.msra.mxu0 0.0
        %3323 = vmatprep.subr.mxu0 0.0
        %3324 = vmatpush1.msra.mxu0 0.0
        %3325 = vmatprep.mubr.f32.mxu0 0.0
        %3326 = vmatmul.mubr.f32.gmra.mrb[0].mxu0 %v3256
        %v3327 = vpop.f32.mrb[0].mxu0
        %v3328 = vadd.f32 0.0, %v3327
        %v3329 = vpop.f32.mrb[0].mxu0
        %3330 = vdwg.mxu0
        %v3332 = vsel %vm2209, %v3165, 0
        %v3335 = vsel %vm2213, %v3166, 0
        %3337 = vmatprep.subr.mxu0 0.0
        %3338 = vmatpush1.msra.mxu0 %v3335
        %3339 = vmatprep.subr.mxu0 0.0
        %3340 = vmatpush1.msra.mxu0 0.0
        %3341 = vmatprep.subr.mxu0 0.0
        %3342 = vmatpush1.msra.mxu0 0.0
        %3343 = vmatprep.subr.mxu0 0.0
        %3344 = vmatpush1.msra.mxu0 0.0
        %3345 = vmatprep.subr.mxu0 0.0
        %3346 = vmatpush1.msra.mxu0 0.0
        %3347 = vmatprep.subr.mxu0 0.0
        %3348 = vmatpush1.msra.mxu0 0.0
        %3349 = vmatprep.subr.mxu0 0.0
        %3350 = vmatpush1.msra.mxu0 0.0
        %3351 = vmatprep.subr.mxu0 0.0
        %3352 = vmatpush1.msra.mxu0 0.0
        %3353 = vmatprep.subr.mxu0 0.0
        %3354 = vmatpush1.msra.mxu0 0.0
        %3355 = vmatprep.subr.mxu0 0.0
        %3356 = vmatpush1.msra.mxu0 0.0
        %3357 = vmatprep.subr.mxu0 0.0
        %3358 = vmatpush1.msra.mxu0 0.0
        %3359 = vmatprep.subr.mxu0 0.0
        %3360 = vmatpush1.msra.mxu0 0.0
        %3361 = vmatprep.subr.mxu0 0.0
        %3362 = vmatpush1.msra.mxu0 0.0
        %3363 = vmatprep.subr.mxu0 0.0
        %3364 = vmatpush1.msra.mxu0 0.0
        %3365 = vmatprep.subr.mxu0 0.0
        %3366 = vmatpush1.msra.mxu0 0.0
        %3367 = vmatprep.subr.mxu0 0.0
        %3368 = vmatpush1.msra.mxu0 0.0
        %3369 = vmatprep.subr.mxu0 0.0
        %3370 = vmatpush1.msra.mxu0 0.0
        %3371 = vmatprep.subr.mxu0 0.0
        %3372 = vmatpush1.msra.mxu0 0.0
        %3373 = vmatprep.subr.mxu0 0.0
        %3374 = vmatpush1.msra.mxu0 0.0
        %3375 = vmatprep.subr.mxu0 0.0
        %3376 = vmatpush1.msra.mxu0 0.0
        %3377 = vmatprep.subr.mxu0 0.0
        %3378 = vmatpush1.msra.mxu0 0.0
        %3379 = vmatprep.subr.mxu0 0.0
        %3380 = vmatpush1.msra.mxu0 0.0
        %3381 = vmatprep.subr.mxu0 0.0
        %3382 = vmatpush1.msra.mxu0 0.0
        %3383 = vmatprep.subr.mxu0 0.0
        %3384 = vmatpush1.msra.mxu0 0.0
        %3385 = vmatprep.subr.mxu0 0.0
        %3386 = vmatpush1.msra.mxu0 0.0
        %3387 = vmatprep.subr.mxu0 0.0
        %3388 = vmatpush1.msra.mxu0 0.0
        %3389 = vmatprep.subr.mxu0 0.0
        %3390 = vmatpush1.msra.mxu0 0.0
        %3391 = vmatprep.subr.mxu0 0.0
        %3392 = vmatpush1.msra.mxu0 0.0
        %3393 = vmatprep.subr.mxu0 0.0
        %3394 = vmatpush1.msra.mxu0 0.0
        %3395 = vmatprep.subr.mxu0 0.0
        %3396 = vmatpush1.msra.mxu0 0.0
        %3397 = vmatprep.subr.mxu0 0.0
        %3398 = vmatpush1.msra.mxu0 0.0
        %3399 = vmatprep.subr.mxu0 0.0
        %3400 = vmatpush1.msra.mxu0 0.0
        %3401 = vmatprep.mubr.f32.mxu0 0.0
        %3402 = vmatmul.mubr.f32.gmra.mrb[0].mxu0 %v3332
        %v3403 = vpop.f32.mrb[0].mxu0
        %v3404 = vadd.f32 %v3328, %v3403
        %v3405 = vpop.f32.mrb[0].mxu0
        %3406 = vdwg.mxu0
        %v3407 = vmul.f32 %v2896, %v1762
        %v3409 = vsel %vm1783, %v3407, 0
        %3411 = vmatprep.subr.mxu0 0.0
        %3412 = vmatpush1.xpose.msra.mxu0 %v3081
        %3413 = vmatprep.subr.mxu0 0.0
        %3414 = vmatpush1.xpose.msra.mxu0 0.0
        %3415 = vmatprep.subr.mxu0 0.0
        %3416 = vmatpush1.xpose.msra.mxu0 0.0
        %3417 = vmatprep.subr.mxu0 0.0
        %3418 = vmatpush1.xpose.msra.mxu0 0.0
        %3419 = vmatprep.subr.mxu0 0.0
        %3420 = vmatpush1.xpose.msra.mxu0 0.0
        %3421 = vmatprep.subr.mxu0 0.0
        %3422 = vmatpush1.xpose.msra.mxu0 0.0
        %3423 = vmatprep.subr.mxu0 0.0
        %3424 = vmatpush1.xpose.msra.mxu0 0.0
        %3425 = vmatprep.subr.mxu0 0.0
        %3426 = vmatpush1.xpose.msra.mxu0 0.0
        %3427 = vmatprep.subr.mxu0 0.0
        %3428 = vmatpush1.xpose.msra.mxu0 0.0
        %3429 = vmatprep.subr.mxu0 0.0
        %3430 = vmatpush1.xpose.msra.mxu0 0.0
        %3431 = vmatprep.subr.mxu0 0.0
        %3432 = vmatpush1.xpose.msra.mxu0 0.0
        %3433 = vmatprep.subr.mxu0 0.0
        %3434 = vmatpush1.xpose.msra.mxu0 0.0
        %3435 = vmatprep.subr.mxu0 0.0
        %3436 = vmatpush1.xpose.msra.mxu0 0.0
        %3437 = vmatprep.subr.mxu0 0.0
        %3438 = vmatpush1.xpose.msra.mxu0 0.0
        %3439 = vmatprep.subr.mxu0 0.0
        %3440 = vmatpush1.xpose.msra.mxu0 0.0
        %3441 = vmatprep.subr.mxu0 0.0
        %3442 = vmatpush1.xpose.msra.mxu0 0.0
        %3443 = vmatprep.subr.mxu0 0.0
        %3444 = vmatpush1.xpose.msra.mxu0 0.0
        %3445 = vmatprep.subr.mxu0 0.0
        %3446 = vmatpush1.xpose.msra.mxu0 0.0
        %3447 = vmatprep.subr.mxu0 0.0
        %3448 = vmatpush1.xpose.msra.mxu0 0.0
        %3449 = vmatprep.subr.mxu0 0.0
        %3450 = vmatpush1.xpose.msra.mxu0 0.0
        %3451 = vmatprep.subr.mxu0 0.0
        %3452 = vmatpush1.xpose.msra.mxu0 0.0
        %3453 = vmatprep.subr.mxu0 0.0
        %3454 = vmatpush1.xpose.msra.mxu0 0.0
        %3455 = vmatprep.subr.mxu0 0.0
        %3456 = vmatpush1.xpose.msra.mxu0 0.0
        %3457 = vmatprep.subr.mxu0 0.0
        %3458 = vmatpush1.xpose.msra.mxu0 0.0
        %3459 = vmatprep.subr.mxu0 0.0
        %3460 = vmatpush1.xpose.msra.mxu0 0.0
        %3461 = vmatprep.subr.mxu0 0.0
        %3462 = vmatpush1.xpose.msra.mxu0 0.0
        %3463 = vmatprep.subr.mxu0 0.0
        %3464 = vmatpush1.xpose.msra.mxu0 0.0
        %3465 = vmatprep.subr.mxu0 0.0
        %3466 = vmatpush1.xpose.msra.mxu0 0.0
        %3467 = vmatprep.subr.mxu0 0.0
        %3468 = vmatpush1.xpose.msra.mxu0 0.0
        %3469 = vmatprep.subr.mxu0 0.0
        %3470 = vmatpush1.xpose.msra.mxu0 0.0
        %3471 = vmatprep.subr.mxu0 0.0
        %3472 = vmatpush1.xpose.msra.mxu0 0.0
        %3473 = vmatprep.subr.mxu0 0.0
        %3474 = vmatpush1.xpose.msra.mxu0 0.0
        %3475 = vmatprep.mubr.f32.mxu0 0.0
        %3476 = vmatmul.mubr.f32.gmra.mrb[0].mxu0 %v3409
        %v3477 = vpop.f32.mrb[0].mxu0
        %v3478 = vadd.f32 0.0, %v3477
        %v3479 = vpop.f32.mrb[0].mxu0
        %3480 = vdwg.mxu0
        %v3481 = vmul.f32 %v3478, 0.25
        %v3482 = vadd.f32 %v3481, %v1745
        %v3483 = vsel %vm2109, %v3482, -inf
        %3484 = vmax.xlane.f32.xlu0 %v3483
        %v3485 = vpop.xlane.xlu0 %3484
        %v3486 = vsub.f32 %v3482, %v3485
        %v3487 = vmul.f32 %v3486, 1.442695
        %v3488 = vpow.pop %v3487
        %v3489 = vsel %vm2109, %v3488, 0.0
        %3490 = vadd.xlane.f32.xlu0 %v3489
        %v3491 = vpop.xlane.xlu0 %3490
        %v3492 = vrcp.pop %v3491
        %v3493 = vmul.f32 %v3488, %v3492
        %v3494 = vmul.f32 %v3073, %v1762
        %v3496 = vsel %vm2209, %v3493, 0
        %v3499 = vsel %vm2213, %v3494, 0
        %3501 = vmatprep.subr.mxu0 0.0
        %3502 = vmatpush1.msra.mxu0 %v3499
        %3503 = vmatprep.subr.mxu0 0.0
        %3504 = vmatpush1.msra.mxu0 0.0
        %3505 = vmatprep.subr.mxu0 0.0
        %3506 = vmatpush1.msra.mxu0 0.0
        %3507 = vmatprep.subr.mxu0 0.0
        %3508 = vmatpush1.msra.mxu0 0.0
        %3509 = vmatprep.subr.mxu0 0.0
        %3510 = vmatpush1.msra.mxu0 0.0
        %3511 = vmatprep.subr.mxu0 0.0
        %3512 = vmatpush1.msra.mxu0 0.0
        %3513 = vmatprep.subr.mxu0 0.0
        %3514 = vmatpush1.msra.mxu0 0.0
        %3515 = vmatprep.subr.mxu0 0.0
        %3516 = vmatpush1.msra.mxu0 0.0
        %3517 = vmatprep.subr.mxu0 0.0
        %3518 = vmatpush1.msra.mxu0 0.0
        %3519 = vmatprep.subr.mxu0 0.0
        %3520 = vmatpush1.msra.mxu0 0.0
        %3521 = vmatprep.subr.mxu0 0.0
        %3522 = vmatpush1.msra.mxu0 0.0
        %3523 = vmatprep.subr.mxu0 0.0
        %3524 = vmatpush1.msra.mxu0 0.0
        %3525 = vmatprep.subr.mxu0 0.0
        %3526 = vmatpush1.msra.mxu0 0.0
        %3527 = vmatprep.subr.mxu0 0.0
        %3528 = vmatpush1.msra.mxu0 0.0
        %3529 = vmatprep.subr.mxu0 0.0
        %3530 = vmatpush1.msra.mxu0 0.0
        %3531 = vmatprep.subr.mxu0 0.0
        %3532 = vmatpush1.msra.mxu0 0.0
        %3533 = vmatprep.subr.mxu0 0.0
        %3534 = vmatpush1.msra.mxu0 0.0
        %3535 = vmatprep.subr.mxu0 0.0
        %3536 = vmatpush1.msra.mxu0 0.0
        %3537 = vmatprep.subr.mxu0 0.0
        %3538 = vmatpush1.msra.mxu0 0.0
        %3539 = vmatprep.subr.mxu0 0.0
        %3540 = vmatpush1.msra.mxu0 0.0
        %3541 = vmatprep.subr.mxu0 0.0
        %3542 = vmatpush1.msra.mxu0 0.0
        %3543 = vmatprep.subr.mxu0 0.0
        %3544 = vmatpush1.msra.mxu0 0.0
        %3545 = vmatprep.subr.mxu0 0.0
        %3546 = vmatpush1.msra.mxu0 0.0
        %3547 = vmatprep.subr.mxu0 0.0
        %3548 = vmatpush1.msra.mxu0 0.0
        %3549 = vmatprep.subr.mxu0 0.0
        %3550 = vmatpush1.msra.mxu0 0.0
        %3551 = vmatprep.subr.mxu0 0.0
        %3552 = vmatpush1.msra.mxu0 0.0
        %3553 = vmatprep.subr.mxu0 0.0
        %3554 = vmatpush1.msra.mxu0 0.0
        %3555 = vmatprep.subr.mxu0 0.0
        %3556 = vmatpush1.msra.mxu0 0.0
        %3557 = vmatprep.subr.mxu0 0.0
        %3558 = vmatpush1.msra.mxu0 0.0
        %3559 = vmatprep.subr.mxu0 0.0
        %3560 = vmatpush1.msra.mxu0 0.0
        %3561 = vmatprep.subr.mxu0 0.0
        %3562 = vmatpush1.msra.mxu0 0.0
        %3563 = vmatprep.subr.mxu0 0.0
        %3564 = vmatpush1.msra.mxu0 0.0
        %3565 = vmatprep.mubr.f32.mxu0 0.0
        %3566 = vmatmul.mubr.f32.gmra.mrb[0].mxu0 %v3496
        %v3567 = vpop.f32.mrb[0].mxu0
        %v3568 = vadd.f32 0.0, %v3567
        %v3569 = vpop.f32.mrb[0].mxu0
        %3570 = vdwg.mxu0
        %v3571 = vadd.f32 %v3404, %v3568
        %v3572 = vmul.f32 %v2896, %v1767
        %v3574 = vsel %vm1783, %v3572, 0
        %3576 = vmatprep.subr.mxu0 0.0
        %3577 = vmatpush1.xpose.msra.mxu0 %v3081
        %3578 = vmatprep.subr.mxu0 0.0
        %3579 = vmatpush1.xpose.msra.mxu0 0.0
        %3580 = vmatprep.subr.mxu0 0.0
        %3581 = vmatpush1.xpose.msra.mxu0 0.0
        %3582 = vmatprep.subr.mxu0 0.0
        %3583 = vmatpush1.xpose.msra.mxu0 0.0
        %3584 = vmatprep.subr.mxu0 0.0
        %3585 = vmatpush1.xpose.msra.mxu0 0.0
        %3586 = vmatprep.subr.mxu0 0.0
        %3587 = vmatpush1.xpose.msra.mxu0 0.0
        %3588 = vmatprep.subr.mxu0 0.0
        %3589 = vmatpush1.xpose.msra.mxu0 0.0
        %3590 = vmatprep.subr.mxu0 0.0
        %3591 = vmatpush1.xpose.msra.mxu0 0.0
        %3592 = vmatprep.subr.mxu0 0.0
        %3593 = vmatpush1.xpose.msra.mxu0 0.0
        %3594 = vmatprep.subr.mxu0 0.0
        %3595 = vmatpush1.xpose.msra.mxu0 0.0
        %3596 = vmatprep.subr.mxu0 0.0
        %3597 = vmatpush1.xpose.msra.mxu0 0.0
        %3598 = vmatprep.subr.mxu0 0.0
        %3599 = vmatpush1.xpose.msra.mxu0 0.0
        %3600 = vmatprep.subr.mxu0 0.0
        %3601 = vmatpush1.xpose.msra.mxu0 0.0
        %3602 = vmatprep.subr.mxu0 0.0
        %3603 = vmatpush1.xpose.msra.mxu0 0.0
        %3604 = vmatprep.subr.mxu0 0.0
        %3605 = vmatpush1.xpose.msra.mxu0 0.0
        %3606 = vmatprep.subr.mxu0 0.0
        %3607 = vmatpush1.xpose.msra.mxu0 0.0
        %3608 = vmatprep.subr.mxu0 0.0
        %3609 = vmatpush1.xpose.msra.mxu0 0.0
        %3610 = vmatprep.subr.mxu0 0.0
        %3611 = vmatpush1.xpose.msra.mxu0 0.0
        %3612 = vmatprep.subr.mxu0 0.0
        %3613 = vmatpush1.xpose.msra.mxu0 0.0
        %3614 = vmatprep.subr.mxu0 0.0
        %3615 = vmatpush1.xpose.msra.mxu0 0.0
        %3616 = vmatprep.subr.mxu0 0.0
        %3617 = vmatpush1.xpose.msra.mxu0 0.0
        %3618 = vmatprep.subr.mxu0 0.0
        %3619 = vmatpush1.xpose.msra.mxu0 0.0
        %3620 = vmatprep.subr.mxu0 0.0
        %3621 = vmatpush1.xpose.msra.mxu0 0.0
        %3622 = vmatprep.subr.mxu0 0.0
        %3623 = vmatpush1.xpose.msra.mxu0 0.0
        %3624 = vmatprep.subr.mxu0 0.0
        %3625 = vmatpush1.xpose.msra.mxu0 0.0
        %3626 = vmatprep.subr.mxu0 0.0
        %3627 = vmatpush1.xpose.msra.mxu0 0.0
        %3628 = vmatprep.subr.mxu0 0.0
        %3629 = vmatpush1.xpose.msra.mxu0 0.0
        %3630 = vmatprep.subr.mxu0 0.0
        %3631 = vmatpush1.xpose.msra.mxu0 0.0
        %3632 = vmatprep.subr.mxu0 0.0
        %3633 = vmatpush1.xpose.msra.mxu0 0.0
        %3634 = vmatprep.subr.mxu0 0.0
        %3635 = vmatpush1.xpose.msra.mxu0 0.0
        %3636 = vmatprep.subr.mxu0 0.0
        %3637 = vmatpush1.xpose.msra.mxu0 0.0
        %3638 = vmatprep.subr.mxu0 0.0
        %3639 = vmatpush1.xpose.msra.mxu0 0.0
        %3640 = vmatprep.mubr.f32.mxu0 0.0
        %3641 = vmatmul.mubr.f32.gmra.mrb[0].mxu0 %v3574
        %v3642 = vpop.f32.mrb[0].mxu0
        %v3643 = vadd.f32 0.0, %v3642
        %v3644 = vpop.f32.mrb[0].mxu0
        %3645 = vdwg.mxu0
        %v3646 = vmul.f32 %v3643, 0.25
        %v3647 = vadd.f32 %v3646, %v1745
        %v3648 = vsel %vm2109, %v3647, -inf
        %3649 = vmax.xlane.f32.xlu0 %v3648
        %v3650 = vpop.xlane.xlu0 %3649
        %v3651 = vsub.f32 %v3647, %v3650
        %v3652 = vmul.f32 %v3651, 1.442695
        %v3653 = vpow.pop %v3652
        %v3654 = vsel %vm2109, %v3653, 0.0
        %3655 = vadd.xlane.f32.xlu0 %v3654
        %v3656 = vpop.xlane.xlu0 %3655
        %v3657 = vrcp.pop %v3656
        %v3658 = vmul.f32 %v3653, %v3657
        %v3659 = vmul.f32 %v3073, %v1767
        %v3661 = vsel %vm2209, %v3658, 0
        %v3664 = vsel %vm2213, %v3659, 0
        %3666 = vmatprep.subr.mxu0 0.0
        %3667 = vmatpush1.msra.mxu0 %v3664
        %3668 = vmatprep.subr.mxu0 0.0
        %3669 = vmatpush1.msra.mxu0 0.0
        %3670 = vmatprep.subr.mxu0 0.0
        %3671 = vmatpush1.msra.mxu0 0.0
        %3672 = vmatprep.subr.mxu0 0.0
        %3673 = vmatpush1.msra.mxu0 0.0
        %3674 = vmatprep.subr.mxu0 0.0
        %3675 = vmatpush1.msra.mxu0 0.0
        %3676 = vmatprep.subr.mxu0 0.0
        %3677 = vmatpush1.msra.mxu0 0.0
        %3678 = vmatprep.subr.mxu0 0.0
        %3679 = vmatpush1.msra.mxu0 0.0
        %3680 = vmatprep.subr.mxu0 0.0
        %3681 = vmatpush1.msra.mxu0 0.0
        %3682 = vmatprep.subr.mxu0 0.0
        %3683 = vmatpush1.msra.mxu0 0.0
        %3684 = vmatprep.subr.mxu0 0.0
        %3685 = vmatpush1.msra.mxu0 0.0
        %3686 = vmatprep.subr.mxu0 0.0
        %3687 = vmatpush1.msra.mxu0 0.0
        %3688 = vmatprep.subr.mxu0 0.0
        %3689 = vmatpush1.msra.mxu0 0.0
        %3690 = vmatprep.subr.mxu0 0.0
        %3691 = vmatpush1.msra.mxu0 0.0
        %3692 = vmatprep.subr.mxu0 0.0
        %3693 = vmatpush1.msra.mxu0 0.0
        %3694 = vmatprep.subr.mxu0 0.0
        %3695 = vmatpush1.msra.mxu0 0.0
        %3696 = vmatprep.subr.mxu0 0.0
        %3697 = vmatpush1.msra.mxu0 0.0
        %3698 = vmatprep.subr.mxu0 0.0
        %3699 = vmatpush1.msra.mxu0 0.0
        %3700 = vmatprep.subr.mxu0 0.0
        %3701 = vmatpush1.msra.mxu0 0.0
        %3702 = vmatprep.subr.mxu0 0.0
        %3703 = vmatpush1.msra.mxu0 0.0
        %3704 = vmatprep.subr.mxu0 0.0
        %3705 = vmatpush1.msra.mxu0 0.0
        %3706 = vmatprep.subr.mxu0 0.0
        %3707 = vmatpush1.msra.mxu0 0.0
        %3708 = vmatprep.subr.mxu0 0.0
        %3709 = vmatpush1.msra.mxu0 0.0
        %3710 = vmatprep.subr.mxu0 0.0
        %3711 = vmatpush1.msra.mxu0 0.0
        %3712 = vmatprep.subr.mxu0 0.0
        %3713 = vmatpush1.msra.mxu0 0.0
        %3714 = vmatprep.subr.mxu0 0.0
        %3715 = vmatpush1.msra.mxu0 0.0
        %3716 = vmatprep.subr.mxu0 0.0
        %3717 = vmatpush1.msra.mxu0 0.0
        %3718 = vmatprep.subr.mxu0 0.0
        %3719 = vmatpush1.msra.mxu0 0.0
        %3720 = vmatprep.subr.mxu0 0.0
        %3721 = vmatpush1.msra.mxu0 0.0
        %3722 = vmatprep.subr.mxu0 0.0
        %3723 = vmatpush1.msra.mxu0 0.0
        %3724 = vmatprep.subr.mxu0 0.0
        %3725 = vmatpush1.msra.mxu0 0.0
        %3726 = vmatprep.subr.mxu0 0.0
        %3727 = vmatpush1.msra.mxu0 0.0
        %3728 = vmatprep.subr.mxu0 0.0
        %3729 = vmatpush1.msra.mxu0 0.0
        %3730 = vmatprep.mubr.f32.mxu0 0.0
        %3731 = vmatmul.mubr.f32.gmra.mrb[0].mxu0 %v3661
        %v3732 = vpop.f32.mrb[0].mxu0
        %v3733 = vadd.f32 0.0, %v3732
        %v3734 = vpop.f32.mrb[0].mxu0
        %3735 = vdwg.mxu0
        %v3736 = vadd.f32 %v3571, %v3733
        %v3737 = vld [vmem:[%s1209] sm:$0xff]
        %v3738 = vld [vmem:[%s1209 + $0x8] sm:$0xff]
        %v3739 = vld [vmem:[%s1209 + $0x10] sm:$0xff]
        %v3740 = vld [vmem:[%s1209 + $0x18] sm:$0xff]
        %v3741 = vld [vmem:[%s1209 + $0x20] sm:$0xff]
        %v3742 = vld [vmem:[%s1209 + $0x28] sm:$0xff]
        %v3743 = vld [vmem:[%s1209 + $0x30] sm:$0xff]
        %v3744 = vld [vmem:[%s1209 + $0x38] sm:$0xff]
        %v3745 = vld [vmem:[%s1217] sm:$0x1]
        %v3747 = vlaneseq
        %v3748 = vshrl.u32 %v3747, 7
        %v3749 = vsub.s32 0, %v3748
        %v3750 = vrot.slane %v3745, %v3749
        %v3753 = vsel %vm1783, %v3736, 0
        %3755 = vmatprep.subr.mxu0 0.0
        %3756 = vmatpush1.msra.mxu0 %v3737
        %3757 = vmatprep.subr.mxu0 0.0
        %3758 = vmatpush1.msra.mxu0 %v3738
        %3759 = vmatprep.subr.mxu0 0.0
        %3760 = vmatpush1.msra.mxu0 %v3739
        %3761 = vmatprep.subr.mxu0 0.0
        %3762 = vmatpush1.msra.mxu0 %v3740
        %3763 = vmatprep.subr.mxu0 0.0
        %3764 = vmatpush1.msra.mxu0 %v3741
        %3765 = vmatprep.subr.mxu0 0.0
        %3766 = vmatpush1.msra.mxu0 %v3742
        %3767 = vmatprep.subr.mxu0 0.0
        %3768 = vmatpush1.msra.mxu0 %v3743
        %3769 = vmatprep.subr.mxu0 0.0
        %3770 = vmatpush1.msra.mxu0 %v3744
        %3771 = vmatprep.subr.mxu0 0.0
        %3772 = vmatpush1.msra.mxu0 0.0
        %3773 = vmatprep.subr.mxu0 0.0
        %3774 = vmatpush1.msra.mxu0 0.0
        %3775 = vmatprep.subr.mxu0 0.0
        %3776 = vmatpush1.msra.mxu0 0.0
        %3777 = vmatprep.subr.mxu0 0.0
        %3778 = vmatpush1.msra.mxu0 0.0
        %3779 = vmatprep.subr.mxu0 0.0
        %3780 = vmatpush1.msra.mxu0 0.0
        %3781 = vmatprep.subr.mxu0 0.0
        %3782 = vmatpush1.msra.mxu0 0.0
        %3783 = vmatprep.subr.mxu0 0.0
        %3784 = vmatpush1.msra.mxu0 0.0
        %3785 = vmatprep.subr.mxu0 0.0
        %3786 = vmatpush1.msra.mxu0 0.0
        %3787 = vmatprep.subr.mxu0 0.0
        %3788 = vmatpush1.msra.mxu0 0.0
        %3789 = vmatprep.subr.mxu0 0.0
        %3790 = vmatpush1.msra.mxu0 0.0
        %3791 = vmatprep.subr.mxu0 0.0
        %3792 = vmatpush1.msra.mxu0 0.0
        %3793 = vmatprep.subr.mxu0 0.0
        %3794 = vmatpush1.msra.mxu0 0.0
        %3795 = vmatprep.subr.mxu0 0.0
        %3796 = vmatpush1.msra.mxu0 0.0
        %3797 = vmatprep.subr.mxu0 0.0
        %3798 = vmatpush1.msra.mxu0 0.0
        %3799 = vmatprep.subr.mxu0 0.0
        %3800 = vmatpush1.msra.mxu0 0.0
        %3801 = vmatprep.subr.mxu0 0.0
        %3802 = vmatpush1.msra.mxu0 0.0
        %3803 = vmatprep.subr.mxu0 0.0
        %3804 = vmatpush1.msra.mxu0 0.0
        %3805 = vmatprep.subr.mxu0 0.0
        %3806 = vmatpush1.msra.mxu0 0.0
        %3807 = vmatprep.subr.mxu0 0.0
        %3808 = vmatpush1.msra.mxu0 0.0
        %3809 = vmatprep.subr.mxu0 0.0
        %3810 = vmatpush1.msra.mxu0 0.0
        %3811 = vmatprep.subr.mxu0 0.0
        %3812 = vmatpush1.msra.mxu0 0.0
        %3813 = vmatprep.subr.mxu0 0.0
        %3814 = vmatpush1.msra.mxu0 0.0
        %3815 = vmatprep.subr.mxu0 0.0
        %3816 = vmatpush1.msra.mxu0 0.0
        %3817 = vmatprep.subr.mxu0 0.0
        %3818 = vmatpush1.msra.mxu0 0.0
        %3819 = vmatprep.mubr.f32.mxu0 0.0
        %3820 = vmatmul.mubr.f32.gmra.mrb[0].mxu0 %v3753
        %v3821 = vpop.f32.mrb[0].mxu0
        %v3822 = vadd.f32 %v3750, %v3821
        %v3823 = vpop.f32.mrb[0].mxu0
        %3824 = vdwg.mxu0
        %v3825 = vadd.f32 %v2810, %v3822
        %v3826 = vsel %vm2780, %v3825, 0.0
        %3827 = vadd.xlane.f32.xlu0 %v3826
        %v3828 = vpop.xlane.xlu0 %3827
        %v3829 = vmul.f32 %v3828, %v2784
        %v3830 = vsub.f32 %v3825, %v3829
        %v3831 = vmul.f32 %v3830, %v3830
        %v3832 = vsel %vm2780, %v3831, 0.0
        %3833 = vadd.xlane.f32.xlu0 %v3832
        %v3834 = vpop.xlane.xlu0 %3833
        %v3835 = vmul.f32 %v3834, %v2784
        %v3836 = vadd.f32 %v3835, 1e-05
        %v3837 = vrsqrt.pop %v3836
        %v3838 = vmul.f32 %v3830, %v3837
        %s3839 = scalar_lea.vmem %s1252, 1 [#allocation21]
        %v3840 = vld [vmem:[%s3839] sm:$0x1]
        %v3842 = vlaneseq
        %v3843 = vshrl.u32 %v3842, 7
        %v3844 = vsub.s32 0, %v3843
        %v3845 = vrot.slane %v3840, %v3844
        %v3847 = vmul.f32 %v3838, %v3845
        %s3848 = scalar_lea.vmem %s1261, 1 [#allocation23]
        %v3849 = vld [vmem:[%s3848] sm:$0x1]
        %v3851 = vlaneseq
        %v3852 = vshrl.u32 %v3851, 7
        %v3853 = vsub.s32 0, %v3852
        %v3854 = vrot.slane %v3849, %v3853
        %v3856 = vadd.f32 %v3847, %v3854
        %v3857 = vld [vmem:[%s1226] sm:$0xff]
        %v3858 = vld [vmem:[%s1226 + $0x8] sm:$0xff]
        %v3859 = vld [vmem:[%s1226 + $0x10] sm:$0xff]
        %v3860 = vld [vmem:[%s1226 + $0x18] sm:$0xff]
        %v3861 = vld [vmem:[%s1226 + $0x20] sm:$0xff]
        %v3862 = vld [vmem:[%s1226 + $0x28] sm:$0xff]
        %v3863 = vld [vmem:[%s1226 + $0x30] sm:$0xff]
        %v3864 = vld [vmem:[%s1226 + $0x38] sm:$0xff]
        %v3865 = vld [vmem:[%s1226 + $0x40] sm:$0xff]
        %v3866 = vld [vmem:[%s1226 + $0x48] sm:$0xff]
        %v3867 = vld [vmem:[%s1226 + $0x50] sm:$0xff]
        %v3868 = vld [vmem:[%s1226 + $0x58] sm:$0xff]
        %v3869 = vld [vmem:[%s1226 + $0x60] sm:$0xff]
        %v3870 = vld [vmem:[%s1226 + $0x68] sm:$0xff]
        %v3871 = vld [vmem:[%s1226 + $0x70] sm:$0xff]
        %v3872 = vld [vmem:[%s1226 + $0x78] sm:$0xff]
        %v3873 = vld [vmem:[%s1235] sm:$0x3]
        %v3875 = vlaneseq
        %v3876 = vshrl.u32 %v3875, 7
        %v3877 = vsub.s32 0, %v3876
        %v3878 = vrot.slane %v3873, %v3877
        %v3879 = vlaneseq
        %v3880 = vshrl.u32 %v3879, 7
        %v3881 = vsub.s32 1, %v3880
        %v3882 = vrot.slane %v3873, %v3881
        %v3886 = vsel %vm1783, %v3856, 0
        %3888 = vmatprep.subr.mxu0 %v3858
        %3889 = vmatpush1.msra.mxu0 %v3857
        %3890 = vmatprep.subr.mxu0 %v3860
        %3891 = vmatpush1.msra.mxu0 %v3859
        %3892 = vmatprep.subr.mxu0 %v3862
        %3893 = vmatpush1.msra.mxu0 %v3861
        %3894 = vmatprep.subr.mxu0 %v3864
        %3895 = vmatpush1.msra.mxu0 %v3863
        %3896 = vmatprep.subr.mxu0 %v3866
        %3897 = vmatpush1.msra.mxu0 %v3865
        %3898 = vmatprep.subr.mxu0 %v3868
        %3899 = vmatpush1.msra.mxu0 %v3867
        %3900 = vmatprep.subr.mxu0 %v3870
        %3901 = vmatpush1.msra.mxu0 %v3869
        %3902 = vmatprep.subr.mxu0 %v3872
        %3903 = vmatpush1.msra.mxu0 %v3871
        %3904 = vmatprep.subr.mxu0 0.0
        %3905 = vmatpush1.msra.mxu0 0.0
        %3906 = vmatprep.subr.mxu0 0.0
        %3907 = vmatpush1.msra.mxu0 0.0
        %3908 = vmatprep.subr.mxu0 0.0
        %3909 = vmatpush1.msra.mxu0 0.0
        %3910 = vmatprep.subr.mxu0 0.0
        %3911 = vmatpush1.msra.mxu0 0.0
        %3912 = vmatprep.subr.mxu0 0.0
        %3913 = vmatpush1.msra.mxu0 0.0
        %3914 = vmatprep.subr.mxu0 0.0
        %3915 = vmatpush1.msra.mxu0 0.0
        %3916 = vmatprep.subr.mxu0 0.0
        %3917 = vmatpush1.msra.mxu0 0.0
        %3918 = vmatprep.subr.mxu0 0.0
        %3919 = vmatpush1.msra.mxu0 0.0
        %3920 = vmatprep.subr.mxu0 0.0
        %3921 = vmatpush1.msra.mxu0 0.0
        %3922 = vmatprep.subr.mxu0 0.0
        %3923 = vmatpush1.msra.mxu0 0.0
        %3924 = vmatprep.subr.mxu0 0.0
        %3925 = vmatpush1.msra.mxu0 0.0
        %3926 = vmatprep.subr.mxu0 0.0
        %3927 = vmatpush1.msra.mxu0 0.0
        %3928 = vmatprep.subr.mxu0 0.0
        %3929 = vmatpush1.msra.mxu0 0.0
        %3930 = vmatprep.subr.mxu0 0.0
        %3931 = vmatpush1.msra.mxu0 0.0
        %3932 = vmatprep.subr.mxu0 0.0
        %3933 = vmatpush1.msra.mxu0 0.0
        %3934 = vmatprep.subr.mxu0 0.0
        %3935 = vmatpush1.msra.mxu0 0.0
        %3936 = vmatprep.subr.mxu0 0.0
        %3937 = vmatpush1.msra.mxu0 0.0
        %3938 = vmatprep.subr.mxu0 0.0
        %3939 = vmatpush1.msra.mxu0 0.0
        %3940 = vmatprep.subr.mxu0 0.0
        %3941 = vmatpush1.msra.mxu0 0.0
        %3942 = vmatprep.subr.mxu0 0.0
        %3943 = vmatpush1.msra.mxu0 0.0
        %3944 = vmatprep.subr.mxu0 0.0
        %3945 = vmatpush1.msra.mxu0 0.0
        %3946 = vmatprep.subr.mxu0 0.0
        %3947 = vmatpush1.msra.mxu0 0.0
        %3948 = vmatprep.subr.mxu0 0.0
        %3949 = vmatpush1.msra.mxu0 0.0
        %3950 = vmatprep.subr.mxu0 0.0
        %3951 = vmatpush1.msra.mxu0 0.0
        %3952 = vmatprep.mubr.f32.mxu0 0.0
        %3953 = vmatmul.mubr.f32.gmra.mrb[0].mxu0 %v3886
        %v3954 = vpop.f32.mrb[0].mxu0
        %v3955 = vadd.f32 %v3878, %v3954
        %v3956 = vpop.f32.mrb[0].mxu0
        %v3957 = vadd.f32 %v3882, %v3956
        %3958 = vdwg.mxu0
        %v3959 = vmul.f32 %v3955, 0.5
        %v3960 = vmul.f32 %v3957, 0.5
        %v3961 = vmul.f32 %v3955, 0.70710677
        %v3962 = vmul.f32 %v3957, 0.70710677
        %v3963 = vand.u32 2147483647, %v3961
        %v3964 = vand.u32 2147483647, %v3962
        %v3965 = vmul.f32 %v3963, 0.3275911
        %v3966 = vmul.f32 %v3964, 0.3275911
        %v3967 = vadd.f32 %v3965, 1.0
        %v3968 = vadd.f32 %v3966, 1.0
        %v3969 = vrcp.pop %v3967
        %v3970 = vmul.f32 1.0, %v3969
        %v3971 = vrcp.pop %v3968
        %v3972 = vmul.f32 1.0, %v3971
        %v3973 = vmul.f32 %v3970, 1.0614054
        %v3974 = vmul.f32 %v3972, 1.0614054
        %v3975 = vadd.f32 %v3973, -1.4531521
        %v3976 = vadd.f32 %v3974, -1.4531521
        %v3977 = vmul.f32 %v3970, %v3975
        %v3978 = vmul.f32 %v3972, %v3976
        %v3979 = vadd.f32 %v3977, 1.4214138
        %v3980 = vadd.f32 %v3978, 1.4214138
        %v3981 = vmul.f32 %v3970, %v3979
        %v3982 = vmul.f32 %v3972, %v3980
        %v3983 = vadd.f32 %v3981, -0.28449672
        %v3984 = vadd.f32 %v3982, -0.28449672
        %v3985 = vmul.f32 %v3970, %v3983
        %v3986 = vmul.f32 %v3972, %v3984
        %v3987 = vadd.f32 %v3985, 0.2548296
        %v3988 = vadd.f32 %v3986, 0.2548296
        %v3989 = vmul.f32 %v3970, %v3987
        %v3990 = vmul.f32 %v3972, %v3988
        %v3991 = vmul.f32 %v3963, %v3963
        %v3992 = vmul.f32 %v3964, %v3964
        %v3993 = vsub.f32 0.0, %v3991
        %v3994 = vsub.f32 0.0, %v3992
        %v3995 = vmul.f32 %v3993, 1.442695
        %v3996 = vpow.pop %v3995
        %v3997 = vmul.f32 %v3994, 1.442695
        %v3998 = vpow.pop %v3997
        %v3999 = vmul.f32 %v3989, %v3996
        %v4000 = vmul.f32 %v3990, %v3998
        %v4001 = vsub.f32 1.0, %v3999
        %v4002 = vsub.f32 1.0, %v4000
        %vm4003 = vcmp.lt.f32.partialorder %v3961, 0.0
        %vm4004 = vcmp.lt.f32.partialorder %v3962, 0.0
        %v4005 = vsub.f32 0.0, %v4001
        %v4006 = vsub.f32 0.0, %v4002
        %v4007 = vsel %vm4003, %v4005, %v4001
        %v4008 = vsel %vm4004, %v4006, %v4002
        %v4009 = vadd.f32 %v4007, 1.0
        %v4010 = vadd.f32 %v4008, 1.0
        %v4011 = vmul.f32 %v3959, %v4009
        %v4012 = vmul.f32 %v3960, %v4010
        %v4013 = vld [vmem:[%s1446] sm:$0xff]
        %v4014 = vld [vmem:[%s1446 + $0x8] sm:$0xff]
        %v4015 = vld [vmem:[%s1446 + $0x10] sm:$0xff]
        %v4016 = vld [vmem:[%s1446 + $0x18] sm:$0xff]
        %v4017 = vld [vmem:[%s1446 + $0x20] sm:$0xff]
        %v4018 = vld [vmem:[%s1446 + $0x28] sm:$0xff]
        %v4019 = vld [vmem:[%s1446 + $0x30] sm:$0xff]
        %v4020 = vld [vmem:[%s1446 + $0x38] sm:$0xff]
        %v4021 = vld [vmem:[%s1446 + $0x40] sm:$0xff]
        %v4022 = vld [vmem:[%s1446 + $0x48] sm:$0xff]
        %v4023 = vld [vmem:[%s1446 + $0x50] sm:$0xff]
        %v4024 = vld [vmem:[%s1446 + $0x58] sm:$0xff]
        %v4025 = vld [vmem:[%s1446 + $0x60] sm:$0xff]
        %v4026 = vld [vmem:[%s1446 + $0x68] sm:$0xff]
        %v4027 = vld [vmem:[%s1446 + $0x70] sm:$0xff]
        %v4028 = vld [vmem:[%s1446 + $0x78] sm:$0xff]
        %v4029 = vld [vmem:[%s1446 + $0x80] sm:$0xff]
        %v4030 = vld [vmem:[%s1446 + $0x88] sm:$0xff]
        %v4031 = vld [vmem:[%s1446 + $0x90] sm:$0xff]
        %v4032 = vld [vmem:[%s1446 + $0x98] sm:$0xff]
        %v4033 = vld [vmem:[%s1446 + $0xa0] sm:$0xff]
        %v4034 = vld [vmem:[%s1446 + $0xa8] sm:$0xff]
        %v4035 = vld [vmem:[%s1446 + $0xb0] sm:$0xff]
        %v4036 = vld [vmem:[%s1446 + $0xb8] sm:$0xff]
        %v4037 = vld [vmem:[%s1446 + $0xc0] sm:$0xff]
        %v4038 = vld [vmem:[%s1446 + $0xc8] sm:$0xff]
        %v4039 = vld [vmem:[%s1446 + $0xd0] sm:$0xff]
        %v4040 = vld [vmem:[%s1446 + $0xd8] sm:$0xff]
        %v4041 = vld [vmem:[%s1446 + $0xe0] sm:$0xff]
        %v4042 = vld [vmem:[%s1446 + $0xe8] sm:$0xff]
        %v4043 = vld [vmem:[%s1446 + $0xf0] sm:$0xff]
        %v4044 = vld [vmem:[%s1446 + $0xf8] sm:$0xff]
        %v4045 = vld [vmem:[%s1243] sm:$0x1]
        %v4047 = vlaneseq
        %v4048 = vshrl.u32 %v4047, 7
        %v4049 = vsub.s32 0, %v4048
        %v4050 = vrot.slane %v4045, %v4049
        %4052 = vmatprep.subr.mxu0 0.0
        %4053 = vmatpush1.msra.mxu0 %v4013
        %4054 = vmatprep.subr.mxu0 0.0
        %4055 = vmatpush1.msra.mxu0 %v4014
        %4056 = vmatprep.subr.mxu0 0.0
        %4057 = vmatpush1.msra.mxu0 %v4015
        %4058 = vmatprep.subr.mxu0 0.0
        %4059 = vmatpush1.msra.mxu0 %v4016
        %4060 = vmatprep.subr.mxu0 0.0
        %4061 = vmatpush1.msra.mxu0 %v4017
        %4062 = vmatprep.subr.mxu0 0.0
        %4063 = vmatpush1.msra.mxu0 %v4018
        %4064 = vmatprep.subr.mxu0 0.0
        %4065 = vmatpush1.msra.mxu0 %v4019
        %4066 = vmatprep.subr.mxu0 0.0
        %4067 = vmatpush1.msra.mxu0 %v4020
        %4068 = vmatprep.subr.mxu0 0.0
        %4069 = vmatpush1.msra.mxu0 %v4021
        %4070 = vmatprep.subr.mxu0 0.0
        %4071 = vmatpush1.msra.mxu0 %v4022
        %4072 = vmatprep.subr.mxu0 0.0
        %4073 = vmatpush1.msra.mxu0 %v4023
        %4074 = vmatprep.subr.mxu0 0.0
        %4075 = vmatpush1.msra.mxu0 %v4024
        %4076 = vmatprep.subr.mxu0 0.0
        %4077 = vmatpush1.msra.mxu0 %v4025
        %4078 = vmatprep.subr.mxu0 0.0
        %4079 = vmatpush1.msra.mxu0 %v4026
        %4080 = vmatprep.subr.mxu0 0.0
        %4081 = vmatpush1.msra.mxu0 %v4027
        %4082 = vmatprep.subr.mxu0 0.0
        %4083 = vmatpush1.msra.mxu0 %v4028
        %4084 = vmatprep.subr.mxu0 0.0
        %4085 = vmatpush1.msra.mxu0 %v4029
        %4086 = vmatprep.subr.mxu0 0.0
        %4087 = vmatpush1.msra.mxu0 %v4030
        %4088 = vmatprep.subr.mxu0 0.0
        %4089 = vmatpush1.msra.mxu0 %v4031
        %4090 = vmatprep.subr.mxu0 0.0
        %4091 = vmatpush1.msra.mxu0 %v4032
        %4092 = vmatprep.subr.mxu0 0.0
        %4093 = vmatpush1.msra.mxu0 %v4033
        %4094 = vmatprep.subr.mxu0 0.0
        %4095 = vmatpush1.msra.mxu0 %v4034
        %4096 = vmatprep.subr.mxu0 0.0
        %4097 = vmatpush1.msra.mxu0 %v4035
        %4098 = vmatprep.subr.mxu0 0.0
        %4099 = vmatpush1.msra.mxu0 %v4036
        %4100 = vmatprep.subr.mxu0 0.0
        %4101 = vmatpush1.msra.mxu0 %v4037
        %4102 = vmatprep.subr.mxu0 0.0
        %4103 = vmatpush1.msra.mxu0 %v4038
        %4104 = vmatprep.subr.mxu0 0.0
        %4105 = vmatpush1.msra.mxu0 %v4039
        %4106 = vmatprep.subr.mxu0 0.0
        %4107 = vmatpush1.msra.mxu0 %v4040
        %4108 = vmatprep.subr.mxu0 0.0
        %4109 = vmatpush1.msra.mxu0 %v4041
        %4110 = vmatprep.subr.mxu0 0.0
        %4111 = vmatpush1.msra.mxu0 %v4042
        %4112 = vmatprep.subr.mxu0 0.0
        %4113 = vmatpush1.msra.mxu0 %v4043
        %4114 = vmatprep.subr.mxu0 0.0
        %4115 = vmatpush1.msra.mxu0 %v4044
        %4116 = vmatprep.mubr.f32.mxu0 %v4012
        %4117 = vmatmul.mubr.f32.gmra.mrb[0].mxu0 %v4011
        %v4118 = vpop.f32.mrb[0].mxu0
        %v4119 = vadd.f32 %v4050, %v4118
        %v4120 = vpop.f32.mrb[0].mxu0
        %4121 = vdwg.mxu0
        %v4122 = vadd.f32 %v3856, %v4119
        %v4123 = vsel %vm2780, %v4122, 0.0
        %4124 = vadd.xlane.f32.xlu0 %v4123
        %v4125 = vpop.xlane.xlu0 %4124
        %v4126 = vmul.f32 %v4125, %v2784
        %v4127 = vsub.f32 %v4122, %v4126
        %v4128 = vmul.f32 %v4127, %v4127
        %v4129 = vsel %vm2780, %v4128, 0.0
        %4130 = vadd.xlane.f32.xlu0 %v4129
        %v4131 = vpop.xlane.xlu0 %4130
        %v4132 = vmul.f32 %v4131, %v2784
        %v4133 = vadd.f32 %v4132, 1e-05
        %v4134 = vrsqrt.pop %v4133
        %v4135 = vmul.f32 %v4127, %v4134
        %s4136 = scalar_lea.vmem %s1252, 2 [#allocation21]
        %v4137 = vld [vmem:[%s4136] sm:$0x1]
        %v4139 = vlaneseq
        %v4140 = vshrl.u32 %v4139, 7
        %v4141 = vsub.s32 0, %v4140
        %v4142 = vrot.slane %v4137, %v4141
        %v4144 = vmul.f32 %v4135, %v4142
        %s4145 = scalar_lea.vmem %s1261, 2 [#allocation23]
        %v4146 = vld [vmem:[%s4145] sm:$0x1]
        %v4148 = vlaneseq
        %v4149 = vshrl.u32 %v4148, 7
        %v4150 = vsub.s32 0, %v4149
        %v4151 = vrot.slane %v4146, %v4150
        %v4153 = vadd.f32 %v4144, %v4151
        %4154 = vst.msk [vmem:[#allocation2] sm:$0x3f] %vm2780, %v4153
        %p4155 = scmp.eq.s32.totalorder %s93, 1
        // Predicated region
        $region201: #{faceformer_forward.1} parent=135 // pred_check
          %p4156 = pneg %p4155
        $region202: #{faceformer_forward.1} parent=135 // pred_check_branch
          %4158 = sbr.rel (%p4156) target = $region204
        $region203: #{faceformer_forward.1} parent=135 // pred_region
          %v4159 = vld [vmem:[%s51] sm:$0xff]
          %v4160 = vld [vmem:[%s51 + $0x8] sm:$0xff]
          %v4161 = vld [vmem:[%s51 + $0x10] sm:$0xff]
          %v4162 = vld [vmem:[%s51 + $0x18] sm:$0xff]
          %v4163 = vld [vmem:[%s51 + $0x20] sm:$0xff]
          %v4164 = vld [vmem:[%s51 + $0x28] sm:$0xff]
          %v4165 = vld [vmem:[%s51 + $0x30] sm:$0xff]
          %v4166 = vld [vmem:[%s51 + $0x38] sm:$0xff]
          %v4167 = vld [vmem:[#allocation24] sm:$0x1]
          %v4169 = vlaneseq
          %v4170 = vshrl.u32 %v4169, 7
          %v4171 = vsub.s32 0, %v4170
          %v4172 = vrot.slane %v4167, %v4171
          %v4175 = vsel %vm1783, %v4153, 0
          %4177 = vmatprep.subr.mxu0 0.0
          %4178 = vmatpush1.msra.mxu0 %v4159
          %4179 = vmatprep.subr.mxu0 0.0
          %4180 = vmatpush1.msra.mxu0 %v4160
          %4181 = vmatprep.subr.mxu0 0.0
          %4182 = vmatpush1.msra.mxu0 %v4161
          %4183 = vmatprep.subr.mxu0 0.0
          %4184 = vmatpush1.msra.mxu0 %v4162
          %4185 = vmatprep.subr.mxu0 0.0
          %4186 = vmatpush1.msra.mxu0 %v4163
          %4187 = vmatprep.subr.mxu0 0.0
          %4188 = vmatpush1.msra.mxu0 %v4164
          %4189 = vmatprep.subr.mxu0 0.0
          %4190 = vmatpush1.msra.mxu0 %v4165
          %4191 = vmatprep.subr.mxu0 0.0
          %4192 = vmatpush1.msra.mxu0 %v4166
          %4193 = vmatprep.subr.mxu0 0.0
          %4194 = vmatpush1.msra.mxu0 0.0
          %4195 = vmatprep.subr.mxu0 0.0
          %4196 = vmatpush1.msra.mxu0 0.0
          %4197 = vmatprep.subr.mxu0 0.0
          %4198 = vmatpush1.msra.mxu0 0.0
          %4199 = vmatprep.subr.mxu0 0.0
          %4200 = vmatpush1.msra.mxu0 0.0
          %4201 = vmatprep.subr.mxu0 0.0
          %4202 = vmatpush1.msra.mxu0 0.0
          %4203 = vmatprep.subr.mxu0 0.0
          %4204 = vmatpush1.msra.mxu0 0.0
          %4205 = vmatprep.subr.mxu0 0.0
          %4206 = vmatpush1.msra.mxu0 0.0
          %4207 = vmatprep.subr.mxu0 0.0
          %4208 = vmatpush1.msra.mxu0 0.0
          %4209 = vmatprep.subr.mxu0 0.0
          %4210 = vmatpush1.msra.mxu0 0.0
          %4211 = vmatprep.subr.mxu0 0.0
          %4212 = vmatpush1.msra.mxu0 0.0
          %4213 = vmatprep.subr.mxu0 0.0
          %4214 = vmatpush1.msra.mxu0 0.0
          %4215 = vmatprep.subr.mxu0 0.0
          %4216 = vmatpush1.msra.mxu0 0.0
          %4217 = vmatprep.subr.mxu0 0.0
          %4218 = vmatpush1.msra.mxu0 0.0
          %4219 = vmatprep.subr.mxu0 0.0
          %4220 = vmatpush1.msra.mxu0 0.0
          %4221 = vmatprep.subr.mxu0 0.0
          %4222 = vmatpush1.msra.mxu0 0.0
          %4223 = vmatprep.subr.mxu0 0.0
          %4224 = vmatpush1.msra.mxu0 0.0
          %4225 = vmatprep.subr.mxu0 0.0
          %4226 = vmatpush1.msra.mxu0 0.0
          %4227 = vmatprep.subr.mxu0 0.0
          %4228 = vmatpush1.msra.mxu0 0.0
          %4229 = vmatprep.subr.mxu0 0.0
          %4230 = vmatpush1.msra.mxu0 0.0
          %4231 = vmatprep.subr.mxu0 0.0
          %4232 = vmatpush1.msra.mxu0 0.0
          %4233 = vmatprep.subr.mxu0 0.0
          %4234 = vmatpush1.msra.mxu0 0.0
          %4235 = vmatprep.subr.mxu0 0.0
          %4236 = vmatpush1.msra.mxu0 0.0
          %4237 = vmatprep.subr.mxu0 0.0
          %4238 = vmatpush1.msra.mxu0 0.0
          %4239 = vmatprep.subr.mxu0 0.0
          %4240 = vmatpush1.msra.mxu0 0.0
          %4241 = vmatprep.mubr.f32.mxu0 0.0
          %4242 = vmatmul.mubr.f32.gmra.mrb[0].mxu0 %v4175
          %v4243 = vpop.f32.mrb[0].mxu0
          %v4244 = vadd.f32 %v4172, %v4243
          %v4245 = vpop.f32.mrb[0].mxu0
          %4246 = vdwg.mxu0
          %v4247 = vmul.f32 %v4244, 0.5
          %v4248 = vmul.f32 %v4244, 0.70710677
          %v4249 = vand.u32 2147483647, %v4248
          %v4250 = vmul.f32 %v4249, 0.3275911
          %v4251 = vadd.f32 %v4250, 1.0
          %v4252 = vrcp.pop %v4251
          %v4253 = vmul.f32 1.0, %v4252
          %v4254 = vmul.f32 %v4253, 1.0614054
          %v4255 = vadd.f32 %v4254, -1.4531521
          %v4256 = vmul.f32 %v4253, %v4255
          %v4257 = vadd.f32 %v4256, 1.4214138
          %v4258 = vmul.f32 %v4253, %v4257
          %v4259 = vadd.f32 %v4258, -0.28449672
          %v4260 = vmul.f32 %v4253, %v4259
          %v4261 = vadd.f32 %v4260, 0.2548296
          %v4262 = vmul.f32 %v4253, %v4261
          %v4263 = vmul.f32 %v4249, %v4249
          %v4264 = vsub.f32 0.0, %v4263
          %v4265 = vmul.f32 %v4264, 1.442695
          %v4266 = vpow.pop %v4265
          %v4267 = vmul.f32 %v4262, %v4266
          %v4268 = vsub.f32 1.0, %v4267
          %vm4269 = vcmp.lt.f32.partialorder %v4248, 0.0
          %v4270 = vsub.f32 0.0, %v4268
          %v4271 = vsel %vm4269, %v4270, %v4268
          %v4272 = vadd.f32 %v4271, 1.0
          %v4273 = vmul.f32 %v4247, %v4272
          %v4274 = vld [vmem:[%s55] sm:$0xff]
          %v4275 = vld [vmem:[%s55 + $0x8] sm:$0xff]
          %v4276 = vld [vmem:[%s55 + $0x10] sm:$0xff]
          %v4277 = vld [vmem:[%s55 + $0x18] sm:$0xff]
          %v4278 = vld [vmem:[#allocation26] sm:$0x1]
          %v4280 = vlaneseq
          %v4281 = vshrl.u32 %v4280, 7
          %v4282 = vsub.s32 0, %v4281
          %v4283 = vrot.slane %v4278, %v4282
          %vm4285 = vcmask 261120
          %v4287 = vsel %vm4285, %v4273, 0
          %4289 = vmatprep.subr.mxu0 0.0
          %4290 = vmatpush1.msra.mxu0 %v4274
          %4291 = vmatprep.subr.mxu0 0.0
          %4292 = vmatpush1.msra.mxu0 %v4275
          %4293 = vmatprep.subr.mxu0 0.0
          %4294 = vmatpush1.msra.mxu0 %v4276
          %4295 = vmatprep.subr.mxu0 0.0
          %4296 = vmatpush1.msra.mxu0 %v4277
          %4297 = vmatprep.subr.mxu0 0.0
          %4298 = vmatpush1.msra.mxu0 0.0
          %4299 = vmatprep.subr.mxu0 0.0
          %4300 = vmatpush1.msra.mxu0 0.0
          %4301 = vmatprep.subr.mxu0 0.0
          %4302 = vmatpush1.msra.mxu0 0.0
          %4303 = vmatprep.subr.mxu0 0.0
          %4304 = vmatpush1.msra.mxu0 0.0
          %4305 = vmatprep.subr.mxu0 0.0
          %4306 = vmatpush1.msra.mxu0 0.0
          %4307 = vmatprep.subr.mxu0 0.0
          %4308 = vmatpush1.msra.mxu0 0.0
          %4309 = vmatprep.subr.mxu0 0.0
          %4310 = vmatpush1.msra.mxu0 0.0
          %4311 = vmatprep.subr.mxu0 0.0
          %4312 = vmatpush1.msra.mxu0 0.0
          %4313 = vmatprep.subr.mxu0 0.0
          %4314 = vmatpush1.msra.mxu0 0.0
          %4315 = vmatprep.subr.mxu0 0.0
          %4316 = vmatpush1.msra.mxu0 0.0
          %4317 = vmatprep.subr.mxu0 0.0
          %4318 = vmatpush1.msra.mxu0 0.0
          %4319 = vmatprep.subr.mxu0 0.0
          %4320 = vmatpush1.msra.mxu0 0.0
          %4321 = vmatprep.subr.mxu0 0.0
          %4322 = vmatpush1.msra.mxu0 0.0
          %4323 = vmatprep.subr.mxu0 0.0
          %4324 = vmatpush1.msra.mxu0 0.0
          %4325 = vmatprep.subr.mxu0 0.0
          %4326 = vmatpush1.msra.mxu0 0.0
          %4327 = vmatprep.subr.mxu0 0.0
          %4328 = vmatpush1.msra.mxu0 0.0
          %4329 = vmatprep.subr.mxu0 0.0
          %4330 = vmatpush1.msra.mxu0 0.0
          %4331 = vmatprep.subr.mxu0 0.0
          %4332 = vmatpush1.msra.mxu0 0.0
          %4333 = vmatprep.subr.mxu0 0.0
          %4334 = vmatpush1.msra.mxu0 0.0
          %4335 = vmatprep.subr.mxu0 0.0
          %4336 = vmatpush1.msra.mxu0 0.0
          %4337 = vmatprep.subr.mxu0 0.0
          %4338 = vmatpush1.msra.mxu0 0.0
          %4339 = vmatprep.subr.mxu0 0.0
          %4340 = vmatpush1.msra.mxu0 0.0
          %4341 = vmatprep.subr.mxu0 0.0
          %4342 = vmatpush1.msra.mxu0 0.0
          %4343 = vmatprep.subr.mxu0 0.0
          %4344 = vmatpush1.msra.mxu0 0.0
          %4345 = vmatprep.subr.mxu0 0.0
          %4346 = vmatpush1.msra.mxu0 0.0
          %4347 = vmatprep.subr.mxu0 0.0
          %4348 = vmatpush1.msra.mxu0 0.0
          %4349 = vmatprep.subr.mxu0 0.0
          %4350 = vmatpush1.msra.mxu0 0.0
          %4351 = vmatprep.subr.mxu0 0.0
          %4352 = vmatpush1.msra.mxu0 0.0
          %4353 = vmatprep.mubr.f32.mxu0 0.0
          %4354 = vmatmul.mubr.f32.gmra.mrb[0].mxu0 %v4287
          %v4355 = vpop.f32.mrb[0].mxu0
          %v4356 = vadd.f32 %v4283, %v4355
          %v4357 = vpop.f32.mrb[0].mxu0
          %4358 = vdwg.mxu0
          %vm4359 = vcmask 95232
          %4360 = vst.msk [vmem:[%s1450] sm:$0x3f] %vm4359, %v4356
        $region204: #{faceformer_forward.1} parent=135 // pred_fallthru
          _
        %p4361 = scmp.lt.s32.totalorder %s92, 1
        %s4362 = scalar_select %p4361, %s92, 1
        %s4363 = smul.addr %s4362, 8
        %s4364 = scalar_lea.vmem %s59, %s4363
        // Predicated region
        $region205: #{faceformer_forward.1} parent=135 // pred_check
          %p4365 = pneg %p812
        $region206: #{faceformer_forward.1} parent=135 // pred_check_branch
          %4367 = sbr.rel (%p4365) target = $region208
        $region207: #{faceformer_forward.1} parent=135 // pred_region
          _
        $region208: #{faceformer_forward.1} parent=135 // pred_fallthru
          _
      $region136: #{faceformer_forward.1} parent=5 // pred_fallthru
        _
      %p4368 = scmp.le.s32.totalorder 2, %s83
      // Predicated region
      $region209: #{faceformer_forward.1} parent=5 // pred_check
        %p4369 = pneg %p4368
      $region210: #{faceformer_forward.1} parent=5 // pred_check_branch
        %4371 = sbr.rel (%p4369) target = $region212
      $region211: #{faceformer_forward.1} parent=5 // pred_region
        %s4372 = ssub.s32 %s83, 2
        // Predicated region
        $region213: #{faceformer_forward.1} parent=211 // pred_check
          %p4373 = pneg %p818
        $region214: #{faceformer_forward.1} parent=211 // pred_check_branch
          %4375 = sbr.rel (%p4373) target = $region216
        $region215: #{faceformer_forward.1} parent=211 // pred_region
          %p4376 = scmp.lt.s32.totalorder %s94, 1
          %s4377 = scalar_select %p4376, %s94, 1
          %s4378 = smul.addr %s4377, 8
          %s4379 = scalar_lea.vmem %s59, %s4378
        $region216: #{faceformer_forward.1} parent=211 // pred_fallthru
          _
      $region212: #{faceformer_forward.1} parent=5 // pred_fallthru
        _
    $region6: #{faceformer_forward.1} parent=1 // loop_footer
      %s87 = sadd.s32 1, %s83
    $region7: #{faceformer_forward.1} parent=1 // loop_footer_branch
      %82 = sbr.rel target = $region3
    $region8: #{faceformer_forward.1} parent=1 // loop_exit
      _
    %4380 = vsyncpa [#allocation5], 1
    %s4381 = scalar_lea.sflag [#allocation5], 1
    %4382 = vsyncpa %s4381, 1
    %4383 = vsyncpa [#allocation7], 1
    %4384 = vsyncpa [#allocation10], 1
    %s4385 = scalar_lea.sflag [#allocation10], 1
    %4386 = vsyncpa %s4385, 1
    %4387 = vsyncpa [#allocation13], 1
    %s4388 = scalar_lea.sflag [#allocation13], 1
    %4389 = vsyncpa %s4388, 1
    %4390 = vsyncpa [#allocation16], 1
    %s4391 = scalar_lea.sflag [#allocation16], 1
    %4392 = vsyncpa %s4391, 1
    %4393 = vsyncpa [#allocation19], 1
    %s4394 = scalar_lea.sflag [#allocation19], 1
    %4395 = vsyncpa %s4394, 1
    %4396 = vsyncpa [#allocation22], 1
    %s4397 = scalar_lea.sflag [#allocation22], 1
    %4398 = vsyncpa %s4397, 1
    %4399 = vsyncpa [#allocation25], 1

</llo_original>
